<compile_context>
chip_gen: v7x
topology: tpu7x:2x2x1
jax: 0.10.0
libtpu: 0.0.40
codegen_flags: <defaults>
</compile_context>

<pallas_src>
import jax
import jax.numpy as jnp
from jax.experimental import pallas as pl
from jax.experimental.pallas import tpu as pltpu  # noqa: F401  (TPU backend)

IN_FEATURES = 8 * 2048   # 16384
OUT_FEATURES = 9


def _linear_sigmoid_kernel(x_ref, wt_ref, b_ref, o_ref):
    """o = sigmoid(x @ W.T + b), whole problem in one shot.

    x_ref : (B, K)   f32   (cast to bf16 in-kernel)
    wt_ref: (N, K)   bf16  (lane-dense: K is the 128-lane axis)
    b_ref : (1, N)   f32
    o_ref : (B, N)   f32
    """
    x_bf16 = x_ref[...].astype(jnp.bfloat16)

    # (N, B) orientation: W is already in MXU-native LHS layout (K on lanes),
    # so Mosaic only has to transpose the small x operand, not the weight.
    logits_nb = jax.lax.dot_general(
        wt_ref[...], x_bf16,
        dimension_numbers=(((1,), (1,)), ((), ())),   # contract K with K
        preferred_element_type=jnp.float32,
    )                                                  # (N, B) f32

    logits = logits_nb.T + b_ref[...]                  # (B, N); (9,2) transpose is 1 vxpose
    o_ref[...] = jax.nn.sigmoid(logits).astype(o_ref.dtype)


def baseline_forward(x, w_bf16, b):
    """x: (B, 16384) f32, w_bf16: (9, 16384) bf16 (PyTorch layout, stored bf16),
    b: (1, 9) f32 -> (B, 9) f32."""
    B, K = x.shape
    N, Kw = w_bf16.shape
    assert K == Kw == IN_FEATURES and N == OUT_FEATURES
    assert w_bf16.dtype == jnp.bfloat16

    cost = pl.CostEstimate(
        flops=2 * B * K * N,
        transcendentals=B * N,
        bytes_accessed=x.size * 4 + w_bf16.size * 2 + b.size * 4 + B * N * 4,
    )

    return pl.pallas_call(
        _linear_sigmoid_kernel,
        out_shape=jax.ShapeDtypeStruct((B, N), jnp.float32),
        # No grid: each block is the full array, kernel runs exactly once.
        in_specs=[
            pl.BlockSpec((B, K), lambda: (0, 0)),   # x    (128 KB @ B=2)
            pl.BlockSpec((N, K), lambda: (0, 0)),   # W    (~0.5 MiB padded bf16 in VMEM)
            pl.BlockSpec((1, N), lambda: (0, 0)),   # bias
        ],
        out_specs=pl.BlockSpec((B, N), lambda: (0, 0)),
        cost_estimate=cost,
    )(x, w_bf16, b)


def reference_forward(x, w, b):
    return jax.nn.sigmoid(x @ w.T + b)


if __name__ == "__main__":
    key = jax.random.PRNGKey(0)
    kx, kw, kb = jax.random.split(key, 3)

    B = 2
    x = jax.random.normal(kx, (B, IN_FEATURES), dtype=jnp.float32)

    # Deterministic synthetic parameters, nn.Linear(16384, 9) layout:
    # weight (out_features, in_features), bias (out_features,) kept 2D as (1, 9).
    bound = 1.0 / (IN_FEATURES ** 0.5)
    w = jax.random.uniform(
        kw, (OUT_FEATURES, IN_FEATURES), minval=-bound, maxval=bound,
        dtype=jnp.float32)
    b = jax.random.uniform(
        kb, (1, OUT_FEATURES), minval=-bound, maxval=bound, dtype=jnp.float32)

    # Parameter is stored in bf16 (halves the dominant weight DMA per call).
    w_bf16 = w.astype(jnp.bfloat16)

    out = baseline_forward(x, w_bf16, b)
    out = jax.block_until_ready(out)

    ref = reference_forward(x, w, b)
    assert out.shape == (B, OUT_FEATURES)
    # bf16 inputs + f32 accumulate over K=16384: sigmoid output error is O(1e-3);
    # compare against the full-f32 reference with a correspondingly looser tolerance.
    assert jnp.allclose(out, ref, atol=2e-2, rtol=0.0), "mismatch vs reference"

    print("KERNEL_OK")
</pallas_src>

<mosaic_0001>
module attributes {stable_mosaic.version = 11 : i64} {
  func.func @_linear_sigmoid_kernel(%arg0: memref<2x16384xf32, #tpu.memory_space<vmem>>, %arg1: memref<9x16384xbf16, #tpu.memory_space<vmem>>, %arg2: memref<1x9xf32, #tpu.memory_space<vmem>>, %arg3: memref<2x9xf32, #tpu.memory_space<vmem>>) attributes {dimension_semantics = [], scalar_prefetch = 0 : i64, scratch_operands = 0 : i64, tpu.core_type = #tpu.core_type<tc>} {
    %c0 = arith.constant 0 : index
    %c0_0 = arith.constant 0 : index
    %0 = vector.load %arg0[%c0, %c0_0] : memref<2x16384xf32, #tpu.memory_space<vmem>>, vector<2x16384xf32>
    %1 = arith.truncf %0 : vector<2x16384xf32> to vector<2x16384xbf16>
    %c0_1 = arith.constant 0 : index
    %c0_2 = arith.constant 0 : index
    %2 = vector.load %arg1[%c0_1, %c0_2] : memref<9x16384xbf16, #tpu.memory_space<vmem>>, vector<9x16384xbf16>
    %cst = arith.constant dense<0.000000e+00> : vector<9x2xf32>
    %3 = tpu.matmul %2, %1, %cst {dimension_numbers = #tpu.dot_dimension_numbers<[1], [1], [0], [0], [0, 0, 1, 0], [], []>} : vector<9x16384xbf16>, vector<2x16384xbf16>, vector<9x2xf32> -> vector<9x2xf32>
    %4 = tpu.transpose %3, [1, 0] : vector<9x2xf32> -> vector<2x9xf32>
    %c0_3 = arith.constant 0 : index
    %c0_4 = arith.constant 0 : index
    %5 = vector.load %arg2[%c0_3, %c0_4] : memref<1x9xf32, #tpu.memory_space<vmem>>, vector<1x9xf32>
    %6 = vector.broadcast %5 : vector<1x9xf32> to vector<2x9xf32>
    %7 = arith.addf %4, %6 : vector<2x9xf32>
    %8 = arith.negf %7 : vector<2x9xf32>
    %9 = math.exp %8 : vector<2x9xf32>
    %cst_5 = arith.constant 1.000000e+00 : f32
    %10 = vector.broadcast %cst_5 : f32 to vector<2x9xf32>
    %11 = arith.addf %10, %9 : vector<2x9xf32>
    %12 = arith.divf %10, %11 : vector<2x9xf32>
    %c0_6 = arith.constant 0 : index
    %c0_7 = arith.constant 0 : index
    %13 = vector.load %arg3[%c0_6, %c0_7] : memref<2x9xf32, #tpu.memory_space<vmem>>, vector<2x9xf32>
    tpu.vector_store %arg3[%c0_6, %c0_7], %12 {strides = array<i32>} : memref<2x9xf32, #tpu.memory_space<vmem>>, vector<2x9xf32>,
    return
  }
}

</mosaic_0001>

<llo_original>
// kernel: tpu_custom_call.1
$region0: #{tpu_custom_call.1}
  #allocation0 [shape = 'u32[]', space=smem, size = 0x4, offset = 0x4, fixed_abs, tag = 'smem constant byte address 0x4 - core index']
  #allocation1 [shape = 'u32[144,128]{1,0:T(1,128)}', space=vmem, size = 0x12000, scoped, tag = 'internal scratch']
  %s0 = inlined_call_operand.hbm [shape: f32[2,16384], index: 0, kind: input, shape index: {}]
  %s1 = inlined_call_operand.hbm [shape: bf16[9,16384], index: 1, kind: input, shape index: {}]
  %s2 = inlined_call_operand.vmem [shape: f32[1,9], index: 2, kind: input, shape index: {}]
  %s3 = inlined_call_operand.hbm [shape: f32[2,9], index: 3, kind: output, shape index: {}]
  %s4 = sld [smem:[#allocation0]]
  $region30: #{tpu_custom_call.1} parent=0
    _
  %s6 = ssub.s32 1, %s4
  %s7 = scalar_select 0, %s6, %s4
  $region1: #{tpu_custom_call.1} parent=0
    #allocation2 [shape = 'u8[131072]{0}', space=vmem, size = 0x20000, scoped, tag = 'input window, operand 0, single buffered']
    #allocation3 [shape = 's32[1]{0}', space=sflag, size = 0x4, scoped, tag = 'scoped memory for tpu_custom_call.1']
    #allocation4 [shape = 's32[1]{0}', space=sflag, size = 0x4, scoped, tag = 'scoped memory for tpu_custom_call.1']
    #allocation5 [shape = 'u8[524288]{0}', space=vmem, size = 0x80000, scoped, tag = 'input window, operand 1, single buffered']
    #allocation6 [shape = 's32[1]{0}', space=sflag, size = 0x4, scoped, tag = 'scoped memory for tpu_custom_call.1']
    #allocation7 [shape = 'u8[1024]{0}', space=vmem, size = 0x400, scoped, tag = 'output window, operand 0, single buffered']
    %8 = vsyncpa [#allocation3], 0
    %9 = vsyncpa [#allocation6], 0
    %10 = vsyncpa [#allocation4], 0
    // Predicated region
    $region2: #{tpu_custom_call.1} parent=1 // pred_check
      _
    $region3: #{tpu_custom_call.1} parent=1 // pred_check_branch
      %12 = sbr.rel (0) target = $region5
    $region4: #{tpu_custom_call.1} parent=1 // pred_region
      %s14 = ssub.s32 4096, 4096
      %15 = vsyncadd [#allocation3], %s14
      %s17 = sshll.u32 [#allocation2], 4
      %s18 = int_to_ptr.vmem [resolvable:$true] %s17
      %20 = dma.hbm_to_vmem [thread:$0]  %s0, 4096, %s18, [#allocation3]
    $region5: #{tpu_custom_call.1} parent=1 // pred_fallthru
      _
    // Predicated region
    $region6: #{tpu_custom_call.1} parent=1 // pred_check
      _
    $region7: #{tpu_custom_call.1} parent=1 // pred_check_branch
      %22 = sbr.rel (0) target = $region9
    $region8: #{tpu_custom_call.1} parent=1 // pred_region
      %s24 = ssub.s32 16384, 16384
      %25 = vsyncadd [#allocation6], %s24
      %s26 = sshll.u32 [#allocation5], 4
      %s27 = int_to_ptr.vmem [resolvable:$true] %s26
      %32 = dma.hbm_to_vmem [thread:$0]  %s1, 16384, %s27, [#allocation6], 8192, 8192, 512
    $region9: #{tpu_custom_call.1} parent=1 // pred_fallthru
      _
    // Predicated region
    $region10: #{tpu_custom_call.1} parent=1 // pred_check
      _
    $region11: #{tpu_custom_call.1} parent=1 // pred_check_branch
      %34 = sbr.rel (0) target = $region13
    $region12: #{tpu_custom_call.1} parent=1 // pred_region
      _
    $region13: #{tpu_custom_call.1} parent=1 // pred_fallthru
      _
    // Predicated region
    $region14: #{tpu_custom_call.1} parent=1 // pred_check
      _
    $region15: #{tpu_custom_call.1} parent=1 // pred_check_branch
      %36 = sbr.rel (0) target = $region17
    $region16: #{tpu_custom_call.1} parent=1 // pred_region
      %37 = dma.done [#allocation3], 4096
    $region17: #{tpu_custom_call.1} parent=1 // pred_fallthru
      _
    // Predicated region
    $region18: #{tpu_custom_call.1} parent=1 // pred_check
      _
    $region19: #{tpu_custom_call.1} parent=1 // pred_check_branch
      %39 = sbr.rel (0) target = $region21
    $region20: #{tpu_custom_call.1} parent=1 // pred_region
      %40 = dma.done [#allocation6], 16384
    $region21: #{tpu_custom_call.1} parent=1 // pred_fallthru
      _
    %v42 = vld [vmem:[#allocation2] sm:$0xff]
    %v43 = vld [vmem:[#allocation2 + $0x8] sm:$0xff]
    %v44 = vld [vmem:[#allocation2 + $0x10] sm:$0xff]
    %v45 = vld [vmem:[#allocation2 + $0x18] sm:$0xff]
    %v46 = vld [vmem:[#allocation2 + $0x20] sm:$0xff]
    %v47 = vld [vmem:[#allocation2 + $0x28] sm:$0xff]
    %v48 = vld [vmem:[#allocation2 + $0x30] sm:$0xff]
    %v49 = vld [vmem:[#allocation2 + $0x38] sm:$0xff]
    %v50 = vld [vmem:[#allocation2 + $0x40] sm:$0xff]
    %v51 = vld [vmem:[#allocation2 + $0x48] sm:$0xff]
    %v52 = vld [vmem:[#allocation2 + $0x50] sm:$0xff]
    %v53 = vld [vmem:[#allocation2 + $0x58] sm:$0xff]
    %v54 = vld [vmem:[#allocation2 + $0x60] sm:$0xff]
    %v55 = vld [vmem:[#allocation2 + $0x68] sm:$0xff]
    %v56 = vld [vmem:[#allocation2 + $0x70] sm:$0xff]
    %v57 = vld [vmem:[#allocation2 + $0x78] sm:$0xff]
    %v58 = vld [vmem:[#allocation2 + $0x80] sm:$0xff]
    %v59 = vld [vmem:[#allocation2 + $0x88] sm:$0xff]
    %v60 = vld [vmem:[#allocation2 + $0x90] sm:$0xff]
    %v61 = vld [vmem:[#allocation2 + $0x98] sm:$0xff]
    %v62 = vld [vmem:[#allocation2 + $0xa0] sm:$0xff]
    %v63 = vld [vmem:[#allocation2 + $0xa8] sm:$0xff]
    %v64 = vld [vmem:[#allocation2 + $0xb0] sm:$0xff]
    %v65 = vld [vmem:[#allocation2 + $0xb8] sm:$0xff]
    %v66 = vld [vmem:[#allocation2 + $0xc0] sm:$0xff]
    %v67 = vld [vmem:[#allocation2 + $0xc8] sm:$0xff]
    %v68 = vld [vmem:[#allocation2 + $0xd0] sm:$0xff]
    %v69 = vld [vmem:[#allocation2 + $0xd8] sm:$0xff]
    %v70 = vld [vmem:[#allocation2 + $0xe0] sm:$0xff]
    %v71 = vld [vmem:[#allocation2 + $0xe8] sm:$0xff]
    %v72 = vld [vmem:[#allocation2 + $0xf0] sm:$0xff]
    %v73 = vld [vmem:[#allocation2 + $0xf8] sm:$0xff]
    %v106 = vcombine.high %v42, %v42
    %v108 = vunpack.c.l.s4 1983009808
    %v109 = vunpack.c.0.s8 %v108
    %v110 = vlaneseq
    %v111 = vshrl.u32 %v110, 7
    %v112 = vsub.s32 %v109, %v111
    %v113 = vrot.slane %v42, %v112
    %v115 = vunpack.c.l.s4 1983009808
    %v116 = vunpack.c.0.s8 %v115
    %v117 = vlaneseq
    %v118 = vshrl.u32 %v117, 7
    %v119 = vsub.s32 %v116, %v118
    %v120 = vrot.slane %v106, %v119
    %v121 = vcombine.high %v113, %v113
    %v122 = vcombine.high %v120, %v120
    %v123 = vcombine.high %v43, %v43
    %v125 = vunpack.c.l.s4 1983009808
    %v126 = vunpack.c.0.s8 %v125
    %v127 = vlaneseq
    %v128 = vshrl.u32 %v127, 7
    %v129 = vsub.s32 %v126, %v128
    %v130 = vrot.slane %v43, %v129
    %v132 = vunpack.c.l.s4 1983009808
    %v133 = vunpack.c.0.s8 %v132
    %v134 = vlaneseq
    %v135 = vshrl.u32 %v134, 7
    %v136 = vsub.s32 %v133, %v135
    %v137 = vrot.slane %v123, %v136
    %v138 = vcombine.high %v130, %v130
    %v139 = vcombine.high %v137, %v137
    %v140 = vcombine.high %v44, %v44
    %v142 = vunpack.c.l.s4 1983009808
    %v143 = vunpack.c.0.s8 %v142
    %v144 = vlaneseq
    %v145 = vshrl.u32 %v144, 7
    %v146 = vsub.s32 %v143, %v145
    %v147 = vrot.slane %v44, %v146
    %v149 = vunpack.c.l.s4 1983009808
    %v150 = vunpack.c.0.s8 %v149
    %v151 = vlaneseq
    %v152 = vshrl.u32 %v151, 7
    %v153 = vsub.s32 %v150, %v152
    %v154 = vrot.slane %v140, %v153
    %v155 = vcombine.high %v147, %v147
    %v156 = vcombine.high %v154, %v154
    %v157 = vcombine.high %v45, %v45
    %v159 = vunpack.c.l.s4 1983009808
    %v160 = vunpack.c.0.s8 %v159
    %v161 = vlaneseq
    %v162 = vshrl.u32 %v161, 7
    %v163 = vsub.s32 %v160, %v162
    %v164 = vrot.slane %v45, %v163
    %v166 = vunpack.c.l.s4 1983009808
    %v167 = vunpack.c.0.s8 %v166
    %v168 = vlaneseq
    %v169 = vshrl.u32 %v168, 7
    %v170 = vsub.s32 %v167, %v169
    %v171 = vrot.slane %v157, %v170
    %v172 = vcombine.high %v164, %v164
    %v173 = vcombine.high %v171, %v171
    %v174 = vcombine.high %v46, %v46
    %v176 = vunpack.c.l.s4 1983009808
    %v177 = vunpack.c.0.s8 %v176
    %v178 = vlaneseq
    %v179 = vshrl.u32 %v178, 7
    %v180 = vsub.s32 %v177, %v179
    %v181 = vrot.slane %v46, %v180
    %v183 = vunpack.c.l.s4 1983009808
    %v184 = vunpack.c.0.s8 %v183
    %v185 = vlaneseq
    %v186 = vshrl.u32 %v185, 7
    %v187 = vsub.s32 %v184, %v186
    %v188 = vrot.slane %v174, %v187
    %v189 = vcombine.high %v181, %v181
    %v190 = vcombine.high %v188, %v188
    %v191 = vcombine.high %v47, %v47
    %v193 = vunpack.c.l.s4 1983009808
    %v194 = vunpack.c.0.s8 %v193
    %v195 = vlaneseq
    %v196 = vshrl.u32 %v195, 7
    %v197 = vsub.s32 %v194, %v196
    %v198 = vrot.slane %v47, %v197
    %v200 = vunpack.c.l.s4 1983009808
    %v201 = vunpack.c.0.s8 %v200
    %v202 = vlaneseq
    %v203 = vshrl.u32 %v202, 7
    %v204 = vsub.s32 %v201, %v203
    %v205 = vrot.slane %v191, %v204
    %v206 = vcombine.high %v198, %v198
    %v207 = vcombine.high %v205, %v205
    %v208 = vcombine.high %v48, %v48
    %v210 = vunpack.c.l.s4 1983009808
    %v211 = vunpack.c.0.s8 %v210
    %v212 = vlaneseq
    %v213 = vshrl.u32 %v212, 7
    %v214 = vsub.s32 %v211, %v213
    %v215 = vrot.slane %v48, %v214
    %v217 = vunpack.c.l.s4 1983009808
    %v218 = vunpack.c.0.s8 %v217
    %v219 = vlaneseq
    %v220 = vshrl.u32 %v219, 7
    %v221 = vsub.s32 %v218, %v220
    %v222 = vrot.slane %v208, %v221
    %v223 = vcombine.high %v215, %v215
    %v224 = vcombine.high %v222, %v222
    %v225 = vcombine.high %v49, %v49
    %v227 = vunpack.c.l.s4 1983009808
    %v228 = vunpack.c.0.s8 %v227
    %v229 = vlaneseq
    %v230 = vshrl.u32 %v229, 7
    %v231 = vsub.s32 %v228, %v230
    %v232 = vrot.slane %v49, %v231
    %v234 = vunpack.c.l.s4 1983009808
    %v235 = vunpack.c.0.s8 %v234
    %v236 = vlaneseq
    %v237 = vshrl.u32 %v236, 7
    %v238 = vsub.s32 %v235, %v237
    %v239 = vrot.slane %v225, %v238
    %v240 = vcombine.high %v232, %v232
    %v241 = vcombine.high %v239, %v239
    %v242 = vcombine.high %v50, %v50
    %v244 = vunpack.c.l.s4 1983009808
    %v245 = vunpack.c.0.s8 %v244
    %v246 = vlaneseq
    %v247 = vshrl.u32 %v246, 7
    %v248 = vsub.s32 %v245, %v247
    %v249 = vrot.slane %v50, %v248
    %v251 = vunpack.c.l.s4 1983009808
    %v252 = vunpack.c.0.s8 %v251
    %v253 = vlaneseq
    %v254 = vshrl.u32 %v253, 7
    %v255 = vsub.s32 %v252, %v254
    %v256 = vrot.slane %v242, %v255
    %v257 = vcombine.high %v249, %v249
    %v258 = vcombine.high %v256, %v256
    %v259 = vcombine.high %v51, %v51
    %v261 = vunpack.c.l.s4 1983009808
    %v262 = vunpack.c.0.s8 %v261
    %v263 = vlaneseq
    %v264 = vshrl.u32 %v263, 7
    %v265 = vsub.s32 %v262, %v264
    %v266 = vrot.slane %v51, %v265
    %v268 = vunpack.c.l.s4 1983009808
    %v269 = vunpack.c.0.s8 %v268
    %v270 = vlaneseq
    %v271 = vshrl.u32 %v270, 7
    %v272 = vsub.s32 %v269, %v271
    %v273 = vrot.slane %v259, %v272
    %v274 = vcombine.high %v266, %v266
    %v275 = vcombine.high %v273, %v273
    %v276 = vcombine.high %v52, %v52
    %v278 = vunpack.c.l.s4 1983009808
    %v279 = vunpack.c.0.s8 %v278
    %v280 = vlaneseq
    %v281 = vshrl.u32 %v280, 7
    %v282 = vsub.s32 %v279, %v281
    %v283 = vrot.slane %v52, %v282
    %v285 = vunpack.c.l.s4 1983009808
    %v286 = vunpack.c.0.s8 %v285
    %v287 = vlaneseq
    %v288 = vshrl.u32 %v287, 7
    %v289 = vsub.s32 %v286, %v288
    %v290 = vrot.slane %v276, %v289
    %v291 = vcombine.high %v283, %v283
    %v292 = vcombine.high %v290, %v290
    %v293 = vcombine.high %v53, %v53
    %v295 = vunpack.c.l.s4 1983009808
    %v296 = vunpack.c.0.s8 %v295
    %v297 = vlaneseq
    %v298 = vshrl.u32 %v297, 7
    %v299 = vsub.s32 %v296, %v298
    %v300 = vrot.slane %v53, %v299
    %v302 = vunpack.c.l.s4 1983009808
    %v303 = vunpack.c.0.s8 %v302
    %v304 = vlaneseq
    %v305 = vshrl.u32 %v304, 7
    %v306 = vsub.s32 %v303, %v305
    %v307 = vrot.slane %v293, %v306
    %v308 = vcombine.high %v300, %v300
    %v309 = vcombine.high %v307, %v307
    %v310 = vcombine.high %v54, %v54
    %v312 = vunpack.c.l.s4 1983009808
    %v313 = vunpack.c.0.s8 %v312
    %v314 = vlaneseq
    %v315 = vshrl.u32 %v314, 7
    %v316 = vsub.s32 %v313, %v315
    %v317 = vrot.slane %v54, %v316
    %v319 = vunpack.c.l.s4 1983009808
    %v320 = vunpack.c.0.s8 %v319
    %v321 = vlaneseq
    %v322 = vshrl.u32 %v321, 7
    %v323 = vsub.s32 %v320, %v322
    %v324 = vrot.slane %v310, %v323
    %v325 = vcombine.high %v317, %v317
    %v326 = vcombine.high %v324, %v324
    %v327 = vcombine.high %v55, %v55
    %v329 = vunpack.c.l.s4 1983009808
    %v330 = vunpack.c.0.s8 %v329
    %v331 = vlaneseq
    %v332 = vshrl.u32 %v331, 7
    %v333 = vsub.s32 %v330, %v332
    %v334 = vrot.slane %v55, %v333
    %v336 = vunpack.c.l.s4 1983009808
    %v337 = vunpack.c.0.s8 %v336
    %v338 = vlaneseq
    %v339 = vshrl.u32 %v338, 7
    %v340 = vsub.s32 %v337, %v339
    %v341 = vrot.slane %v327, %v340
    %v342 = vcombine.high %v334, %v334
    %v343 = vcombine.high %v341, %v341
    %v344 = vcombine.high %v56, %v56
    %v346 = vunpack.c.l.s4 1983009808
    %v347 = vunpack.c.0.s8 %v346
    %v348 = vlaneseq
    %v349 = vshrl.u32 %v348, 7
    %v350 = vsub.s32 %v347, %v349
    %v351 = vrot.slane %v56, %v350
    %v353 = vunpack.c.l.s4 1983009808
    %v354 = vunpack.c.0.s8 %v353
    %v355 = vlaneseq
    %v356 = vshrl.u32 %v355, 7
    %v357 = vsub.s32 %v354, %v356
    %v358 = vrot.slane %v344, %v357
    %v359 = vcombine.high %v351, %v351
    %v360 = vcombine.high %v358, %v358
    %v361 = vcombine.high %v57, %v57
    %v363 = vunpack.c.l.s4 1983009808
    %v364 = vunpack.c.0.s8 %v363
    %v365 = vlaneseq
    %v366 = vshrl.u32 %v365, 7
    %v367 = vsub.s32 %v364, %v366
    %v368 = vrot.slane %v57, %v367
    %v370 = vunpack.c.l.s4 1983009808
    %v371 = vunpack.c.0.s8 %v370
    %v372 = vlaneseq
    %v373 = vshrl.u32 %v372, 7
    %v374 = vsub.s32 %v371, %v373
    %v375 = vrot.slane %v361, %v374
    %v376 = vcombine.high %v368, %v368
    %v377 = vcombine.high %v375, %v375
    %v378 = vcombine.high %v58, %v58
    %v380 = vunpack.c.l.s4 1983009808
    %v381 = vunpack.c.0.s8 %v380
    %v382 = vlaneseq
    %v383 = vshrl.u32 %v382, 7
    %v384 = vsub.s32 %v381, %v383
    %v385 = vrot.slane %v58, %v384
    %v387 = vunpack.c.l.s4 1983009808
    %v388 = vunpack.c.0.s8 %v387
    %v389 = vlaneseq
    %v390 = vshrl.u32 %v389, 7
    %v391 = vsub.s32 %v388, %v390
    %v392 = vrot.slane %v378, %v391
    %v393 = vcombine.high %v385, %v385
    %v394 = vcombine.high %v392, %v392
    %v395 = vcombine.high %v59, %v59
    %v397 = vunpack.c.l.s4 1983009808
    %v398 = vunpack.c.0.s8 %v397
    %v399 = vlaneseq
    %v400 = vshrl.u32 %v399, 7
    %v401 = vsub.s32 %v398, %v400
    %v402 = vrot.slane %v59, %v401
    %v404 = vunpack.c.l.s4 1983009808
    %v405 = vunpack.c.0.s8 %v404
    %v406 = vlaneseq
    %v407 = vshrl.u32 %v406, 7
    %v408 = vsub.s32 %v405, %v407
    %v409 = vrot.slane %v395, %v408
    %v410 = vcombine.high %v402, %v402
    %v411 = vcombine.high %v409, %v409
    %v412 = vcombine.high %v60, %v60
    %v414 = vunpack.c.l.s4 1983009808
    %v415 = vunpack.c.0.s8 %v414
    %v416 = vlaneseq
    %v417 = vshrl.u32 %v416, 7
    %v418 = vsub.s32 %v415, %v417
    %v419 = vrot.slane %v60, %v418
    %v421 = vunpack.c.l.s4 1983009808
    %v422 = vunpack.c.0.s8 %v421
    %v423 = vlaneseq
    %v424 = vshrl.u32 %v423, 7
    %v425 = vsub.s32 %v422, %v424
    %v426 = vrot.slane %v412, %v425
    %v427 = vcombine.high %v419, %v419
    %v428 = vcombine.high %v426, %v426
    %v429 = vcombine.high %v61, %v61
    %v431 = vunpack.c.l.s4 1983009808
    %v432 = vunpack.c.0.s8 %v431
    %v433 = vlaneseq
    %v434 = vshrl.u32 %v433, 7
    %v435 = vsub.s32 %v432, %v434
    %v436 = vrot.slane %v61, %v435
    %v438 = vunpack.c.l.s4 1983009808
    %v439 = vunpack.c.0.s8 %v438
    %v440 = vlaneseq
    %v441 = vshrl.u32 %v440, 7
    %v442 = vsub.s32 %v439, %v441
    %v443 = vrot.slane %v429, %v442
    %v444 = vcombine.high %v436, %v436
    %v445 = vcombine.high %v443, %v443
    %v446 = vcombine.high %v62, %v62
    %v448 = vunpack.c.l.s4 1983009808
    %v449 = vunpack.c.0.s8 %v448
    %v450 = vlaneseq
    %v451 = vshrl.u32 %v450, 7
    %v452 = vsub.s32 %v449, %v451
    %v453 = vrot.slane %v62, %v452
    %v455 = vunpack.c.l.s4 1983009808
    %v456 = vunpack.c.0.s8 %v455
    %v457 = vlaneseq
    %v458 = vshrl.u32 %v457, 7
    %v459 = vsub.s32 %v456, %v458
    %v460 = vrot.slane %v446, %v459
    %v461 = vcombine.high %v453, %v453
    %v462 = vcombine.high %v460, %v460
    %v463 = vcombine.high %v63, %v63
    %v465 = vunpack.c.l.s4 1983009808
    %v466 = vunpack.c.0.s8 %v465
    %v467 = vlaneseq
    %v468 = vshrl.u32 %v467, 7
    %v469 = vsub.s32 %v466, %v468
    %v470 = vrot.slane %v63, %v469
    %v472 = vunpack.c.l.s4 1983009808
    %v473 = vunpack.c.0.s8 %v472
    %v474 = vlaneseq
    %v475 = vshrl.u32 %v474, 7
    %v476 = vsub.s32 %v473, %v475
    %v477 = vrot.slane %v463, %v476
    %v478 = vcombine.high %v470, %v470
    %v479 = vcombine.high %v477, %v477
    %v480 = vcombine.high %v64, %v64
    %v482 = vunpack.c.l.s4 1983009808
    %v483 = vunpack.c.0.s8 %v482
    %v484 = vlaneseq
    %v485 = vshrl.u32 %v484, 7
    %v486 = vsub.s32 %v483, %v485
    %v487 = vrot.slane %v64, %v486
    %v489 = vunpack.c.l.s4 1983009808
    %v490 = vunpack.c.0.s8 %v489
    %v491 = vlaneseq
    %v492 = vshrl.u32 %v491, 7
    %v493 = vsub.s32 %v490, %v492
    %v494 = vrot.slane %v480, %v493
    %v495 = vcombine.high %v487, %v487
    %v496 = vcombine.high %v494, %v494
    %v497 = vcombine.high %v65, %v65
    %v499 = vunpack.c.l.s4 1983009808
    %v500 = vunpack.c.0.s8 %v499
    %v501 = vlaneseq
    %v502 = vshrl.u32 %v501, 7
    %v503 = vsub.s32 %v500, %v502
    %v504 = vrot.slane %v65, %v503
    %v506 = vunpack.c.l.s4 1983009808
    %v507 = vunpack.c.0.s8 %v506
    %v508 = vlaneseq
    %v509 = vshrl.u32 %v508, 7
    %v510 = vsub.s32 %v507, %v509
    %v511 = vrot.slane %v497, %v510
    %v512 = vcombine.high %v504, %v504
    %v513 = vcombine.high %v511, %v511
    %v514 = vcombine.high %v66, %v66
    %v516 = vunpack.c.l.s4 1983009808
    %v517 = vunpack.c.0.s8 %v516
    %v518 = vlaneseq
    %v519 = vshrl.u32 %v518, 7
    %v520 = vsub.s32 %v517, %v519
    %v521 = vrot.slane %v66, %v520
    %v523 = vunpack.c.l.s4 1983009808
    %v524 = vunpack.c.0.s8 %v523
    %v525 = vlaneseq
    %v526 = vshrl.u32 %v525, 7
    %v527 = vsub.s32 %v524, %v526
    %v528 = vrot.slane %v514, %v527
    %v529 = vcombine.high %v521, %v521
    %v530 = vcombine.high %v528, %v528
    %v531 = vcombine.high %v67, %v67
    %v533 = vunpack.c.l.s4 1983009808
    %v534 = vunpack.c.0.s8 %v533
    %v535 = vlaneseq
    %v536 = vshrl.u32 %v535, 7
    %v537 = vsub.s32 %v534, %v536
    %v538 = vrot.slane %v67, %v537
    %v540 = vunpack.c.l.s4 1983009808
    %v541 = vunpack.c.0.s8 %v540
    %v542 = vlaneseq
    %v543 = vshrl.u32 %v542, 7
    %v544 = vsub.s32 %v541, %v543
    %v545 = vrot.slane %v531, %v544
    %v546 = vcombine.high %v538, %v538
    %v547 = vcombine.high %v545, %v545
    %v548 = vcombine.high %v68, %v68
    %v550 = vunpack.c.l.s4 1983009808
    %v551 = vunpack.c.0.s8 %v550
    %v552 = vlaneseq
    %v553 = vshrl.u32 %v552, 7
    %v554 = vsub.s32 %v551, %v553
    %v555 = vrot.slane %v68, %v554
    %v557 = vunpack.c.l.s4 1983009808
    %v558 = vunpack.c.0.s8 %v557
    %v559 = vlaneseq
    %v560 = vshrl.u32 %v559, 7
    %v561 = vsub.s32 %v558, %v560
    %v562 = vrot.slane %v548, %v561
    %v563 = vcombine.high %v555, %v555
    %v564 = vcombine.high %v562, %v562
    %v565 = vcombine.high %v69, %v69
    %v567 = vunpack.c.l.s4 1983009808
    %v568 = vunpack.c.0.s8 %v567
    %v569 = vlaneseq
    %v570 = vshrl.u32 %v569, 7
    %v571 = vsub.s32 %v568, %v570
    %v572 = vrot.slane %v69, %v571
    %v574 = vunpack.c.l.s4 1983009808
    %v575 = vunpack.c.0.s8 %v574
    %v576 = vlaneseq
    %v577 = vshrl.u32 %v576, 7
    %v578 = vsub.s32 %v575, %v577
    %v579 = vrot.slane %v565, %v578
    %v580 = vcombine.high %v572, %v572
    %v581 = vcombine.high %v579, %v579
    %v582 = vcombine.high %v70, %v70
    %v584 = vunpack.c.l.s4 1983009808
    %v585 = vunpack.c.0.s8 %v584
    %v586 = vlaneseq
    %v587 = vshrl.u32 %v586, 7
    %v588 = vsub.s32 %v585, %v587
    %v589 = vrot.slane %v70, %v588
    %v591 = vunpack.c.l.s4 1983009808
    %v592 = vunpack.c.0.s8 %v591
    %v593 = vlaneseq
    %v594 = vshrl.u32 %v593, 7
    %v595 = vsub.s32 %v592, %v594
    %v596 = vrot.slane %v582, %v595
    %v597 = vcombine.high %v589, %v589
    %v598 = vcombine.high %v596, %v596
    %v599 = vcombine.high %v71, %v71
    %v601 = vunpack.c.l.s4 1983009808
    %v602 = vunpack.c.0.s8 %v601
    %v603 = vlaneseq
    %v604 = vshrl.u32 %v603, 7
    %v605 = vsub.s32 %v602, %v604
    %v606 = vrot.slane %v71, %v605
    %v608 = vunpack.c.l.s4 1983009808
    %v609 = vunpack.c.0.s8 %v608
    %v610 = vlaneseq
    %v611 = vshrl.u32 %v610, 7
    %v612 = vsub.s32 %v609, %v611
    %v613 = vrot.slane %v599, %v612
    %v614 = vcombine.high %v606, %v606
    %v615 = vcombine.high %v613, %v613
    %v616 = vcombine.high %v72, %v72
    %v618 = vunpack.c.l.s4 1983009808
    %v619 = vunpack.c.0.s8 %v618
    %v620 = vlaneseq
    %v621 = vshrl.u32 %v620, 7
    %v622 = vsub.s32 %v619, %v621
    %v623 = vrot.slane %v72, %v622
    %v625 = vunpack.c.l.s4 1983009808
    %v626 = vunpack.c.0.s8 %v625
    %v627 = vlaneseq
    %v628 = vshrl.u32 %v627, 7
    %v629 = vsub.s32 %v626, %v628
    %v630 = vrot.slane %v616, %v629
    %v631 = vcombine.high %v623, %v623
    %v632 = vcombine.high %v630, %v630
    %v633 = vcombine.high %v73, %v73
    %v635 = vunpack.c.l.s4 1983009808
    %v636 = vunpack.c.0.s8 %v635
    %v637 = vlaneseq
    %v638 = vshrl.u32 %v637, 7
    %v639 = vsub.s32 %v636, %v638
    %v640 = vrot.slane %v73, %v639
    %v642 = vunpack.c.l.s4 1983009808
    %v643 = vunpack.c.0.s8 %v642
    %v644 = vlaneseq
    %v645 = vshrl.u32 %v644, 7
    %v646 = vsub.s32 %v643, %v645
    %v647 = vrot.slane %v633, %v646
    %v648 = vcombine.high %v640, %v640
    %v649 = vcombine.high %v647, %v647
    %v778 = vpack.c.bf16 %v113, %v113
    %v779 = vpack.c.bf16 %v121, %v121
    %v780 = vpack.c.bf16 %v120, %v120
    %v781 = vpack.c.bf16 %v122, %v122
    %v782 = vpack.c.bf16 %v130, %v130
    %v783 = vpack.c.bf16 %v138, %v138
    %v784 = vpack.c.bf16 %v137, %v137
    %v785 = vpack.c.bf16 %v139, %v139
    %v786 = vpack.c.bf16 %v147, %v147
    %v787 = vpack.c.bf16 %v155, %v155
    %v788 = vpack.c.bf16 %v154, %v154
    %v789 = vpack.c.bf16 %v156, %v156
    %v790 = vpack.c.bf16 %v164, %v164
    %v791 = vpack.c.bf16 %v172, %v172
    %v792 = vpack.c.bf16 %v171, %v171
    %v793 = vpack.c.bf16 %v173, %v173
    %v794 = vpack.c.bf16 %v181, %v181
    %v795 = vpack.c.bf16 %v189, %v189
    %v796 = vpack.c.bf16 %v188, %v188
    %v797 = vpack.c.bf16 %v190, %v190
    %v798 = vpack.c.bf16 %v198, %v198
    %v799 = vpack.c.bf16 %v206, %v206
    %v800 = vpack.c.bf16 %v205, %v205
    %v801 = vpack.c.bf16 %v207, %v207
    %v802 = vpack.c.bf16 %v215, %v215
    %v803 = vpack.c.bf16 %v223, %v223
    %v804 = vpack.c.bf16 %v222, %v222
    %v805 = vpack.c.bf16 %v224, %v224
    %v806 = vpack.c.bf16 %v232, %v232
    %v807 = vpack.c.bf16 %v240, %v240
    %v808 = vpack.c.bf16 %v239, %v239
    %v809 = vpack.c.bf16 %v241, %v241
    %v810 = vpack.c.bf16 %v249, %v249
    %v811 = vpack.c.bf16 %v257, %v257
    %v812 = vpack.c.bf16 %v256, %v256
    %v813 = vpack.c.bf16 %v258, %v258
    %v814 = vpack.c.bf16 %v266, %v266
    %v815 = vpack.c.bf16 %v274, %v274
    %v816 = vpack.c.bf16 %v273, %v273
    %v817 = vpack.c.bf16 %v275, %v275
    %v818 = vpack.c.bf16 %v283, %v283
    %v819 = vpack.c.bf16 %v291, %v291
    %v820 = vpack.c.bf16 %v290, %v290
    %v821 = vpack.c.bf16 %v292, %v292
    %v822 = vpack.c.bf16 %v300, %v300
    %v823 = vpack.c.bf16 %v308, %v308
    %v824 = vpack.c.bf16 %v307, %v307
    %v825 = vpack.c.bf16 %v309, %v309
    %v826 = vpack.c.bf16 %v317, %v317
    %v827 = vpack.c.bf16 %v325, %v325
    %v828 = vpack.c.bf16 %v324, %v324
    %v829 = vpack.c.bf16 %v326, %v326
    %v830 = vpack.c.bf16 %v334, %v334
    %v831 = vpack.c.bf16 %v342, %v342
    %v832 = vpack.c.bf16 %v341, %v341
    %v833 = vpack.c.bf16 %v343, %v343
    %v834 = vpack.c.bf16 %v351, %v351
    %v835 = vpack.c.bf16 %v359, %v359
    %v836 = vpack.c.bf16 %v358, %v358
    %v837 = vpack.c.bf16 %v360, %v360
    %v838 = vpack.c.bf16 %v368, %v368
    %v839 = vpack.c.bf16 %v376, %v376
    %v840 = vpack.c.bf16 %v375, %v375
    %v841 = vpack.c.bf16 %v377, %v377
    %v842 = vpack.c.bf16 %v385, %v385
    %v843 = vpack.c.bf16 %v393, %v393
    %v844 = vpack.c.bf16 %v392, %v392
    %v845 = vpack.c.bf16 %v394, %v394
    %v846 = vpack.c.bf16 %v402, %v402
    %v847 = vpack.c.bf16 %v410, %v410
    %v848 = vpack.c.bf16 %v409, %v409
    %v849 = vpack.c.bf16 %v411, %v411
    %v850 = vpack.c.bf16 %v419, %v419
    %v851 = vpack.c.bf16 %v427, %v427
    %v852 = vpack.c.bf16 %v426, %v426
    %v853 = vpack.c.bf16 %v428, %v428
    %v854 = vpack.c.bf16 %v436, %v436
    %v855 = vpack.c.bf16 %v444, %v444
    %v856 = vpack.c.bf16 %v443, %v443
    %v857 = vpack.c.bf16 %v445, %v445
    %v858 = vpack.c.bf16 %v453, %v453
    %v859 = vpack.c.bf16 %v461, %v461
    %v860 = vpack.c.bf16 %v460, %v460
    %v861 = vpack.c.bf16 %v462, %v462
    %v862 = vpack.c.bf16 %v470, %v470
    %v863 = vpack.c.bf16 %v478, %v478
    %v864 = vpack.c.bf16 %v477, %v477
    %v865 = vpack.c.bf16 %v479, %v479
    %v866 = vpack.c.bf16 %v487, %v487
    %v867 = vpack.c.bf16 %v495, %v495
    %v868 = vpack.c.bf16 %v494, %v494
    %v869 = vpack.c.bf16 %v496, %v496
    %v870 = vpack.c.bf16 %v504, %v504
    %v871 = vpack.c.bf16 %v512, %v512
    %v872 = vpack.c.bf16 %v511, %v511
    %v873 = vpack.c.bf16 %v513, %v513
    %v874 = vpack.c.bf16 %v521, %v521
    %v875 = vpack.c.bf16 %v529, %v529
    %v876 = vpack.c.bf16 %v528, %v528
    %v877 = vpack.c.bf16 %v530, %v530
    %v878 = vpack.c.bf16 %v538, %v538
    %v879 = vpack.c.bf16 %v546, %v546
    %v880 = vpack.c.bf16 %v545, %v545
    %v881 = vpack.c.bf16 %v547, %v547
    %v882 = vpack.c.bf16 %v555, %v555
    %v883 = vpack.c.bf16 %v563, %v563
    %v884 = vpack.c.bf16 %v562, %v562
    %v885 = vpack.c.bf16 %v564, %v564
    %v886 = vpack.c.bf16 %v572, %v572
    %v887 = vpack.c.bf16 %v580, %v580
    %v888 = vpack.c.bf16 %v579, %v579
    %v889 = vpack.c.bf16 %v581, %v581
    %v890 = vpack.c.bf16 %v589, %v589
    %v891 = vpack.c.bf16 %v597, %v597
    %v892 = vpack.c.bf16 %v596, %v596
    %v893 = vpack.c.bf16 %v598, %v598
    %v894 = vpack.c.bf16 %v606, %v606
    %v895 = vpack.c.bf16 %v614, %v614
    %v896 = vpack.c.bf16 %v613, %v613
    %v897 = vpack.c.bf16 %v615, %v615
    %v898 = vpack.c.bf16 %v623, %v623
    %v899 = vpack.c.bf16 %v631, %v631
    %v900 = vpack.c.bf16 %v630, %v630
    %v901 = vpack.c.bf16 %v632, %v632
    %v902 = vpack.c.bf16 %v640, %v640
    %v903 = vpack.c.bf16 %v648, %v648
    %v904 = vpack.c.bf16 %v647, %v647
    %v905 = vpack.c.bf16 %v649, %v649
    %v906 = vld [vmem:[#allocation5] sm:$0xff]
    %v907 = vld [vmem:[#allocation5 + $0x8] sm:$0xff]
    %v908 = vld [vmem:[#allocation5 + $0x10] sm:$0xff]
    %v909 = vld [vmem:[#allocation5 + $0x18] sm:$0xff]
    %v910 = vld [vmem:[#allocation5 + $0x20] sm:$0xff]
    %v911 = vld [vmem:[#allocation5 + $0x28] sm:$0xff]
    %v912 = vld [vmem:[#allocation5 + $0x30] sm:$0xff]
    %v913 = vld [vmem:[#allocation5 + $0x38] sm:$0xff]
    %v914 = vld [vmem:[#allocation5 + $0x40] sm:$0xff]
    %v915 = vld [vmem:[#allocation5 + $0x48] sm:$0xff]
    %v916 = vld [vmem:[#allocation5 + $0x50] sm:$0xff]
    %v917 = vld [vmem:[#allocation5 + $0x58] sm:$0xff]
    %v918 = vld [vmem:[#allocation5 + $0x60] sm:$0xff]
    %v919 = vld [vmem:[#allocation5 + $0x68] sm:$0xff]
    %v920 = vld [vmem:[#allocation5 + $0x70] sm:$0xff]
    %v921 = vld [vmem:[#allocation5 + $0x78] sm:$0xff]
    %v922 = vld [vmem:[#allocation5 + $0x80] sm:$0xff]
    %v923 = vld [vmem:[#allocation5 + $0x88] sm:$0xff]
    %v924 = vld [vmem:[#allocation5 + $0x90] sm:$0xff]
    %v925 = vld [vmem:[#allocation5 + $0x98] sm:$0xff]
    %v926 = vld [vmem:[#allocation5 + $0xa0] sm:$0xff]
    %v927 = vld [vmem:[#allocation5 + $0xa8] sm:$0xff]
    %v928 = vld [vmem:[#allocation5 + $0xb0] sm:$0xff]
    %v929 = vld [vmem:[#allocation5 + $0xb8] sm:$0xff]
    %v930 = vld [vmem:[#allocation5 + $0xc0] sm:$0xff]
    %v931 = vld [vmem:[#allocation5 + $0xc8] sm:$0xff]
    %v932 = vld [vmem:[#allocation5 + $0xd0] sm:$0xff]
    %v933 = vld [vmem:[#allocation5 + $0xd8] sm:$0xff]
    %v934 = vld [vmem:[#allocation5 + $0xe0] sm:$0xff]
    %v935 = vld [vmem:[#allocation5 + $0xe8] sm:$0xff]
    %v936 = vld [vmem:[#allocation5 + $0xf0] sm:$0xff]
    %v937 = vld [vmem:[#allocation5 + $0xf8] sm:$0xff]
    %v938 = vld [vmem:[#allocation5 + $0x100] sm:$0xff]
    %v939 = vld [vmem:[#allocation5 + $0x108] sm:$0xff]
    %v940 = vld [vmem:[#allocation5 + $0x110] sm:$0xff]
    %v941 = vld [vmem:[#allocation5 + $0x118] sm:$0xff]
    %v942 = vld [vmem:[#allocation5 + $0x120] sm:$0xff]
    %v943 = vld [vmem:[#allocation5 + $0x128] sm:$0xff]
    %v944 = vld [vmem:[#allocation5 + $0x130] sm:$0xff]
    %v945 = vld [vmem:[#allocation5 + $0x138] sm:$0xff]
    %v946 = vld [vmem:[#allocation5 + $0x140] sm:$0xff]
    %v947 = vld [vmem:[#allocation5 + $0x148] sm:$0xff]
    %v948 = vld [vmem:[#allocation5 + $0x150] sm:$0xff]
    %v949 = vld [vmem:[#allocation5 + $0x158] sm:$0xff]
    %v950 = vld [vmem:[#allocation5 + $0x160] sm:$0xff]
    %v951 = vld [vmem:[#allocation5 + $0x168] sm:$0xff]
    %v952 = vld [vmem:[#allocation5 + $0x170] sm:$0xff]
    %v953 = vld [vmem:[#allocation5 + $0x178] sm:$0xff]
    %v954 = vld [vmem:[#allocation5 + $0x180] sm:$0xff]
    %v955 = vld [vmem:[#allocation5 + $0x188] sm:$0xff]
    %v956 = vld [vmem:[#allocation5 + $0x190] sm:$0xff]
    %v957 = vld [vmem:[#allocation5 + $0x198] sm:$0xff]
    %v958 = vld [vmem:[#allocation5 + $0x1a0] sm:$0xff]
    %v959 = vld [vmem:[#allocation5 + $0x1a8] sm:$0xff]
    %v960 = vld [vmem:[#allocation5 + $0x1b0] sm:$0xff]
    %v961 = vld [vmem:[#allocation5 + $0x1b8] sm:$0xff]
    %v962 = vld [vmem:[#allocation5 + $0x1c0] sm:$0xff]
    %v963 = vld [vmem:[#allocation5 + $0x1c8] sm:$0xff]
    %v964 = vld [vmem:[#allocation5 + $0x1d0] sm:$0xff]
    %v965 = vld [vmem:[#allocation5 + $0x1d8] sm:$0xff]
    %v966 = vld [vmem:[#allocation5 + $0x1e0] sm:$0xff]
    %v967 = vld [vmem:[#allocation5 + $0x1e8] sm:$0xff]
    %v968 = vld [vmem:[#allocation5 + $0x1f0] sm:$0xff]
    %v969 = vld [vmem:[#allocation5 + $0x1f8] sm:$0xff]
    %v970 = vld [vmem:[#allocation5 + $0x200] sm:$0x11]
    %v971 = vld [vmem:[#allocation5 + $0x208] sm:$0x11]
    %v972 = vld [vmem:[#allocation5 + $0x210] sm:$0x11]
    %v973 = vld [vmem:[#allocation5 + $0x218] sm:$0x11]
    %v974 = vld [vmem:[#allocation5 + $0x220] sm:$0x11]
    %v975 = vld [vmem:[#allocation5 + $0x228] sm:$0x11]
    %v976 = vld [vmem:[#allocation5 + $0x230] sm:$0x11]
    %v977 = vld [vmem:[#allocation5 + $0x238] sm:$0x11]
    %v978 = vld [vmem:[#allocation5 + $0x240] sm:$0x11]
    %v979 = vld [vmem:[#allocation5 + $0x248] sm:$0x11]
    %v980 = vld [vmem:[#allocation5 + $0x250] sm:$0x11]
    %v981 = vld [vmem:[#allocation5 + $0x258] sm:$0x11]
    %v982 = vld [vmem:[#allocation5 + $0x260] sm:$0x11]
    %v983 = vld [vmem:[#allocation5 + $0x268] sm:$0x11]
    %v984 = vld [vmem:[#allocation5 + $0x270] sm:$0x11]
    %v985 = vld [vmem:[#allocation5 + $0x278] sm:$0x11]
    %v986 = vld [vmem:[#allocation5 + $0x280] sm:$0x11]
    %v987 = vld [vmem:[#allocation5 + $0x288] sm:$0x11]
    %v988 = vld [vmem:[#allocation5 + $0x290] sm:$0x11]
    %v989 = vld [vmem:[#allocation5 + $0x298] sm:$0x11]
    %v990 = vld [vmem:[#allocation5 + $0x2a0] sm:$0x11]
    %v991 = vld [vmem:[#allocation5 + $0x2a8] sm:$0x11]
    %v992 = vld [vmem:[#allocation5 + $0x2b0] sm:$0x11]
    %v993 = vld [vmem:[#allocation5 + $0x2b8] sm:$0x11]
    %v994 = vld [vmem:[#allocation5 + $0x2c0] sm:$0x11]
    %v995 = vld [vmem:[#allocation5 + $0x2c8] sm:$0x11]
    %v996 = vld [vmem:[#allocation5 + $0x2d0] sm:$0x11]
    %v997 = vld [vmem:[#allocation5 + $0x2d8] sm:$0x11]
    %v998 = vld [vmem:[#allocation5 + $0x2e0] sm:$0x11]
    %v999 = vld [vmem:[#allocation5 + $0x2e8] sm:$0x11]
    %v1000 = vld [vmem:[#allocation5 + $0x2f0] sm:$0x11]
    %v1001 = vld [vmem:[#allocation5 + $0x2f8] sm:$0x11]
    %v1002 = vld [vmem:[#allocation5 + $0x300] sm:$0x11]
    %v1003 = vld [vmem:[#allocation5 + $0x308] sm:$0x11]
    %v1004 = vld [vmem:[#allocation5 + $0x310] sm:$0x11]
    %v1005 = vld [vmem:[#allocation5 + $0x318] sm:$0x11]
    %v1006 = vld [vmem:[#allocation5 + $0x320] sm:$0x11]
    %v1007 = vld [vmem:[#allocation5 + $0x328] sm:$0x11]
    %v1008 = vld [vmem:[#allocation5 + $0x330] sm:$0x11]
    %v1009 = vld [vmem:[#allocation5 + $0x338] sm:$0x11]
    %v1010 = vld [vmem:[#allocation5 + $0x340] sm:$0x11]
    %v1011 = vld [vmem:[#allocation5 + $0x348] sm:$0x11]
    %v1012 = vld [vmem:[#allocation5 + $0x350] sm:$0x11]
    %v1013 = vld [vmem:[#allocation5 + $0x358] sm:$0x11]
    %v1014 = vld [vmem:[#allocation5 + $0x360] sm:$0x11]
    %v1015 = vld [vmem:[#allocation5 + $0x368] sm:$0x11]
    %v1016 = vld [vmem:[#allocation5 + $0x370] sm:$0x11]
    %v1017 = vld [vmem:[#allocation5 + $0x378] sm:$0x11]
    %v1018 = vld [vmem:[#allocation5 + $0x380] sm:$0x11]
    %v1019 = vld [vmem:[#allocation5 + $0x388] sm:$0x11]
    %v1020 = vld [vmem:[#allocation5 + $0x390] sm:$0x11]
    %v1021 = vld [vmem:[#allocation5 + $0x398] sm:$0x11]
    %v1022 = vld [vmem:[#allocation5 + $0x3a0] sm:$0x11]
    %v1023 = vld [vmem:[#allocation5 + $0x3a8] sm:$0x11]
    %v1024 = vld [vmem:[#allocation5 + $0x3b0] sm:$0x11]
    %v1025 = vld [vmem:[#allocation5 + $0x3b8] sm:$0x11]
    %v1026 = vld [vmem:[#allocation5 + $0x3c0] sm:$0x11]
    %v1027 = vld [vmem:[#allocation5 + $0x3c8] sm:$0x11]
    %v1028 = vld [vmem:[#allocation5 + $0x3d0] sm:$0x11]
    %v1029 = vld [vmem:[#allocation5 + $0x3d8] sm:$0x11]
    %v1030 = vld [vmem:[#allocation5 + $0x3e0] sm:$0x11]
    %v1031 = vld [vmem:[#allocation5 + $0x3e8] sm:$0x11]
    %v1032 = vld [vmem:[#allocation5 + $0x3f0] sm:$0x11]
    %v1033 = vld [vmem:[#allocation5 + $0x3f8] sm:$0x11]
    %v1162 = vunpack.c.l.b16 %v906
    %v1163 = vunpack.c.h.b16 %v906
    %v1164 = vunpack.c.l.b16 %v907
    %v1165 = vunpack.c.h.b16 %v907
    %v1166 = vunpack.c.l.b16 %v908
    %v1167 = vunpack.c.h.b16 %v908
    %v1168 = vunpack.c.l.b16 %v909
    %v1169 = vunpack.c.h.b16 %v909
    %v1170 = vunpack.c.l.b16 %v910
    %v1171 = vunpack.c.h.b16 %v910
    %v1172 = vunpack.c.l.b16 %v911
    %v1173 = vunpack.c.h.b16 %v911
    %v1174 = vunpack.c.l.b16 %v912
    %v1175 = vunpack.c.h.b16 %v912
    %v1176 = vunpack.c.l.b16 %v913
    %v1177 = vunpack.c.h.b16 %v913
    %v1178 = vunpack.c.l.b16 %v914
    %v1179 = vunpack.c.h.b16 %v914
    %v1180 = vunpack.c.l.b16 %v915
    %v1181 = vunpack.c.h.b16 %v915
    %v1182 = vunpack.c.l.b16 %v916
    %v1183 = vunpack.c.h.b16 %v916
    %v1184 = vunpack.c.l.b16 %v917
    %v1185 = vunpack.c.h.b16 %v917
    %v1186 = vunpack.c.l.b16 %v918
    %v1187 = vunpack.c.h.b16 %v918
    %v1188 = vunpack.c.l.b16 %v919
    %v1189 = vunpack.c.h.b16 %v919
    %v1190 = vunpack.c.l.b16 %v920
    %v1191 = vunpack.c.h.b16 %v920
    %v1192 = vunpack.c.l.b16 %v921
    %v1193 = vunpack.c.h.b16 %v921
    %v1194 = vunpack.c.l.b16 %v922
    %v1195 = vunpack.c.h.b16 %v922
    %v1196 = vunpack.c.l.b16 %v923
    %v1197 = vunpack.c.h.b16 %v923
    %v1198 = vunpack.c.l.b16 %v924
    %v1199 = vunpack.c.h.b16 %v924
    %v1200 = vunpack.c.l.b16 %v925
    %v1201 = vunpack.c.h.b16 %v925
    %v1202 = vunpack.c.l.b16 %v926
    %v1203 = vunpack.c.h.b16 %v926
    %v1204 = vunpack.c.l.b16 %v927
    %v1205 = vunpack.c.h.b16 %v927
    %v1206 = vunpack.c.l.b16 %v928
    %v1207 = vunpack.c.h.b16 %v928
    %v1208 = vunpack.c.l.b16 %v929
    %v1209 = vunpack.c.h.b16 %v929
    %v1210 = vunpack.c.l.b16 %v930
    %v1211 = vunpack.c.h.b16 %v930
    %v1212 = vunpack.c.l.b16 %v931
    %v1213 = vunpack.c.h.b16 %v931
    %v1214 = vunpack.c.l.b16 %v932
    %v1215 = vunpack.c.h.b16 %v932
    %v1216 = vunpack.c.l.b16 %v933
    %v1217 = vunpack.c.h.b16 %v933
    %v1218 = vunpack.c.l.b16 %v934
    %v1219 = vunpack.c.h.b16 %v934
    %v1220 = vunpack.c.l.b16 %v935
    %v1221 = vunpack.c.h.b16 %v935
    %v1222 = vunpack.c.l.b16 %v936
    %v1223 = vunpack.c.h.b16 %v936
    %v1224 = vunpack.c.l.b16 %v937
    %v1225 = vunpack.c.h.b16 %v937
    %v1226 = vunpack.c.l.b16 %v938
    %v1227 = vunpack.c.h.b16 %v938
    %v1228 = vunpack.c.l.b16 %v939
    %v1229 = vunpack.c.h.b16 %v939
    %v1230 = vunpack.c.l.b16 %v940
    %v1231 = vunpack.c.h.b16 %v940
    %v1232 = vunpack.c.l.b16 %v941
    %v1233 = vunpack.c.h.b16 %v941
    %v1234 = vunpack.c.l.b16 %v942
    %v1235 = vunpack.c.h.b16 %v942
    %v1236 = vunpack.c.l.b16 %v943
    %v1237 = vunpack.c.h.b16 %v943
    %v1238 = vunpack.c.l.b16 %v944
    %v1239 = vunpack.c.h.b16 %v944
    %v1240 = vunpack.c.l.b16 %v945
    %v1241 = vunpack.c.h.b16 %v945
    %v1242 = vunpack.c.l.b16 %v946
    %v1243 = vunpack.c.h.b16 %v946
    %v1244 = vunpack.c.l.b16 %v947
    %v1245 = vunpack.c.h.b16 %v947
    %v1246 = vunpack.c.l.b16 %v948
    %v1247 = vunpack.c.h.b16 %v948
    %v1248 = vunpack.c.l.b16 %v949
    %v1249 = vunpack.c.h.b16 %v949
    %v1250 = vunpack.c.l.b16 %v950
    %v1251 = vunpack.c.h.b16 %v950
    %v1252 = vunpack.c.l.b16 %v951
    %v1253 = vunpack.c.h.b16 %v951
    %v1254 = vunpack.c.l.b16 %v952
    %v1255 = vunpack.c.h.b16 %v952
    %v1256 = vunpack.c.l.b16 %v953
    %v1257 = vunpack.c.h.b16 %v953
    %v1258 = vunpack.c.l.b16 %v954
    %v1259 = vunpack.c.h.b16 %v954
    %v1260 = vunpack.c.l.b16 %v955
    %v1261 = vunpack.c.h.b16 %v955
    %v1262 = vunpack.c.l.b16 %v956
    %v1263 = vunpack.c.h.b16 %v956
    %v1264 = vunpack.c.l.b16 %v957
    %v1265 = vunpack.c.h.b16 %v957
    %v1266 = vunpack.c.l.b16 %v958
    %v1267 = vunpack.c.h.b16 %v958
    %v1268 = vunpack.c.l.b16 %v959
    %v1269 = vunpack.c.h.b16 %v959
    %v1270 = vunpack.c.l.b16 %v960
    %v1271 = vunpack.c.h.b16 %v960
    %v1272 = vunpack.c.l.b16 %v961
    %v1273 = vunpack.c.h.b16 %v961
    %v1274 = vunpack.c.l.b16 %v962
    %v1275 = vunpack.c.h.b16 %v962
    %v1276 = vunpack.c.l.b16 %v963
    %v1277 = vunpack.c.h.b16 %v963
    %v1278 = vunpack.c.l.b16 %v964
    %v1279 = vunpack.c.h.b16 %v964
    %v1280 = vunpack.c.l.b16 %v965
    %v1281 = vunpack.c.h.b16 %v965
    %v1282 = vunpack.c.l.b16 %v966
    %v1283 = vunpack.c.h.b16 %v966
    %v1284 = vunpack.c.l.b16 %v967
    %v1285 = vunpack.c.h.b16 %v967
    %v1286 = vunpack.c.l.b16 %v968
    %v1287 = vunpack.c.h.b16 %v968
    %v1288 = vunpack.c.l.b16 %v969
    %v1289 = vunpack.c.h.b16 %v969
    %v1290 = vunpack.c.l.b16 %v970
    %v1291 = vunpack.c.h.b16 %v970
    %v1292 = vunpack.c.l.b16 %v971
    %v1293 = vunpack.c.h.b16 %v971
    %v1294 = vunpack.c.l.b16 %v972
    %v1295 = vunpack.c.h.b16 %v972
    %v1296 = vunpack.c.l.b16 %v973
    %v1297 = vunpack.c.h.b16 %v973
    %v1298 = vunpack.c.l.b16 %v974
    %v1299 = vunpack.c.h.b16 %v974
    %v1300 = vunpack.c.l.b16 %v975
    %v1301 = vunpack.c.h.b16 %v975
    %v1302 = vunpack.c.l.b16 %v976
    %v1303 = vunpack.c.h.b16 %v976
    %v1304 = vunpack.c.l.b16 %v977
    %v1305 = vunpack.c.h.b16 %v977
    %v1306 = vunpack.c.l.b16 %v978
    %v1307 = vunpack.c.h.b16 %v978
    %v1308 = vunpack.c.l.b16 %v979
    %v1309 = vunpack.c.h.b16 %v979
    %v1310 = vunpack.c.l.b16 %v980
    %v1311 = vunpack.c.h.b16 %v980
    %v1312 = vunpack.c.l.b16 %v981
    %v1313 = vunpack.c.h.b16 %v981
    %v1314 = vunpack.c.l.b16 %v982
    %v1315 = vunpack.c.h.b16 %v982
    %v1316 = vunpack.c.l.b16 %v983
    %v1317 = vunpack.c.h.b16 %v983
    %v1318 = vunpack.c.l.b16 %v984
    %v1319 = vunpack.c.h.b16 %v984
    %v1320 = vunpack.c.l.b16 %v985
    %v1321 = vunpack.c.h.b16 %v985
    %v1322 = vunpack.c.l.b16 %v986
    %v1323 = vunpack.c.h.b16 %v986
    %v1324 = vunpack.c.l.b16 %v987
    %v1325 = vunpack.c.h.b16 %v987
    %v1326 = vunpack.c.l.b16 %v988
    %v1327 = vunpack.c.h.b16 %v988
    %v1328 = vunpack.c.l.b16 %v989
    %v1329 = vunpack.c.h.b16 %v989
    %v1330 = vunpack.c.l.b16 %v990
    %v1331 = vunpack.c.h.b16 %v990
    %v1332 = vunpack.c.l.b16 %v991
    %v1333 = vunpack.c.h.b16 %v991
    %v1334 = vunpack.c.l.b16 %v992
    %v1335 = vunpack.c.h.b16 %v992
    %v1336 = vunpack.c.l.b16 %v993
    %v1337 = vunpack.c.h.b16 %v993
    %v1338 = vunpack.c.l.b16 %v994
    %v1339 = vunpack.c.h.b16 %v994
    %v1340 = vunpack.c.l.b16 %v995
    %v1341 = vunpack.c.h.b16 %v995
    %v1342 = vunpack.c.l.b16 %v996
    %v1343 = vunpack.c.h.b16 %v996
    %v1344 = vunpack.c.l.b16 %v997
    %v1345 = vunpack.c.h.b16 %v997
    %v1346 = vunpack.c.l.b16 %v998
    %v1347 = vunpack.c.h.b16 %v998
    %v1348 = vunpack.c.l.b16 %v999
    %v1349 = vunpack.c.h.b16 %v999
    %v1350 = vunpack.c.l.b16 %v1000
    %v1351 = vunpack.c.h.b16 %v1000
    %v1352 = vunpack.c.l.b16 %v1001
    %v1353 = vunpack.c.h.b16 %v1001
    %v1354 = vunpack.c.l.b16 %v1002
    %v1355 = vunpack.c.h.b16 %v1002
    %v1356 = vunpack.c.l.b16 %v1003
    %v1357 = vunpack.c.h.b16 %v1003
    %v1358 = vunpack.c.l.b16 %v1004
    %v1359 = vunpack.c.h.b16 %v1004
    %v1360 = vunpack.c.l.b16 %v1005
    %v1361 = vunpack.c.h.b16 %v1005
    %v1362 = vunpack.c.l.b16 %v1006
    %v1363 = vunpack.c.h.b16 %v1006
    %v1364 = vunpack.c.l.b16 %v1007
    %v1365 = vunpack.c.h.b16 %v1007
    %v1366 = vunpack.c.l.b16 %v1008
    %v1367 = vunpack.c.h.b16 %v1008
    %v1368 = vunpack.c.l.b16 %v1009
    %v1369 = vunpack.c.h.b16 %v1009
    %v1370 = vunpack.c.l.b16 %v1010
    %v1371 = vunpack.c.h.b16 %v1010
    %v1372 = vunpack.c.l.b16 %v1011
    %v1373 = vunpack.c.h.b16 %v1011
    %v1374 = vunpack.c.l.b16 %v1012
    %v1375 = vunpack.c.h.b16 %v1012
    %v1376 = vunpack.c.l.b16 %v1013
    %v1377 = vunpack.c.h.b16 %v1013
    %v1378 = vunpack.c.l.b16 %v1014
    %v1379 = vunpack.c.h.b16 %v1014
    %v1380 = vunpack.c.l.b16 %v1015
    %v1381 = vunpack.c.h.b16 %v1015
    %v1382 = vunpack.c.l.b16 %v1016
    %v1383 = vunpack.c.h.b16 %v1016
    %v1384 = vunpack.c.l.b16 %v1017
    %v1385 = vunpack.c.h.b16 %v1017
    %v1386 = vunpack.c.l.b16 %v1018
    %v1387 = vunpack.c.h.b16 %v1018
    %v1388 = vunpack.c.l.b16 %v1019
    %v1389 = vunpack.c.h.b16 %v1019
    %v1390 = vunpack.c.l.b16 %v1020
    %v1391 = vunpack.c.h.b16 %v1020
    %v1392 = vunpack.c.l.b16 %v1021
    %v1393 = vunpack.c.h.b16 %v1021
    %v1394 = vunpack.c.l.b16 %v1022
    %v1395 = vunpack.c.h.b16 %v1022
    %v1396 = vunpack.c.l.b16 %v1023
    %v1397 = vunpack.c.h.b16 %v1023
    %v1398 = vunpack.c.l.b16 %v1024
    %v1399 = vunpack.c.h.b16 %v1024
    %v1400 = vunpack.c.l.b16 %v1025
    %v1401 = vunpack.c.h.b16 %v1025
    %v1402 = vunpack.c.l.b16 %v1026
    %v1403 = vunpack.c.h.b16 %v1026
    %v1404 = vunpack.c.l.b16 %v1027
    %v1405 = vunpack.c.h.b16 %v1027
    %v1406 = vunpack.c.l.b16 %v1028
    %v1407 = vunpack.c.h.b16 %v1028
    %v1408 = vunpack.c.l.b16 %v1029
    %v1409 = vunpack.c.h.b16 %v1029
    %v1410 = vunpack.c.l.b16 %v1030
    %v1411 = vunpack.c.h.b16 %v1030
    %v1412 = vunpack.c.l.b16 %v1031
    %v1413 = vunpack.c.h.b16 %v1031
    %v1414 = vunpack.c.l.b16 %v1032
    %v1415 = vunpack.c.h.b16 %v1032
    %v1416 = vunpack.c.l.b16 %v1033
    %v1417 = vunpack.c.h.b16 %v1033
    %v1418 = vpack.c.b16 %v1290, %v1162
    %v1419 = vpack.c.b16 %v1291, %v1163
    %v1420 = vpack.c.b16 %v1292, %v1164
    %v1421 = vpack.c.b16 %v1293, %v1165
    %v1422 = vpack.c.b16 %v1294, %v1166
    %v1423 = vpack.c.b16 %v1295, %v1167
    %v1424 = vpack.c.b16 %v1296, %v1168
    %v1425 = vpack.c.b16 %v1297, %v1169
    %v1426 = vpack.c.b16 %v1298, %v1170
    %v1427 = vpack.c.b16 %v1299, %v1171
    %v1428 = vpack.c.b16 %v1300, %v1172
    %v1429 = vpack.c.b16 %v1301, %v1173
    %v1430 = vpack.c.b16 %v1302, %v1174
    %v1431 = vpack.c.b16 %v1303, %v1175
    %v1432 = vpack.c.b16 %v1304, %v1176
    %v1433 = vpack.c.b16 %v1305, %v1177
    %v1434 = vpack.c.b16 %v1306, %v1178
    %v1435 = vpack.c.b16 %v1307, %v1179
    %v1436 = vpack.c.b16 %v1308, %v1180
    %v1437 = vpack.c.b16 %v1309, %v1181
    %v1438 = vpack.c.b16 %v1310, %v1182
    %v1439 = vpack.c.b16 %v1311, %v1183
    %v1440 = vpack.c.b16 %v1312, %v1184
    %v1441 = vpack.c.b16 %v1313, %v1185
    %v1442 = vpack.c.b16 %v1314, %v1186
    %v1443 = vpack.c.b16 %v1315, %v1187
    %v1444 = vpack.c.b16 %v1316, %v1188
    %v1445 = vpack.c.b16 %v1317, %v1189
    %v1446 = vpack.c.b16 %v1318, %v1190
    %v1447 = vpack.c.b16 %v1319, %v1191
    %v1448 = vpack.c.b16 %v1320, %v1192
    %v1449 = vpack.c.b16 %v1321, %v1193
    %v1450 = vpack.c.b16 %v1322, %v1194
    %v1451 = vpack.c.b16 %v1323, %v1195
    %v1452 = vpack.c.b16 %v1324, %v1196
    %v1453 = vpack.c.b16 %v1325, %v1197
    %v1454 = vpack.c.b16 %v1326, %v1198
    %v1455 = vpack.c.b16 %v1327, %v1199
    %v1456 = vpack.c.b16 %v1328, %v1200
    %v1457 = vpack.c.b16 %v1329, %v1201
    %v1458 = vpack.c.b16 %v1330, %v1202
    %v1459 = vpack.c.b16 %v1331, %v1203
    %v1460 = vpack.c.b16 %v1332, %v1204
    %v1461 = vpack.c.b16 %v1333, %v1205
    %v1462 = vpack.c.b16 %v1334, %v1206
    %v1463 = vpack.c.b16 %v1335, %v1207
    %v1464 = vpack.c.b16 %v1336, %v1208
    %v1465 = vpack.c.b16 %v1337, %v1209
    %v1466 = vpack.c.b16 %v1338, %v1210
    %v1467 = vpack.c.b16 %v1339, %v1211
    %v1468 = vpack.c.b16 %v1340, %v1212
    %v1469 = vpack.c.b16 %v1341, %v1213
    %v1470 = vpack.c.b16 %v1342, %v1214
    %v1471 = vpack.c.b16 %v1343, %v1215
    %v1472 = vpack.c.b16 %v1344, %v1216
    %v1473 = vpack.c.b16 %v1345, %v1217
    %v1474 = vpack.c.b16 %v1346, %v1218
    %v1475 = vpack.c.b16 %v1347, %v1219
    %v1476 = vpack.c.b16 %v1348, %v1220
    %v1477 = vpack.c.b16 %v1349, %v1221
    %v1478 = vpack.c.b16 %v1350, %v1222
    %v1479 = vpack.c.b16 %v1351, %v1223
    %v1480 = vpack.c.b16 %v1352, %v1224
    %v1481 = vpack.c.b16 %v1353, %v1225
    %v1482 = vpack.c.b16 %v1354, %v1226
    %v1483 = vpack.c.b16 %v1355, %v1227
    %v1484 = vpack.c.b16 %v1356, %v1228
    %v1485 = vpack.c.b16 %v1357, %v1229
    %v1486 = vpack.c.b16 %v1358, %v1230
    %v1487 = vpack.c.b16 %v1359, %v1231
    %v1488 = vpack.c.b16 %v1360, %v1232
    %v1489 = vpack.c.b16 %v1361, %v1233
    %v1490 = vpack.c.b16 %v1362, %v1234
    %v1491 = vpack.c.b16 %v1363, %v1235
    %v1492 = vpack.c.b16 %v1364, %v1236
    %v1493 = vpack.c.b16 %v1365, %v1237
    %v1494 = vpack.c.b16 %v1366, %v1238
    %v1495 = vpack.c.b16 %v1367, %v1239
    %v1496 = vpack.c.b16 %v1368, %v1240
    %v1497 = vpack.c.b16 %v1369, %v1241
    %v1498 = vpack.c.b16 %v1370, %v1242
    %v1499 = vpack.c.b16 %v1371, %v1243
    %v1500 = vpack.c.b16 %v1372, %v1244
    %v1501 = vpack.c.b16 %v1373, %v1245
    %v1502 = vpack.c.b16 %v1374, %v1246
    %v1503 = vpack.c.b16 %v1375, %v1247
    %v1504 = vpack.c.b16 %v1376, %v1248
    %v1505 = vpack.c.b16 %v1377, %v1249
    %v1506 = vpack.c.b16 %v1378, %v1250
    %v1507 = vpack.c.b16 %v1379, %v1251
    %v1508 = vpack.c.b16 %v1380, %v1252
    %v1509 = vpack.c.b16 %v1381, %v1253
    %v1510 = vpack.c.b16 %v1382, %v1254
    %v1511 = vpack.c.b16 %v1383, %v1255
    %v1512 = vpack.c.b16 %v1384, %v1256
    %v1513 = vpack.c.b16 %v1385, %v1257
    %v1514 = vpack.c.b16 %v1386, %v1258
    %v1515 = vpack.c.b16 %v1387, %v1259
    %v1516 = vpack.c.b16 %v1388, %v1260
    %v1517 = vpack.c.b16 %v1389, %v1261
    %v1518 = vpack.c.b16 %v1390, %v1262
    %v1519 = vpack.c.b16 %v1391, %v1263
    %v1520 = vpack.c.b16 %v1392, %v1264
    %v1521 = vpack.c.b16 %v1393, %v1265
    %v1522 = vpack.c.b16 %v1394, %v1266
    %v1523 = vpack.c.b16 %v1395, %v1267
    %v1524 = vpack.c.b16 %v1396, %v1268
    %v1525 = vpack.c.b16 %v1397, %v1269
    %v1526 = vpack.c.b16 %v1398, %v1270
    %v1527 = vpack.c.b16 %v1399, %v1271
    %v1528 = vpack.c.b16 %v1400, %v1272
    %v1529 = vpack.c.b16 %v1401, %v1273
    %v1530 = vpack.c.b16 %v1402, %v1274
    %v1531 = vpack.c.b16 %v1403, %v1275
    %v1532 = vpack.c.b16 %v1404, %v1276
    %v1533 = vpack.c.b16 %v1405, %v1277
    %v1534 = vpack.c.b16 %v1406, %v1278
    %v1535 = vpack.c.b16 %v1407, %v1279
    %v1536 = vpack.c.b16 %v1408, %v1280
    %v1537 = vpack.c.b16 %v1409, %v1281
    %v1538 = vpack.c.b16 %v1410, %v1282
    %v1539 = vpack.c.b16 %v1411, %v1283
    %v1540 = vpack.c.b16 %v1412, %v1284
    %v1541 = vpack.c.b16 %v1413, %v1285
    %v1542 = vpack.c.b16 %v1414, %v1286
    %v1543 = vpack.c.b16 %v1415, %v1287
    %v1544 = vpack.c.b16 %v1416, %v1288
    %v1545 = vpack.c.b16 %v1417, %v1289
    %1674 = vmatprep.subr.bf16.mxu0 %v779
    %1675 = vmatpush1.bf16.xpose.msra.mxu0 %v778
    %1676 = vmatprep.subr.bf16.mxu0 0
    %1677 = vmatpush1.bf16.xpose.msra.mxu0 0
    %1678 = vmatprep.subr.bf16.mxu0 0
    %1679 = vmatpush1.bf16.xpose.msra.mxu0 0
    %1680 = vmatprep.subr.bf16.mxu0 0
    %1681 = vmatpush1.bf16.xpose.msra.mxu0 0
    %1682 = vmatprep.subr.bf16.mxu0 0
    %1683 = vmatpush1.bf16.xpose.msra.mxu0 0
    %1684 = vmatprep.subr.bf16.mxu0 0
    %1685 = vmatpush1.bf16.xpose.msra.mxu0 0
    %1686 = vmatprep.subr.bf16.mxu0 0
    %1687 = vmatpush1.bf16.xpose.msra.mxu0 0
    %1688 = vmatprep.subr.bf16.mxu0 0
    %1689 = vmatpush1.bf16.xpose.msra.mxu0 0
    %1690 = vmatprep.subr.bf16.mxu0 0
    %1691 = vmatpush1.bf16.xpose.msra.mxu0 0
    %1692 = vmatprep.subr.bf16.mxu0 0
    %1693 = vmatpush1.bf16.xpose.msra.mxu0 0
    %1694 = vmatprep.subr.bf16.mxu0 0
    %1695 = vmatpush1.bf16.xpose.msra.mxu0 0
    %1696 = vmatprep.subr.bf16.mxu0 0
    %1697 = vmatpush1.bf16.xpose.msra.mxu0 0
    %1698 = vmatprep.subr.bf16.mxu0 0
    %1699 = vmatpush1.bf16.xpose.msra.mxu0 0
    %1700 = vmatprep.subr.bf16.mxu0 0
    %1701 = vmatpush1.bf16.xpose.msra.mxu0 0
    %1702 = vmatprep.subr.bf16.mxu0 0
    %1703 = vmatpush1.bf16.xpose.msra.mxu0 0
    %1704 = vmatprep.subr.bf16.mxu0 0
    %1705 = vmatpush1.bf16.xpose.msra.mxu0 0
    %1706 = vmatprep.mubr.bf16.mxu0 %v1419
    %1707 = vmatmul.mubr.bf16.gmra.mrb[0].mxu0 %v1418
    %v1708 = vpop.f32.mrb[0].mxu0
    %v1709 = vadd.f32 0.0, %v1708
    %v1710 = vpop.f32.mrb[0].mxu0
    %v1711 = vpop.f32.mrb[0].mxu0
    %v1712 = vadd.f32 0.0, %v1711
    %v1713 = vpop.f32.mrb[0].mxu0
    %1714 = vdwg.mxu0
    %1715 = vmatprep.subr.bf16.mxu0 %v781
    %1716 = vmatpush1.bf16.xpose.msra.mxu0 %v780
    %1717 = vmatprep.subr.bf16.mxu0 0
    %1718 = vmatpush1.bf16.xpose.msra.mxu0 0
    %1719 = vmatprep.subr.bf16.mxu0 0
    %1720 = vmatpush1.bf16.xpose.msra.mxu0 0
    %1721 = vmatprep.subr.bf16.mxu0 0
    %1722 = vmatpush1.bf16.xpose.msra.mxu0 0
    %1723 = vmatprep.subr.bf16.mxu0 0
    %1724 = vmatpush1.bf16.xpose.msra.mxu0 0
    %1725 = vmatprep.subr.bf16.mxu0 0
    %1726 = vmatpush1.bf16.xpose.msra.mxu0 0
    %1727 = vmatprep.subr.bf16.mxu0 0
    %1728 = vmatpush1.bf16.xpose.msra.mxu0 0
    %1729 = vmatprep.subr.bf16.mxu0 0
    %1730 = vmatpush1.bf16.xpose.msra.mxu0 0
    %1731 = vmatprep.subr.bf16.mxu0 0
    %1732 = vmatpush1.bf16.xpose.msra.mxu0 0
    %1733 = vmatprep.subr.bf16.mxu0 0
    %1734 = vmatpush1.bf16.xpose.msra.mxu0 0
    %1735 = vmatprep.subr.bf16.mxu0 0
    %1736 = vmatpush1.bf16.xpose.msra.mxu0 0
    %1737 = vmatprep.subr.bf16.mxu0 0
    %1738 = vmatpush1.bf16.xpose.msra.mxu0 0
    %1739 = vmatprep.subr.bf16.mxu0 0
    %1740 = vmatpush1.bf16.xpose.msra.mxu0 0
    %1741 = vmatprep.subr.bf16.mxu0 0
    %1742 = vmatpush1.bf16.xpose.msra.mxu0 0
    %1743 = vmatprep.subr.bf16.mxu0 0
    %1744 = vmatpush1.bf16.xpose.msra.mxu0 0
    %1745 = vmatprep.subr.bf16.mxu0 0
    %1746 = vmatpush1.bf16.xpose.msra.mxu0 0
    %1747 = vmatprep.mubr.bf16.mxu0 %v1421
    %1748 = vmatmul.mubr.bf16.gmra.mrb[0].mxu0 %v1420
    %v1749 = vpop.f32.mrb[0].mxu0
    %v1750 = vadd.f32 %v1709, %v1749
    %v1751 = vpop.f32.mrb[0].mxu0
    %v1752 = vpop.f32.mrb[0].mxu0
    %v1753 = vadd.f32 %v1712, %v1752
    %v1754 = vpop.f32.mrb[0].mxu0
    %1755 = vdwg.mxu0
    %1756 = vmatprep.subr.bf16.mxu0 %v783
    %1757 = vmatpush1.bf16.xpose.msra.mxu0 %v782
    %1758 = vmatprep.subr.bf16.mxu0 0
    %1759 = vmatpush1.bf16.xpose.msra.mxu0 0
    %1760 = vmatprep.subr.bf16.mxu0 0
    %1761 = vmatpush1.bf16.xpose.msra.mxu0 0
    %1762 = vmatprep.subr.bf16.mxu0 0
    %1763 = vmatpush1.bf16.xpose.msra.mxu0 0
    %1764 = vmatprep.subr.bf16.mxu0 0
    %1765 = vmatpush1.bf16.xpose.msra.mxu0 0
    %1766 = vmatprep.subr.bf16.mxu0 0
    %1767 = vmatpush1.bf16.xpose.msra.mxu0 0
    %1768 = vmatprep.subr.bf16.mxu0 0
    %1769 = vmatpush1.bf16.xpose.msra.mxu0 0
    %1770 = vmatprep.subr.bf16.mxu0 0
    %1771 = vmatpush1.bf16.xpose.msra.mxu0 0
    %1772 = vmatprep.subr.bf16.mxu0 0
    %1773 = vmatpush1.bf16.xpose.msra.mxu0 0
    %1774 = vmatprep.subr.bf16.mxu0 0
    %1775 = vmatpush1.bf16.xpose.msra.mxu0 0
    %1776 = vmatprep.subr.bf16.mxu0 0
    %1777 = vmatpush1.bf16.xpose.msra.mxu0 0
    %1778 = vmatprep.subr.bf16.mxu0 0
    %1779 = vmatpush1.bf16.xpose.msra.mxu0 0
    %1780 = vmatprep.subr.bf16.mxu0 0
    %1781 = vmatpush1.bf16.xpose.msra.mxu0 0
    %1782 = vmatprep.subr.bf16.mxu0 0
    %1783 = vmatpush1.bf16.xpose.msra.mxu0 0
    %1784 = vmatprep.subr.bf16.mxu0 0
    %1785 = vmatpush1.bf16.xpose.msra.mxu0 0
    %1786 = vmatprep.subr.bf16.mxu0 0
    %1787 = vmatpush1.bf16.xpose.msra.mxu0 0
    %1788 = vmatprep.mubr.bf16.mxu0 %v1423
    %1789 = vmatmul.mubr.bf16.gmra.mrb[0].mxu0 %v1422
    %v1790 = vpop.f32.mrb[0].mxu0
    %v1791 = vadd.f32 %v1750, %v1790
    %v1792 = vpop.f32.mrb[0].mxu0
    %v1793 = vpop.f32.mrb[0].mxu0
    %v1794 = vadd.f32 %v1753, %v1793
    %v1795 = vpop.f32.mrb[0].mxu0
    %1796 = vdwg.mxu0
    %1797 = vmatprep.subr.bf16.mxu0 %v785
    %1798 = vmatpush1.bf16.xpose.msra.mxu0 %v784
    %1799 = vmatprep.subr.bf16.mxu0 0
    %1800 = vmatpush1.bf16.xpose.msra.mxu0 0
    %1801 = vmatprep.subr.bf16.mxu0 0
    %1802 = vmatpush1.bf16.xpose.msra.mxu0 0
    %1803 = vmatprep.subr.bf16.mxu0 0
    %1804 = vmatpush1.bf16.xpose.msra.mxu0 0
    %1805 = vmatprep.subr.bf16.mxu0 0
    %1806 = vmatpush1.bf16.xpose.msra.mxu0 0
    %1807 = vmatprep.subr.bf16.mxu0 0
    %1808 = vmatpush1.bf16.xpose.msra.mxu0 0
    %1809 = vmatprep.subr.bf16.mxu0 0
    %1810 = vmatpush1.bf16.xpose.msra.mxu0 0
    %1811 = vmatprep.subr.bf16.mxu0 0
    %1812 = vmatpush1.bf16.xpose.msra.mxu0 0
    %1813 = vmatprep.subr.bf16.mxu0 0
    %1814 = vmatpush1.bf16.xpose.msra.mxu0 0
    %1815 = vmatprep.subr.bf16.mxu0 0
    %1816 = vmatpush1.bf16.xpose.msra.mxu0 0
    %1817 = vmatprep.subr.bf16.mxu0 0
    %1818 = vmatpush1.bf16.xpose.msra.mxu0 0
    %1819 = vmatprep.subr.bf16.mxu0 0
    %1820 = vmatpush1.bf16.xpose.msra.mxu0 0
    %1821 = vmatprep.subr.bf16.mxu0 0
    %1822 = vmatpush1.bf16.xpose.msra.mxu0 0
    %1823 = vmatprep.subr.bf16.mxu0 0
    %1824 = vmatpush1.bf16.xpose.msra.mxu0 0
    %1825 = vmatprep.subr.bf16.mxu0 0
    %1826 = vmatpush1.bf16.xpose.msra.mxu0 0
    %1827 = vmatprep.subr.bf16.mxu0 0
    %1828 = vmatpush1.bf16.xpose.msra.mxu0 0
    %1829 = vmatprep.mubr.bf16.mxu0 %v1425
    %1830 = vmatmul.mubr.bf16.gmra.mrb[0].mxu0 %v1424
    %v1831 = vpop.f32.mrb[0].mxu0
    %v1832 = vadd.f32 %v1791, %v1831
    %v1833 = vpop.f32.mrb[0].mxu0
    %v1834 = vpop.f32.mrb[0].mxu0
    %v1835 = vadd.f32 %v1794, %v1834
    %v1836 = vpop.f32.mrb[0].mxu0
    %1837 = vdwg.mxu0
    %1838 = vmatprep.subr.bf16.mxu0 %v787
    %1839 = vmatpush1.bf16.xpose.msra.mxu0 %v786
    %1840 = vmatprep.subr.bf16.mxu0 0
    %1841 = vmatpush1.bf16.xpose.msra.mxu0 0
    %1842 = vmatprep.subr.bf16.mxu0 0
    %1843 = vmatpush1.bf16.xpose.msra.mxu0 0
    %1844 = vmatprep.subr.bf16.mxu0 0
    %1845 = vmatpush1.bf16.xpose.msra.mxu0 0
    %1846 = vmatprep.subr.bf16.mxu0 0
    %1847 = vmatpush1.bf16.xpose.msra.mxu0 0
    %1848 = vmatprep.subr.bf16.mxu0 0
    %1849 = vmatpush1.bf16.xpose.msra.mxu0 0
    %1850 = vmatprep.subr.bf16.mxu0 0
    %1851 = vmatpush1.bf16.xpose.msra.mxu0 0
    %1852 = vmatprep.subr.bf16.mxu0 0
    %1853 = vmatpush1.bf16.xpose.msra.mxu0 0
    %1854 = vmatprep.subr.bf16.mxu0 0
    %1855 = vmatpush1.bf16.xpose.msra.mxu0 0
    %1856 = vmatprep.subr.bf16.mxu0 0
    %1857 = vmatpush1.bf16.xpose.msra.mxu0 0
    %1858 = vmatprep.subr.bf16.mxu0 0
    %1859 = vmatpush1.bf16.xpose.msra.mxu0 0
    %1860 = vmatprep.subr.bf16.mxu0 0
    %1861 = vmatpush1.bf16.xpose.msra.mxu0 0
    %1862 = vmatprep.subr.bf16.mxu0 0
    %1863 = vmatpush1.bf16.xpose.msra.mxu0 0
    %1864 = vmatprep.subr.bf16.mxu0 0
    %1865 = vmatpush1.bf16.xpose.msra.mxu0 0
    %1866 = vmatprep.subr.bf16.mxu0 0
    %1867 = vmatpush1.bf16.xpose.msra.mxu0 0
    %1868 = vmatprep.subr.bf16.mxu0 0
    %1869 = vmatpush1.bf16.xpose.msra.mxu0 0
    %1870 = vmatprep.mubr.bf16.mxu0 %v1427
    %1871 = vmatmul.mubr.bf16.gmra.mrb[0].mxu0 %v1426
    %v1872 = vpop.f32.mrb[0].mxu0
    %v1873 = vadd.f32 %v1832, %v1872
    %v1874 = vpop.f32.mrb[0].mxu0
    %v1875 = vpop.f32.mrb[0].mxu0
    %v1876 = vadd.f32 %v1835, %v1875
    %v1877 = vpop.f32.mrb[0].mxu0
    %1878 = vdwg.mxu0
    %1879 = vmatprep.subr.bf16.mxu0 %v789
    %1880 = vmatpush1.bf16.xpose.msra.mxu0 %v788
    %1881 = vmatprep.subr.bf16.mxu0 0
    %1882 = vmatpush1.bf16.xpose.msra.mxu0 0
    %1883 = vmatprep.subr.bf16.mxu0 0
    %1884 = vmatpush1.bf16.xpose.msra.mxu0 0
    %1885 = vmatprep.subr.bf16.mxu0 0
    %1886 = vmatpush1.bf16.xpose.msra.mxu0 0
    %1887 = vmatprep.subr.bf16.mxu0 0
    %1888 = vmatpush1.bf16.xpose.msra.mxu0 0
    %1889 = vmatprep.subr.bf16.mxu0 0
    %1890 = vmatpush1.bf16.xpose.msra.mxu0 0
    %1891 = vmatprep.subr.bf16.mxu0 0
    %1892 = vmatpush1.bf16.xpose.msra.mxu0 0
    %1893 = vmatprep.subr.bf16.mxu0 0
    %1894 = vmatpush1.bf16.xpose.msra.mxu0 0
    %1895 = vmatprep.subr.bf16.mxu0 0
    %1896 = vmatpush1.bf16.xpose.msra.mxu0 0
    %1897 = vmatprep.subr.bf16.mxu0 0
    %1898 = vmatpush1.bf16.xpose.msra.mxu0 0
    %1899 = vmatprep.subr.bf16.mxu0 0
    %1900 = vmatpush1.bf16.xpose.msra.mxu0 0
    %1901 = vmatprep.subr.bf16.mxu0 0
    %1902 = vmatpush1.bf16.xpose.msra.mxu0 0
    %1903 = vmatprep.subr.bf16.mxu0 0
    %1904 = vmatpush1.bf16.xpose.msra.mxu0 0
    %1905 = vmatprep.subr.bf16.mxu0 0
    %1906 = vmatpush1.bf16.xpose.msra.mxu0 0
    %1907 = vmatprep.subr.bf16.mxu0 0
    %1908 = vmatpush1.bf16.xpose.msra.mxu0 0
    %1909 = vmatprep.subr.bf16.mxu0 0
    %1910 = vmatpush1.bf16.xpose.msra.mxu0 0
    %1911 = vmatprep.mubr.bf16.mxu0 %v1429
    %1912 = vmatmul.mubr.bf16.gmra.mrb[0].mxu0 %v1428
    %v1913 = vpop.f32.mrb[0].mxu0
    %v1914 = vadd.f32 %v1873, %v1913
    %v1915 = vpop.f32.mrb[0].mxu0
    %v1916 = vpop.f32.mrb[0].mxu0
    %v1917 = vadd.f32 %v1876, %v1916
    %v1918 = vpop.f32.mrb[0].mxu0
    %1919 = vdwg.mxu0
    %1920 = vmatprep.subr.bf16.mxu0 %v791
    %1921 = vmatpush1.bf16.xpose.msra.mxu0 %v790
    %1922 = vmatprep.subr.bf16.mxu0 0
    %1923 = vmatpush1.bf16.xpose.msra.mxu0 0
    %1924 = vmatprep.subr.bf16.mxu0 0
    %1925 = vmatpush1.bf16.xpose.msra.mxu0 0
    %1926 = vmatprep.subr.bf16.mxu0 0
    %1927 = vmatpush1.bf16.xpose.msra.mxu0 0
    %1928 = vmatprep.subr.bf16.mxu0 0
    %1929 = vmatpush1.bf16.xpose.msra.mxu0 0
    %1930 = vmatprep.subr.bf16.mxu0 0
    %1931 = vmatpush1.bf16.xpose.msra.mxu0 0
    %1932 = vmatprep.subr.bf16.mxu0 0
    %1933 = vmatpush1.bf16.xpose.msra.mxu0 0
    %1934 = vmatprep.subr.bf16.mxu0 0
    %1935 = vmatpush1.bf16.xpose.msra.mxu0 0
    %1936 = vmatprep.subr.bf16.mxu0 0
    %1937 = vmatpush1.bf16.xpose.msra.mxu0 0
    %1938 = vmatprep.subr.bf16.mxu0 0
    %1939 = vmatpush1.bf16.xpose.msra.mxu0 0
    %1940 = vmatprep.subr.bf16.mxu0 0
    %1941 = vmatpush1.bf16.xpose.msra.mxu0 0
    %1942 = vmatprep.subr.bf16.mxu0 0
    %1943 = vmatpush1.bf16.xpose.msra.mxu0 0
    %1944 = vmatprep.subr.bf16.mxu0 0
    %1945 = vmatpush1.bf16.xpose.msra.mxu0 0
    %1946 = vmatprep.subr.bf16.mxu0 0
    %1947 = vmatpush1.bf16.xpose.msra.mxu0 0
    %1948 = vmatprep.subr.bf16.mxu0 0
    %1949 = vmatpush1.bf16.xpose.msra.mxu0 0
    %1950 = vmatprep.subr.bf16.mxu0 0
    %1951 = vmatpush1.bf16.xpose.msra.mxu0 0
    %1952 = vmatprep.mubr.bf16.mxu0 %v1431
    %1953 = vmatmul.mubr.bf16.gmra.mrb[0].mxu0 %v1430
    %v1954 = vpop.f32.mrb[0].mxu0
    %v1955 = vadd.f32 %v1914, %v1954
    %v1956 = vpop.f32.mrb[0].mxu0
    %v1957 = vpop.f32.mrb[0].mxu0
    %v1958 = vadd.f32 %v1917, %v1957
    %v1959 = vpop.f32.mrb[0].mxu0
    %1960 = vdwg.mxu0
    %1961 = vmatprep.subr.bf16.mxu0 %v793
    %1962 = vmatpush1.bf16.xpose.msra.mxu0 %v792
    %1963 = vmatprep.subr.bf16.mxu0 0
    %1964 = vmatpush1.bf16.xpose.msra.mxu0 0
    %1965 = vmatprep.subr.bf16.mxu0 0
    %1966 = vmatpush1.bf16.xpose.msra.mxu0 0
    %1967 = vmatprep.subr.bf16.mxu0 0
    %1968 = vmatpush1.bf16.xpose.msra.mxu0 0
    %1969 = vmatprep.subr.bf16.mxu0 0
    %1970 = vmatpush1.bf16.xpose.msra.mxu0 0
    %1971 = vmatprep.subr.bf16.mxu0 0
    %1972 = vmatpush1.bf16.xpose.msra.mxu0 0
    %1973 = vmatprep.subr.bf16.mxu0 0
    %1974 = vmatpush1.bf16.xpose.msra.mxu0 0
    %1975 = vmatprep.subr.bf16.mxu0 0
    %1976 = vmatpush1.bf16.xpose.msra.mxu0 0
    %1977 = vmatprep.subr.bf16.mxu0 0
    %1978 = vmatpush1.bf16.xpose.msra.mxu0 0
    %1979 = vmatprep.subr.bf16.mxu0 0
    %1980 = vmatpush1.bf16.xpose.msra.mxu0 0
    %1981 = vmatprep.subr.bf16.mxu0 0
    %1982 = vmatpush1.bf16.xpose.msra.mxu0 0
    %1983 = vmatprep.subr.bf16.mxu0 0
    %1984 = vmatpush1.bf16.xpose.msra.mxu0 0
    %1985 = vmatprep.subr.bf16.mxu0 0
    %1986 = vmatpush1.bf16.xpose.msra.mxu0 0
    %1987 = vmatprep.subr.bf16.mxu0 0
    %1988 = vmatpush1.bf16.xpose.msra.mxu0 0
    %1989 = vmatprep.subr.bf16.mxu0 0
    %1990 = vmatpush1.bf16.xpose.msra.mxu0 0
    %1991 = vmatprep.subr.bf16.mxu0 0
    %1992 = vmatpush1.bf16.xpose.msra.mxu0 0
    %1993 = vmatprep.mubr.bf16.mxu0 %v1433
    %1994 = vmatmul.mubr.bf16.gmra.mrb[0].mxu0 %v1432
    %v1995 = vpop.f32.mrb[0].mxu0
    %v1996 = vadd.f32 %v1955, %v1995
    %v1997 = vpop.f32.mrb[0].mxu0
    %v1998 = vpop.f32.mrb[0].mxu0
    %v1999 = vadd.f32 %v1958, %v1998
    %v2000 = vpop.f32.mrb[0].mxu0
    %2001 = vdwg.mxu0
    %2002 = vmatprep.subr.bf16.mxu0 %v795
    %2003 = vmatpush1.bf16.xpose.msra.mxu0 %v794
    %2004 = vmatprep.subr.bf16.mxu0 0
    %2005 = vmatpush1.bf16.xpose.msra.mxu0 0
    %2006 = vmatprep.subr.bf16.mxu0 0
    %2007 = vmatpush1.bf16.xpose.msra.mxu0 0
    %2008 = vmatprep.subr.bf16.mxu0 0
    %2009 = vmatpush1.bf16.xpose.msra.mxu0 0
    %2010 = vmatprep.subr.bf16.mxu0 0
    %2011 = vmatpush1.bf16.xpose.msra.mxu0 0
    %2012 = vmatprep.subr.bf16.mxu0 0
    %2013 = vmatpush1.bf16.xpose.msra.mxu0 0
    %2014 = vmatprep.subr.bf16.mxu0 0
    %2015 = vmatpush1.bf16.xpose.msra.mxu0 0
    %2016 = vmatprep.subr.bf16.mxu0 0
    %2017 = vmatpush1.bf16.xpose.msra.mxu0 0
    %2018 = vmatprep.subr.bf16.mxu0 0
    %2019 = vmatpush1.bf16.xpose.msra.mxu0 0
    %2020 = vmatprep.subr.bf16.mxu0 0
    %2021 = vmatpush1.bf16.xpose.msra.mxu0 0
    %2022 = vmatprep.subr.bf16.mxu0 0
    %2023 = vmatpush1.bf16.xpose.msra.mxu0 0
    %2024 = vmatprep.subr.bf16.mxu0 0
    %2025 = vmatpush1.bf16.xpose.msra.mxu0 0
    %2026 = vmatprep.subr.bf16.mxu0 0
    %2027 = vmatpush1.bf16.xpose.msra.mxu0 0
    %2028 = vmatprep.subr.bf16.mxu0 0
    %2029 = vmatpush1.bf16.xpose.msra.mxu0 0
    %2030 = vmatprep.subr.bf16.mxu0 0
    %2031 = vmatpush1.bf16.xpose.msra.mxu0 0
    %2032 = vmatprep.subr.bf16.mxu0 0
    %2033 = vmatpush1.bf16.xpose.msra.mxu0 0
    %2034 = vmatprep.mubr.bf16.mxu0 %v1435
    %2035 = vmatmul.mubr.bf16.gmra.mrb[0].mxu0 %v1434
    %v2036 = vpop.f32.mrb[0].mxu0
    %v2037 = vadd.f32 %v1996, %v2036
    %v2038 = vpop.f32.mrb[0].mxu0
    %v2039 = vpop.f32.mrb[0].mxu0
    %v2040 = vadd.f32 %v1999, %v2039
    %v2041 = vpop.f32.mrb[0].mxu0
    %2042 = vdwg.mxu0
    %2043 = vmatprep.subr.bf16.mxu0 %v797
    %2044 = vmatpush1.bf16.xpose.msra.mxu0 %v796
    %2045 = vmatprep.subr.bf16.mxu0 0
    %2046 = vmatpush1.bf16.xpose.msra.mxu0 0
    %2047 = vmatprep.subr.bf16.mxu0 0
    %2048 = vmatpush1.bf16.xpose.msra.mxu0 0
    %2049 = vmatprep.subr.bf16.mxu0 0
    %2050 = vmatpush1.bf16.xpose.msra.mxu0 0
    %2051 = vmatprep.subr.bf16.mxu0 0
    %2052 = vmatpush1.bf16.xpose.msra.mxu0 0
    %2053 = vmatprep.subr.bf16.mxu0 0
    %2054 = vmatpush1.bf16.xpose.msra.mxu0 0
    %2055 = vmatprep.subr.bf16.mxu0 0
    %2056 = vmatpush1.bf16.xpose.msra.mxu0 0
    %2057 = vmatprep.subr.bf16.mxu0 0
    %2058 = vmatpush1.bf16.xpose.msra.mxu0 0
    %2059 = vmatprep.subr.bf16.mxu0 0
    %2060 = vmatpush1.bf16.xpose.msra.mxu0 0
    %2061 = vmatprep.subr.bf16.mxu0 0
    %2062 = vmatpush1.bf16.xpose.msra.mxu0 0
    %2063 = vmatprep.subr.bf16.mxu0 0
    %2064 = vmatpush1.bf16.xpose.msra.mxu0 0
    %2065 = vmatprep.subr.bf16.mxu0 0
    %2066 = vmatpush1.bf16.xpose.msra.mxu0 0
    %2067 = vmatprep.subr.bf16.mxu0 0
    %2068 = vmatpush1.bf16.xpose.msra.mxu0 0
    %2069 = vmatprep.subr.bf16.mxu0 0
    %2070 = vmatpush1.bf16.xpose.msra.mxu0 0
    %2071 = vmatprep.subr.bf16.mxu0 0
    %2072 = vmatpush1.bf16.xpose.msra.mxu0 0
    %2073 = vmatprep.subr.bf16.mxu0 0
    %2074 = vmatpush1.bf16.xpose.msra.mxu0 0
    %2075 = vmatprep.mubr.bf16.mxu0 %v1437
    %2076 = vmatmul.mubr.bf16.gmra.mrb[0].mxu0 %v1436
    %v2077 = vpop.f32.mrb[0].mxu0
    %v2078 = vadd.f32 %v2037, %v2077
    %v2079 = vpop.f32.mrb[0].mxu0
    %v2080 = vpop.f32.mrb[0].mxu0
    %v2081 = vadd.f32 %v2040, %v2080
    %v2082 = vpop.f32.mrb[0].mxu0
    %2083 = vdwg.mxu0
    %2084 = vmatprep.subr.bf16.mxu0 %v799
    %2085 = vmatpush1.bf16.xpose.msra.mxu0 %v798
    %2086 = vmatprep.subr.bf16.mxu0 0
    %2087 = vmatpush1.bf16.xpose.msra.mxu0 0
    %2088 = vmatprep.subr.bf16.mxu0 0
    %2089 = vmatpush1.bf16.xpose.msra.mxu0 0
    %2090 = vmatprep.subr.bf16.mxu0 0
    %2091 = vmatpush1.bf16.xpose.msra.mxu0 0
    %2092 = vmatprep.subr.bf16.mxu0 0
    %2093 = vmatpush1.bf16.xpose.msra.mxu0 0
    %2094 = vmatprep.subr.bf16.mxu0 0
    %2095 = vmatpush1.bf16.xpose.msra.mxu0 0
    %2096 = vmatprep.subr.bf16.mxu0 0
    %2097 = vmatpush1.bf16.xpose.msra.mxu0 0
    %2098 = vmatprep.subr.bf16.mxu0 0
    %2099 = vmatpush1.bf16.xpose.msra.mxu0 0
    %2100 = vmatprep.subr.bf16.mxu0 0
    %2101 = vmatpush1.bf16.xpose.msra.mxu0 0
    %2102 = vmatprep.subr.bf16.mxu0 0
    %2103 = vmatpush1.bf16.xpose.msra.mxu0 0
    %2104 = vmatprep.subr.bf16.mxu0 0
    %2105 = vmatpush1.bf16.xpose.msra.mxu0 0
    %2106 = vmatprep.subr.bf16.mxu0 0
    %2107 = vmatpush1.bf16.xpose.msra.mxu0 0
    %2108 = vmatprep.subr.bf16.mxu0 0
    %2109 = vmatpush1.bf16.xpose.msra.mxu0 0
    %2110 = vmatprep.subr.bf16.mxu0 0
    %2111 = vmatpush1.bf16.xpose.msra.mxu0 0
    %2112 = vmatprep.subr.bf16.mxu0 0
    %2113 = vmatpush1.bf16.xpose.msra.mxu0 0
    %2114 = vmatprep.subr.bf16.mxu0 0
    %2115 = vmatpush1.bf16.xpose.msra.mxu0 0
    %2116 = vmatprep.mubr.bf16.mxu0 %v1439
    %2117 = vmatmul.mubr.bf16.gmra.mrb[0].mxu0 %v1438
    %v2118 = vpop.f32.mrb[0].mxu0
    %v2119 = vadd.f32 %v2078, %v2118
    %v2120 = vpop.f32.mrb[0].mxu0
    %v2121 = vpop.f32.mrb[0].mxu0
    %v2122 = vadd.f32 %v2081, %v2121
    %v2123 = vpop.f32.mrb[0].mxu0
    %2124 = vdwg.mxu0
    %2125 = vmatprep.subr.bf16.mxu0 %v801
    %2126 = vmatpush1.bf16.xpose.msra.mxu0 %v800
    %2127 = vmatprep.subr.bf16.mxu0 0
    %2128 = vmatpush1.bf16.xpose.msra.mxu0 0
    %2129 = vmatprep.subr.bf16.mxu0 0
    %2130 = vmatpush1.bf16.xpose.msra.mxu0 0
    %2131 = vmatprep.subr.bf16.mxu0 0
    %2132 = vmatpush1.bf16.xpose.msra.mxu0 0
    %2133 = vmatprep.subr.bf16.mxu0 0
    %2134 = vmatpush1.bf16.xpose.msra.mxu0 0
    %2135 = vmatprep.subr.bf16.mxu0 0
    %2136 = vmatpush1.bf16.xpose.msra.mxu0 0
    %2137 = vmatprep.subr.bf16.mxu0 0
    %2138 = vmatpush1.bf16.xpose.msra.mxu0 0
    %2139 = vmatprep.subr.bf16.mxu0 0
    %2140 = vmatpush1.bf16.xpose.msra.mxu0 0
    %2141 = vmatprep.subr.bf16.mxu0 0
    %2142 = vmatpush1.bf16.xpose.msra.mxu0 0
    %2143 = vmatprep.subr.bf16.mxu0 0
    %2144 = vmatpush1.bf16.xpose.msra.mxu0 0
    %2145 = vmatprep.subr.bf16.mxu0 0
    %2146 = vmatpush1.bf16.xpose.msra.mxu0 0
    %2147 = vmatprep.subr.bf16.mxu0 0
    %2148 = vmatpush1.bf16.xpose.msra.mxu0 0
    %2149 = vmatprep.subr.bf16.mxu0 0
    %2150 = vmatpush1.bf16.xpose.msra.mxu0 0
    %2151 = vmatprep.subr.bf16.mxu0 0
    %2152 = vmatpush1.bf16.xpose.msra.mxu0 0
    %2153 = vmatprep.subr.bf16.mxu0 0
    %2154 = vmatpush1.bf16.xpose.msra.mxu0 0
    %2155 = vmatprep.subr.bf16.mxu0 0
    %2156 = vmatpush1.bf16.xpose.msra.mxu0 0
    %2157 = vmatprep.mubr.bf16.mxu0 %v1441
    %2158 = vmatmul.mubr.bf16.gmra.mrb[0].mxu0 %v1440
    %v2159 = vpop.f32.mrb[0].mxu0
    %v2160 = vadd.f32 %v2119, %v2159
    %v2161 = vpop.f32.mrb[0].mxu0
    %v2162 = vpop.f32.mrb[0].mxu0
    %v2163 = vadd.f32 %v2122, %v2162
    %v2164 = vpop.f32.mrb[0].mxu0
    %2165 = vdwg.mxu0
    %2166 = vmatprep.subr.bf16.mxu0 %v803
    %2167 = vmatpush1.bf16.xpose.msra.mxu0 %v802
    %2168 = vmatprep.subr.bf16.mxu0 0
    %2169 = vmatpush1.bf16.xpose.msra.mxu0 0
    %2170 = vmatprep.subr.bf16.mxu0 0
    %2171 = vmatpush1.bf16.xpose.msra.mxu0 0
    %2172 = vmatprep.subr.bf16.mxu0 0
    %2173 = vmatpush1.bf16.xpose.msra.mxu0 0
    %2174 = vmatprep.subr.bf16.mxu0 0
    %2175 = vmatpush1.bf16.xpose.msra.mxu0 0
    %2176 = vmatprep.subr.bf16.mxu0 0
    %2177 = vmatpush1.bf16.xpose.msra.mxu0 0
    %2178 = vmatprep.subr.bf16.mxu0 0
    %2179 = vmatpush1.bf16.xpose.msra.mxu0 0
    %2180 = vmatprep.subr.bf16.mxu0 0
    %2181 = vmatpush1.bf16.xpose.msra.mxu0 0
    %2182 = vmatprep.subr.bf16.mxu0 0
    %2183 = vmatpush1.bf16.xpose.msra.mxu0 0
    %2184 = vmatprep.subr.bf16.mxu0 0
    %2185 = vmatpush1.bf16.xpose.msra.mxu0 0
    %2186 = vmatprep.subr.bf16.mxu0 0
    %2187 = vmatpush1.bf16.xpose.msra.mxu0 0
    %2188 = vmatprep.subr.bf16.mxu0 0
    %2189 = vmatpush1.bf16.xpose.msra.mxu0 0
    %2190 = vmatprep.subr.bf16.mxu0 0
    %2191 = vmatpush1.bf16.xpose.msra.mxu0 0
    %2192 = vmatprep.subr.bf16.mxu0 0
    %2193 = vmatpush1.bf16.xpose.msra.mxu0 0
    %2194 = vmatprep.subr.bf16.mxu0 0
    %2195 = vmatpush1.bf16.xpose.msra.mxu0 0
    %2196 = vmatprep.subr.bf16.mxu0 0
    %2197 = vmatpush1.bf16.xpose.msra.mxu0 0
    %2198 = vmatprep.mubr.bf16.mxu0 %v1443
    %2199 = vmatmul.mubr.bf16.gmra.mrb[0].mxu0 %v1442
    %v2200 = vpop.f32.mrb[0].mxu0
    %v2201 = vadd.f32 %v2160, %v2200
    %v2202 = vpop.f32.mrb[0].mxu0
    %v2203 = vpop.f32.mrb[0].mxu0
    %v2204 = vadd.f32 %v2163, %v2203
    %v2205 = vpop.f32.mrb[0].mxu0
    %2206 = vdwg.mxu0
    %2207 = vmatprep.subr.bf16.mxu0 %v805
    %2208 = vmatpush1.bf16.xpose.msra.mxu0 %v804
    %2209 = vmatprep.subr.bf16.mxu0 0
    %2210 = vmatpush1.bf16.xpose.msra.mxu0 0
    %2211 = vmatprep.subr.bf16.mxu0 0
    %2212 = vmatpush1.bf16.xpose.msra.mxu0 0
    %2213 = vmatprep.subr.bf16.mxu0 0
    %2214 = vmatpush1.bf16.xpose.msra.mxu0 0
    %2215 = vmatprep.subr.bf16.mxu0 0
    %2216 = vmatpush1.bf16.xpose.msra.mxu0 0
    %2217 = vmatprep.subr.bf16.mxu0 0
    %2218 = vmatpush1.bf16.xpose.msra.mxu0 0
    %2219 = vmatprep.subr.bf16.mxu0 0
    %2220 = vmatpush1.bf16.xpose.msra.mxu0 0
    %2221 = vmatprep.subr.bf16.mxu0 0
    %2222 = vmatpush1.bf16.xpose.msra.mxu0 0
    %2223 = vmatprep.subr.bf16.mxu0 0
    %2224 = vmatpush1.bf16.xpose.msra.mxu0 0
    %2225 = vmatprep.subr.bf16.mxu0 0
    %2226 = vmatpush1.bf16.xpose.msra.mxu0 0
    %2227 = vmatprep.subr.bf16.mxu0 0
    %2228 = vmatpush1.bf16.xpose.msra.mxu0 0
    %2229 = vmatprep.subr.bf16.mxu0 0
    %2230 = vmatpush1.bf16.xpose.msra.mxu0 0
    %2231 = vmatprep.subr.bf16.mxu0 0
    %2232 = vmatpush1.bf16.xpose.msra.mxu0 0
    %2233 = vmatprep.subr.bf16.mxu0 0
    %2234 = vmatpush1.bf16.xpose.msra.mxu0 0
    %2235 = vmatprep.subr.bf16.mxu0 0
    %2236 = vmatpush1.bf16.xpose.msra.mxu0 0
    %2237 = vmatprep.subr.bf16.mxu0 0
    %2238 = vmatpush1.bf16.xpose.msra.mxu0 0
    %2239 = vmatprep.mubr.bf16.mxu0 %v1445
    %2240 = vmatmul.mubr.bf16.gmra.mrb[0].mxu0 %v1444
    %v2241 = vpop.f32.mrb[0].mxu0
    %v2242 = vadd.f32 %v2201, %v2241
    %v2243 = vpop.f32.mrb[0].mxu0
    %v2244 = vpop.f32.mrb[0].mxu0
    %v2245 = vadd.f32 %v2204, %v2244
    %v2246 = vpop.f32.mrb[0].mxu0
    %2247 = vdwg.mxu0
    %2248 = vmatprep.subr.bf16.mxu0 %v807
    %2249 = vmatpush1.bf16.xpose.msra.mxu0 %v806
    %2250 = vmatprep.subr.bf16.mxu0 0
    %2251 = vmatpush1.bf16.xpose.msra.mxu0 0
    %2252 = vmatprep.subr.bf16.mxu0 0
    %2253 = vmatpush1.bf16.xpose.msra.mxu0 0
    %2254 = vmatprep.subr.bf16.mxu0 0
    %2255 = vmatpush1.bf16.xpose.msra.mxu0 0
    %2256 = vmatprep.subr.bf16.mxu0 0
    %2257 = vmatpush1.bf16.xpose.msra.mxu0 0
    %2258 = vmatprep.subr.bf16.mxu0 0
    %2259 = vmatpush1.bf16.xpose.msra.mxu0 0
    %2260 = vmatprep.subr.bf16.mxu0 0
    %2261 = vmatpush1.bf16.xpose.msra.mxu0 0
    %2262 = vmatprep.subr.bf16.mxu0 0
    %2263 = vmatpush1.bf16.xpose.msra.mxu0 0
    %2264 = vmatprep.subr.bf16.mxu0 0
    %2265 = vmatpush1.bf16.xpose.msra.mxu0 0
    %2266 = vmatprep.subr.bf16.mxu0 0
    %2267 = vmatpush1.bf16.xpose.msra.mxu0 0
    %2268 = vmatprep.subr.bf16.mxu0 0
    %2269 = vmatpush1.bf16.xpose.msra.mxu0 0
    %2270 = vmatprep.subr.bf16.mxu0 0
    %2271 = vmatpush1.bf16.xpose.msra.mxu0 0
    %2272 = vmatprep.subr.bf16.mxu0 0
    %2273 = vmatpush1.bf16.xpose.msra.mxu0 0
    %2274 = vmatprep.subr.bf16.mxu0 0
    %2275 = vmatpush1.bf16.xpose.msra.mxu0 0
    %2276 = vmatprep.subr.bf16.mxu0 0
    %2277 = vmatpush1.bf16.xpose.msra.mxu0 0
    %2278 = vmatprep.subr.bf16.mxu0 0
    %2279 = vmatpush1.bf16.xpose.msra.mxu0 0
    %2280 = vmatprep.mubr.bf16.mxu0 %v1447
    %2281 = vmatmul.mubr.bf16.gmra.mrb[0].mxu0 %v1446
    %v2282 = vpop.f32.mrb[0].mxu0
    %v2283 = vadd.f32 %v2242, %v2282
    %v2284 = vpop.f32.mrb[0].mxu0
    %v2285 = vpop.f32.mrb[0].mxu0
    %v2286 = vadd.f32 %v2245, %v2285
    %v2287 = vpop.f32.mrb[0].mxu0
    %2288 = vdwg.mxu0
    %2289 = vmatprep.subr.bf16.mxu0 %v809
    %2290 = vmatpush1.bf16.xpose.msra.mxu0 %v808
    %2291 = vmatprep.subr.bf16.mxu0 0
    %2292 = vmatpush1.bf16.xpose.msra.mxu0 0
    %2293 = vmatprep.subr.bf16.mxu0 0
    %2294 = vmatpush1.bf16.xpose.msra.mxu0 0
    %2295 = vmatprep.subr.bf16.mxu0 0
    %2296 = vmatpush1.bf16.xpose.msra.mxu0 0
    %2297 = vmatprep.subr.bf16.mxu0 0
    %2298 = vmatpush1.bf16.xpose.msra.mxu0 0
    %2299 = vmatprep.subr.bf16.mxu0 0
    %2300 = vmatpush1.bf16.xpose.msra.mxu0 0
    %2301 = vmatprep.subr.bf16.mxu0 0
    %2302 = vmatpush1.bf16.xpose.msra.mxu0 0
    %2303 = vmatprep.subr.bf16.mxu0 0
    %2304 = vmatpush1.bf16.xpose.msra.mxu0 0
    %2305 = vmatprep.subr.bf16.mxu0 0
    %2306 = vmatpush1.bf16.xpose.msra.mxu0 0
    %2307 = vmatprep.subr.bf16.mxu0 0
    %2308 = vmatpush1.bf16.xpose.msra.mxu0 0
    %2309 = vmatprep.subr.bf16.mxu0 0
    %2310 = vmatpush1.bf16.xpose.msra.mxu0 0
    %2311 = vmatprep.subr.bf16.mxu0 0
    %2312 = vmatpush1.bf16.xpose.msra.mxu0 0
    %2313 = vmatprep.subr.bf16.mxu0 0
    %2314 = vmatpush1.bf16.xpose.msra.mxu0 0
    %2315 = vmatprep.subr.bf16.mxu0 0
    %2316 = vmatpush1.bf16.xpose.msra.mxu0 0
    %2317 = vmatprep.subr.bf16.mxu0 0
    %2318 = vmatpush1.bf16.xpose.msra.mxu0 0
    %2319 = vmatprep.subr.bf16.mxu0 0
    %2320 = vmatpush1.bf16.xpose.msra.mxu0 0
    %2321 = vmatprep.mubr.bf16.mxu0 %v1449
    %2322 = vmatmul.mubr.bf16.gmra.mrb[0].mxu0 %v1448
    %v2323 = vpop.f32.mrb[0].mxu0
    %v2324 = vadd.f32 %v2283, %v2323
    %v2325 = vpop.f32.mrb[0].mxu0
    %v2326 = vpop.f32.mrb[0].mxu0
    %v2327 = vadd.f32 %v2286, %v2326
    %v2328 = vpop.f32.mrb[0].mxu0
    %2329 = vdwg.mxu0
    %2330 = vmatprep.subr.bf16.mxu0 %v811
    %2331 = vmatpush1.bf16.xpose.msra.mxu0 %v810
    %2332 = vmatprep.subr.bf16.mxu0 0
    %2333 = vmatpush1.bf16.xpose.msra.mxu0 0
    %2334 = vmatprep.subr.bf16.mxu0 0
    %2335 = vmatpush1.bf16.xpose.msra.mxu0 0
    %2336 = vmatprep.subr.bf16.mxu0 0
    %2337 = vmatpush1.bf16.xpose.msra.mxu0 0
    %2338 = vmatprep.subr.bf16.mxu0 0
    %2339 = vmatpush1.bf16.xpose.msra.mxu0 0
    %2340 = vmatprep.subr.bf16.mxu0 0
    %2341 = vmatpush1.bf16.xpose.msra.mxu0 0
    %2342 = vmatprep.subr.bf16.mxu0 0
    %2343 = vmatpush1.bf16.xpose.msra.mxu0 0
    %2344 = vmatprep.subr.bf16.mxu0 0
    %2345 = vmatpush1.bf16.xpose.msra.mxu0 0
    %2346 = vmatprep.subr.bf16.mxu0 0
    %2347 = vmatpush1.bf16.xpose.msra.mxu0 0
    %2348 = vmatprep.subr.bf16.mxu0 0
    %2349 = vmatpush1.bf16.xpose.msra.mxu0 0
    %2350 = vmatprep.subr.bf16.mxu0 0
    %2351 = vmatpush1.bf16.xpose.msra.mxu0 0
    %2352 = vmatprep.subr.bf16.mxu0 0
    %2353 = vmatpush1.bf16.xpose.msra.mxu0 0
    %2354 = vmatprep.subr.bf16.mxu0 0
    %2355 = vmatpush1.bf16.xpose.msra.mxu0 0
    %2356 = vmatprep.subr.bf16.mxu0 0
    %2357 = vmatpush1.bf16.xpose.msra.mxu0 0
    %2358 = vmatprep.subr.bf16.mxu0 0
    %2359 = vmatpush1.bf16.xpose.msra.mxu0 0
    %2360 = vmatprep.subr.bf16.mxu0 0
    %2361 = vmatpush1.bf16.xpose.msra.mxu0 0
    %2362 = vmatprep.mubr.bf16.mxu0 %v1451
    %2363 = vmatmul.mubr.bf16.gmra.mrb[0].mxu0 %v1450
    %v2364 = vpop.f32.mrb[0].mxu0
    %v2365 = vadd.f32 %v2324, %v2364
    %v2366 = vpop.f32.mrb[0].mxu0
    %v2367 = vpop.f32.mrb[0].mxu0
    %v2368 = vadd.f32 %v2327, %v2367
    %v2369 = vpop.f32.mrb[0].mxu0
    %2370 = vdwg.mxu0
    %2371 = vmatprep.subr.bf16.mxu0 %v813
    %2372 = vmatpush1.bf16.xpose.msra.mxu0 %v812
    %2373 = vmatprep.subr.bf16.mxu0 0
    %2374 = vmatpush1.bf16.xpose.msra.mxu0 0
    %2375 = vmatprep.subr.bf16.mxu0 0
    %2376 = vmatpush1.bf16.xpose.msra.mxu0 0
    %2377 = vmatprep.subr.bf16.mxu0 0
    %2378 = vmatpush1.bf16.xpose.msra.mxu0 0
    %2379 = vmatprep.subr.bf16.mxu0 0
    %2380 = vmatpush1.bf16.xpose.msra.mxu0 0
    %2381 = vmatprep.subr.bf16.mxu0 0
    %2382 = vmatpush1.bf16.xpose.msra.mxu0 0
    %2383 = vmatprep.subr.bf16.mxu0 0
    %2384 = vmatpush1.bf16.xpose.msra.mxu0 0
    %2385 = vmatprep.subr.bf16.mxu0 0
    %2386 = vmatpush1.bf16.xpose.msra.mxu0 0
    %2387 = vmatprep.subr.bf16.mxu0 0
    %2388 = vmatpush1.bf16.xpose.msra.mxu0 0
    %2389 = vmatprep.subr.bf16.mxu0 0
    %2390 = vmatpush1.bf16.xpose.msra.mxu0 0
    %2391 = vmatprep.subr.bf16.mxu0 0
    %2392 = vmatpush1.bf16.xpose.msra.mxu0 0
    %2393 = vmatprep.subr.bf16.mxu0 0
    %2394 = vmatpush1.bf16.xpose.msra.mxu0 0
    %2395 = vmatprep.subr.bf16.mxu0 0
    %2396 = vmatpush1.bf16.xpose.msra.mxu0 0
    %2397 = vmatprep.subr.bf16.mxu0 0
    %2398 = vmatpush1.bf16.xpose.msra.mxu0 0
    %2399 = vmatprep.subr.bf16.mxu0 0
    %2400 = vmatpush1.bf16.xpose.msra.mxu0 0
    %2401 = vmatprep.subr.bf16.mxu0 0
    %2402 = vmatpush1.bf16.xpose.msra.mxu0 0
    %2403 = vmatprep.mubr.bf16.mxu0 %v1453
    %2404 = vmatmul.mubr.bf16.gmra.mrb[0].mxu0 %v1452
    %v2405 = vpop.f32.mrb[0].mxu0
    %v2406 = vadd.f32 %v2365, %v2405
    %v2407 = vpop.f32.mrb[0].mxu0
    %v2408 = vpop.f32.mrb[0].mxu0
    %v2409 = vadd.f32 %v2368, %v2408
    %v2410 = vpop.f32.mrb[0].mxu0
    %2411 = vdwg.mxu0
    %2412 = vmatprep.subr.bf16.mxu0 %v815
    %2413 = vmatpush1.bf16.xpose.msra.mxu0 %v814
    %2414 = vmatprep.subr.bf16.mxu0 0
    %2415 = vmatpush1.bf16.xpose.msra.mxu0 0
    %2416 = vmatprep.subr.bf16.mxu0 0
    %2417 = vmatpush1.bf16.xpose.msra.mxu0 0
    %2418 = vmatprep.subr.bf16.mxu0 0
    %2419 = vmatpush1.bf16.xpose.msra.mxu0 0
    %2420 = vmatprep.subr.bf16.mxu0 0
    %2421 = vmatpush1.bf16.xpose.msra.mxu0 0
    %2422 = vmatprep.subr.bf16.mxu0 0
    %2423 = vmatpush1.bf16.xpose.msra.mxu0 0
    %2424 = vmatprep.subr.bf16.mxu0 0
    %2425 = vmatpush1.bf16.xpose.msra.mxu0 0
    %2426 = vmatprep.subr.bf16.mxu0 0
    %2427 = vmatpush1.bf16.xpose.msra.mxu0 0
    %2428 = vmatprep.subr.bf16.mxu0 0
    %2429 = vmatpush1.bf16.xpose.msra.mxu0 0
    %2430 = vmatprep.subr.bf16.mxu0 0
    %2431 = vmatpush1.bf16.xpose.msra.mxu0 0
    %2432 = vmatprep.subr.bf16.mxu0 0
    %2433 = vmatpush1.bf16.xpose.msra.mxu0 0
    %2434 = vmatprep.subr.bf16.mxu0 0
    %2435 = vmatpush1.bf16.xpose.msra.mxu0 0
    %2436 = vmatprep.subr.bf16.mxu0 0
    %2437 = vmatpush1.bf16.xpose.msra.mxu0 0
    %2438 = vmatprep.subr.bf16.mxu0 0
    %2439 = vmatpush1.bf16.xpose.msra.mxu0 0
    %2440 = vmatprep.subr.bf16.mxu0 0
    %2441 = vmatpush1.bf16.xpose.msra.mxu0 0
    %2442 = vmatprep.subr.bf16.mxu0 0
    %2443 = vmatpush1.bf16.xpose.msra.mxu0 0
    %2444 = vmatprep.mubr.bf16.mxu0 %v1455
    %2445 = vmatmul.mubr.bf16.gmra.mrb[0].mxu0 %v1454
    %v2446 = vpop.f32.mrb[0].mxu0
    %v2447 = vadd.f32 %v2406, %v2446
    %v2448 = vpop.f32.mrb[0].mxu0
    %v2449 = vpop.f32.mrb[0].mxu0
    %v2450 = vadd.f32 %v2409, %v2449
    %v2451 = vpop.f32.mrb[0].mxu0
    %2452 = vdwg.mxu0
    %2453 = vmatprep.subr.bf16.mxu0 %v817
    %2454 = vmatpush1.bf16.xpose.msra.mxu0 %v816
    %2455 = vmatprep.subr.bf16.mxu0 0
    %2456 = vmatpush1.bf16.xpose.msra.mxu0 0
    %2457 = vmatprep.subr.bf16.mxu0 0
    %2458 = vmatpush1.bf16.xpose.msra.mxu0 0
    %2459 = vmatprep.subr.bf16.mxu0 0
    %2460 = vmatpush1.bf16.xpose.msra.mxu0 0
    %2461 = vmatprep.subr.bf16.mxu0 0
    %2462 = vmatpush1.bf16.xpose.msra.mxu0 0
    %2463 = vmatprep.subr.bf16.mxu0 0
    %2464 = vmatpush1.bf16.xpose.msra.mxu0 0
    %2465 = vmatprep.subr.bf16.mxu0 0
    %2466 = vmatpush1.bf16.xpose.msra.mxu0 0
    %2467 = vmatprep.subr.bf16.mxu0 0
    %2468 = vmatpush1.bf16.xpose.msra.mxu0 0
    %2469 = vmatprep.subr.bf16.mxu0 0
    %2470 = vmatpush1.bf16.xpose.msra.mxu0 0
    %2471 = vmatprep.subr.bf16.mxu0 0
    %2472 = vmatpush1.bf16.xpose.msra.mxu0 0
    %2473 = vmatprep.subr.bf16.mxu0 0
    %2474 = vmatpush1.bf16.xpose.msra.mxu0 0
    %2475 = vmatprep.subr.bf16.mxu0 0
    %2476 = vmatpush1.bf16.xpose.msra.mxu0 0
    %2477 = vmatprep.subr.bf16.mxu0 0
    %2478 = vmatpush1.bf16.xpose.msra.mxu0 0
    %2479 = vmatprep.subr.bf16.mxu0 0
    %2480 = vmatpush1.bf16.xpose.msra.mxu0 0
    %2481 = vmatprep.subr.bf16.mxu0 0
    %2482 = vmatpush1.bf16.xpose.msra.mxu0 0
    %2483 = vmatprep.subr.bf16.mxu0 0
    %2484 = vmatpush1.bf16.xpose.msra.mxu0 0
    %2485 = vmatprep.mubr.bf16.mxu0 %v1457
    %2486 = vmatmul.mubr.bf16.gmra.mrb[0].mxu0 %v1456
    %v2487 = vpop.f32.mrb[0].mxu0
    %v2488 = vadd.f32 %v2447, %v2487
    %v2489 = vpop.f32.mrb[0].mxu0
    %v2490 = vpop.f32.mrb[0].mxu0
    %v2491 = vadd.f32 %v2450, %v2490
    %v2492 = vpop.f32.mrb[0].mxu0
    %2493 = vdwg.mxu0
    %2494 = vmatprep.subr.bf16.mxu0 %v819
    %2495 = vmatpush1.bf16.xpose.msra.mxu0 %v818
    %2496 = vmatprep.subr.bf16.mxu0 0
    %2497 = vmatpush1.bf16.xpose.msra.mxu0 0
    %2498 = vmatprep.subr.bf16.mxu0 0
    %2499 = vmatpush1.bf16.xpose.msra.mxu0 0
    %2500 = vmatprep.subr.bf16.mxu0 0
    %2501 = vmatpush1.bf16.xpose.msra.mxu0 0
    %2502 = vmatprep.subr.bf16.mxu0 0
    %2503 = vmatpush1.bf16.xpose.msra.mxu0 0
    %2504 = vmatprep.subr.bf16.mxu0 0
    %2505 = vmatpush1.bf16.xpose.msra.mxu0 0
    %2506 = vmatprep.subr.bf16.mxu0 0
    %2507 = vmatpush1.bf16.xpose.msra.mxu0 0
    %2508 = vmatprep.subr.bf16.mxu0 0
    %2509 = vmatpush1.bf16.xpose.msra.mxu0 0
    %2510 = vmatprep.subr.bf16.mxu0 0
    %2511 = vmatpush1.bf16.xpose.msra.mxu0 0
    %2512 = vmatprep.subr.bf16.mxu0 0
    %2513 = vmatpush1.bf16.xpose.msra.mxu0 0
    %2514 = vmatprep.subr.bf16.mxu0 0
    %2515 = vmatpush1.bf16.xpose.msra.mxu0 0
    %2516 = vmatprep.subr.bf16.mxu0 0
    %2517 = vmatpush1.bf16.xpose.msra.mxu0 0
    %2518 = vmatprep.subr.bf16.mxu0 0
    %2519 = vmatpush1.bf16.xpose.msra.mxu0 0
    %2520 = vmatprep.subr.bf16.mxu0 0
    %2521 = vmatpush1.bf16.xpose.msra.mxu0 0
    %2522 = vmatprep.subr.bf16.mxu0 0
    %2523 = vmatpush1.bf16.xpose.msra.mxu0 0
    %2524 = vmatprep.subr.bf16.mxu0 0
    %2525 = vmatpush1.bf16.xpose.msra.mxu0 0
    %2526 = vmatprep.mubr.bf16.mxu0 %v1459
    %2527 = vmatmul.mubr.bf16.gmra.mrb[0].mxu0 %v1458
    %v2528 = vpop.f32.mrb[0].mxu0
    %v2529 = vadd.f32 %v2488, %v2528
    %v2530 = vpop.f32.mrb[0].mxu0
    %v2531 = vpop.f32.mrb[0].mxu0
    %v2532 = vadd.f32 %v2491, %v2531
    %v2533 = vpop.f32.mrb[0].mxu0
    %2534 = vdwg.mxu0
    %2535 = vmatprep.subr.bf16.mxu0 %v821
    %2536 = vmatpush1.bf16.xpose.msra.mxu0 %v820
    %2537 = vmatprep.subr.bf16.mxu0 0
    %2538 = vmatpush1.bf16.xpose.msra.mxu0 0
    %2539 = vmatprep.subr.bf16.mxu0 0
    %2540 = vmatpush1.bf16.xpose.msra.mxu0 0
    %2541 = vmatprep.subr.bf16.mxu0 0
    %2542 = vmatpush1.bf16.xpose.msra.mxu0 0
    %2543 = vmatprep.subr.bf16.mxu0 0
    %2544 = vmatpush1.bf16.xpose.msra.mxu0 0
    %2545 = vmatprep.subr.bf16.mxu0 0
    %2546 = vmatpush1.bf16.xpose.msra.mxu0 0
    %2547 = vmatprep.subr.bf16.mxu0 0
    %2548 = vmatpush1.bf16.xpose.msra.mxu0 0
    %2549 = vmatprep.subr.bf16.mxu0 0
    %2550 = vmatpush1.bf16.xpose.msra.mxu0 0
    %2551 = vmatprep.subr.bf16.mxu0 0
    %2552 = vmatpush1.bf16.xpose.msra.mxu0 0
    %2553 = vmatprep.subr.bf16.mxu0 0
    %2554 = vmatpush1.bf16.xpose.msra.mxu0 0
    %2555 = vmatprep.subr.bf16.mxu0 0
    %2556 = vmatpush1.bf16.xpose.msra.mxu0 0
    %2557 = vmatprep.subr.bf16.mxu0 0
    %2558 = vmatpush1.bf16.xpose.msra.mxu0 0
    %2559 = vmatprep.subr.bf16.mxu0 0
    %2560 = vmatpush1.bf16.xpose.msra.mxu0 0
    %2561 = vmatprep.subr.bf16.mxu0 0
    %2562 = vmatpush1.bf16.xpose.msra.mxu0 0
    %2563 = vmatprep.subr.bf16.mxu0 0
    %2564 = vmatpush1.bf16.xpose.msra.mxu0 0
    %2565 = vmatprep.subr.bf16.mxu0 0
    %2566 = vmatpush1.bf16.xpose.msra.mxu0 0
    %2567 = vmatprep.mubr.bf16.mxu0 %v1461
    %2568 = vmatmul.mubr.bf16.gmra.mrb[0].mxu0 %v1460
    %v2569 = vpop.f32.mrb[0].mxu0
    %v2570 = vadd.f32 %v2529, %v2569
    %v2571 = vpop.f32.mrb[0].mxu0
    %v2572 = vpop.f32.mrb[0].mxu0
    %v2573 = vadd.f32 %v2532, %v2572
    %v2574 = vpop.f32.mrb[0].mxu0
    %2575 = vdwg.mxu0
    %2576 = vmatprep.subr.bf16.mxu0 %v823
    %2577 = vmatpush1.bf16.xpose.msra.mxu0 %v822
    %2578 = vmatprep.subr.bf16.mxu0 0
    %2579 = vmatpush1.bf16.xpose.msra.mxu0 0
    %2580 = vmatprep.subr.bf16.mxu0 0
    %2581 = vmatpush1.bf16.xpose.msra.mxu0 0
    %2582 = vmatprep.subr.bf16.mxu0 0
    %2583 = vmatpush1.bf16.xpose.msra.mxu0 0
    %2584 = vmatprep.subr.bf16.mxu0 0
    %2585 = vmatpush1.bf16.xpose.msra.mxu0 0
    %2586 = vmatprep.subr.bf16.mxu0 0
    %2587 = vmatpush1.bf16.xpose.msra.mxu0 0
    %2588 = vmatprep.subr.bf16.mxu0 0
    %2589 = vmatpush1.bf16.xpose.msra.mxu0 0
    %2590 = vmatprep.subr.bf16.mxu0 0
    %2591 = vmatpush1.bf16.xpose.msra.mxu0 0
    %2592 = vmatprep.subr.bf16.mxu0 0
    %2593 = vmatpush1.bf16.xpose.msra.mxu0 0
    %2594 = vmatprep.subr.bf16.mxu0 0
    %2595 = vmatpush1.bf16.xpose.msra.mxu0 0
    %2596 = vmatprep.subr.bf16.mxu0 0
    %2597 = vmatpush1.bf16.xpose.msra.mxu0 0
    %2598 = vmatprep.subr.bf16.mxu0 0
    %2599 = vmatpush1.bf16.xpose.msra.mxu0 0
    %2600 = vmatprep.subr.bf16.mxu0 0
    %2601 = vmatpush1.bf16.xpose.msra.mxu0 0
    %2602 = vmatprep.subr.bf16.mxu0 0
    %2603 = vmatpush1.bf16.xpose.msra.mxu0 0
    %2604 = vmatprep.subr.bf16.mxu0 0
    %2605 = vmatpush1.bf16.xpose.msra.mxu0 0
    %2606 = vmatprep.subr.bf16.mxu0 0
    %2607 = vmatpush1.bf16.xpose.msra.mxu0 0
    %2608 = vmatprep.mubr.bf16.mxu0 %v1463
    %2609 = vmatmul.mubr.bf16.gmra.mrb[0].mxu0 %v1462
    %v2610 = vpop.f32.mrb[0].mxu0
    %v2611 = vadd.f32 %v2570, %v2610
    %v2612 = vpop.f32.mrb[0].mxu0
    %v2613 = vpop.f32.mrb[0].mxu0
    %v2614 = vadd.f32 %v2573, %v2613
    %v2615 = vpop.f32.mrb[0].mxu0
    %2616 = vdwg.mxu0
    %2617 = vmatprep.subr.bf16.mxu0 %v825
    %2618 = vmatpush1.bf16.xpose.msra.mxu0 %v824
    %2619 = vmatprep.subr.bf16.mxu0 0
    %2620 = vmatpush1.bf16.xpose.msra.mxu0 0
    %2621 = vmatprep.subr.bf16.mxu0 0
    %2622 = vmatpush1.bf16.xpose.msra.mxu0 0
    %2623 = vmatprep.subr.bf16.mxu0 0
    %2624 = vmatpush1.bf16.xpose.msra.mxu0 0
    %2625 = vmatprep.subr.bf16.mxu0 0
    %2626 = vmatpush1.bf16.xpose.msra.mxu0 0
    %2627 = vmatprep.subr.bf16.mxu0 0
    %2628 = vmatpush1.bf16.xpose.msra.mxu0 0
    %2629 = vmatprep.subr.bf16.mxu0 0
    %2630 = vmatpush1.bf16.xpose.msra.mxu0 0
    %2631 = vmatprep.subr.bf16.mxu0 0
    %2632 = vmatpush1.bf16.xpose.msra.mxu0 0
    %2633 = vmatprep.subr.bf16.mxu0 0
    %2634 = vmatpush1.bf16.xpose.msra.mxu0 0
    %2635 = vmatprep.subr.bf16.mxu0 0
    %2636 = vmatpush1.bf16.xpose.msra.mxu0 0
    %2637 = vmatprep.subr.bf16.mxu0 0
    %2638 = vmatpush1.bf16.xpose.msra.mxu0 0
    %2639 = vmatprep.subr.bf16.mxu0 0
    %2640 = vmatpush1.bf16.xpose.msra.mxu0 0
    %2641 = vmatprep.subr.bf16.mxu0 0
    %2642 = vmatpush1.bf16.xpose.msra.mxu0 0
    %2643 = vmatprep.subr.bf16.mxu0 0
    %2644 = vmatpush1.bf16.xpose.msra.mxu0 0
    %2645 = vmatprep.subr.bf16.mxu0 0
    %2646 = vmatpush1.bf16.xpose.msra.mxu0 0
    %2647 = vmatprep.subr.bf16.mxu0 0
    %2648 = vmatpush1.bf16.xpose.msra.mxu0 0
    %2649 = vmatprep.mubr.bf16.mxu0 %v1465
    %2650 = vmatmul.mubr.bf16.gmra.mrb[0].mxu0 %v1464
    %v2651 = vpop.f32.mrb[0].mxu0
    %v2652 = vadd.f32 %v2611, %v2651
    %v2653 = vpop.f32.mrb[0].mxu0
    %v2654 = vpop.f32.mrb[0].mxu0
    %v2655 = vadd.f32 %v2614, %v2654
    %v2656 = vpop.f32.mrb[0].mxu0
    %2657 = vdwg.mxu0
    %2658 = vmatprep.subr.bf16.mxu0 %v827
    %2659 = vmatpush1.bf16.xpose.msra.mxu0 %v826
    %2660 = vmatprep.subr.bf16.mxu0 0
    %2661 = vmatpush1.bf16.xpose.msra.mxu0 0
    %2662 = vmatprep.subr.bf16.mxu0 0
    %2663 = vmatpush1.bf16.xpose.msra.mxu0 0
    %2664 = vmatprep.subr.bf16.mxu0 0
    %2665 = vmatpush1.bf16.xpose.msra.mxu0 0
    %2666 = vmatprep.subr.bf16.mxu0 0
    %2667 = vmatpush1.bf16.xpose.msra.mxu0 0
    %2668 = vmatprep.subr.bf16.mxu0 0
    %2669 = vmatpush1.bf16.xpose.msra.mxu0 0
    %2670 = vmatprep.subr.bf16.mxu0 0
    %2671 = vmatpush1.bf16.xpose.msra.mxu0 0
    %2672 = vmatprep.subr.bf16.mxu0 0
    %2673 = vmatpush1.bf16.xpose.msra.mxu0 0
    %2674 = vmatprep.subr.bf16.mxu0 0
    %2675 = vmatpush1.bf16.xpose.msra.mxu0 0
    %2676 = vmatprep.subr.bf16.mxu0 0
    %2677 = vmatpush1.bf16.xpose.msra.mxu0 0
    %2678 = vmatprep.subr.bf16.mxu0 0
    %2679 = vmatpush1.bf16.xpose.msra.mxu0 0
    %2680 = vmatprep.subr.bf16.mxu0 0
    %2681 = vmatpush1.bf16.xpose.msra.mxu0 0
    %2682 = vmatprep.subr.bf16.mxu0 0
    %2683 = vmatpush1.bf16.xpose.msra.mxu0 0
    %2684 = vmatprep.subr.bf16.mxu0 0
    %2685 = vmatpush1.bf16.xpose.msra.mxu0 0
    %2686 = vmatprep.subr.bf16.mxu0 0
    %2687 = vmatpush1.bf16.xpose.msra.mxu0 0
    %2688 = vmatprep.subr.bf16.mxu0 0
    %2689 = vmatpush1.bf16.xpose.msra.mxu0 0
    %2690 = vmatprep.mubr.bf16.mxu0 %v1467
    %2691 = vmatmul.mubr.bf16.gmra.mrb[0].mxu0 %v1466
    %v2692 = vpop.f32.mrb[0].mxu0
    %v2693 = vadd.f32 %v2652, %v2692
    %v2694 = vpop.f32.mrb[0].mxu0
    %v2695 = vpop.f32.mrb[0].mxu0
    %v2696 = vadd.f32 %v2655, %v2695
    %v2697 = vpop.f32.mrb[0].mxu0
    %2698 = vdwg.mxu0
    %2699 = vmatprep.subr.bf16.mxu0 %v829
    %2700 = vmatpush1.bf16.xpose.msra.mxu0 %v828
    %2701 = vmatprep.subr.bf16.mxu0 0
    %2702 = vmatpush1.bf16.xpose.msra.mxu0 0
    %2703 = vmatprep.subr.bf16.mxu0 0
    %2704 = vmatpush1.bf16.xpose.msra.mxu0 0
    %2705 = vmatprep.subr.bf16.mxu0 0
    %2706 = vmatpush1.bf16.xpose.msra.mxu0 0
    %2707 = vmatprep.subr.bf16.mxu0 0
    %2708 = vmatpush1.bf16.xpose.msra.mxu0 0
    %2709 = vmatprep.subr.bf16.mxu0 0
    %2710 = vmatpush1.bf16.xpose.msra.mxu0 0
    %2711 = vmatprep.subr.bf16.mxu0 0
    %2712 = vmatpush1.bf16.xpose.msra.mxu0 0
    %2713 = vmatprep.subr.bf16.mxu0 0
    %2714 = vmatpush1.bf16.xpose.msra.mxu0 0
    %2715 = vmatprep.subr.bf16.mxu0 0
    %2716 = vmatpush1.bf16.xpose.msra.mxu0 0
    %2717 = vmatprep.subr.bf16.mxu0 0
    %2718 = vmatpush1.bf16.xpose.msra.mxu0 0
    %2719 = vmatprep.subr.bf16.mxu0 0
    %2720 = vmatpush1.bf16.xpose.msra.mxu0 0
    %2721 = vmatprep.subr.bf16.mxu0 0
    %2722 = vmatpush1.bf16.xpose.msra.mxu0 0
    %2723 = vmatprep.subr.bf16.mxu0 0
    %2724 = vmatpush1.bf16.xpose.msra.mxu0 0
    %2725 = vmatprep.subr.bf16.mxu0 0
    %2726 = vmatpush1.bf16.xpose.msra.mxu0 0
    %2727 = vmatprep.subr.bf16.mxu0 0
    %2728 = vmatpush1.bf16.xpose.msra.mxu0 0
    %2729 = vmatprep.subr.bf16.mxu0 0
    %2730 = vmatpush1.bf16.xpose.msra.mxu0 0
    %2731 = vmatprep.mubr.bf16.mxu0 %v1469
    %2732 = vmatmul.mubr.bf16.gmra.mrb[0].mxu0 %v1468
    %v2733 = vpop.f32.mrb[0].mxu0
    %v2734 = vadd.f32 %v2693, %v2733
    %v2735 = vpop.f32.mrb[0].mxu0
    %v2736 = vpop.f32.mrb[0].mxu0
    %v2737 = vadd.f32 %v2696, %v2736
    %v2738 = vpop.f32.mrb[0].mxu0
    %2739 = vdwg.mxu0
    %2740 = vmatprep.subr.bf16.mxu0 %v831
    %2741 = vmatpush1.bf16.xpose.msra.mxu0 %v830
    %2742 = vmatprep.subr.bf16.mxu0 0
    %2743 = vmatpush1.bf16.xpose.msra.mxu0 0
    %2744 = vmatprep.subr.bf16.mxu0 0
    %2745 = vmatpush1.bf16.xpose.msra.mxu0 0
    %2746 = vmatprep.subr.bf16.mxu0 0
    %2747 = vmatpush1.bf16.xpose.msra.mxu0 0
    %2748 = vmatprep.subr.bf16.mxu0 0
    %2749 = vmatpush1.bf16.xpose.msra.mxu0 0
    %2750 = vmatprep.subr.bf16.mxu0 0
    %2751 = vmatpush1.bf16.xpose.msra.mxu0 0
    %2752 = vmatprep.subr.bf16.mxu0 0
    %2753 = vmatpush1.bf16.xpose.msra.mxu0 0
    %2754 = vmatprep.subr.bf16.mxu0 0
    %2755 = vmatpush1.bf16.xpose.msra.mxu0 0
    %2756 = vmatprep.subr.bf16.mxu0 0
    %2757 = vmatpush1.bf16.xpose.msra.mxu0 0
    %2758 = vmatprep.subr.bf16.mxu0 0
    %2759 = vmatpush1.bf16.xpose.msra.mxu0 0
    %2760 = vmatprep.subr.bf16.mxu0 0
    %2761 = vmatpush1.bf16.xpose.msra.mxu0 0
    %2762 = vmatprep.subr.bf16.mxu0 0
    %2763 = vmatpush1.bf16.xpose.msra.mxu0 0
    %2764 = vmatprep.subr.bf16.mxu0 0
    %2765 = vmatpush1.bf16.xpose.msra.mxu0 0
    %2766 = vmatprep.subr.bf16.mxu0 0
    %2767 = vmatpush1.bf16.xpose.msra.mxu0 0
    %2768 = vmatprep.subr.bf16.mxu0 0
    %2769 = vmatpush1.bf16.xpose.msra.mxu0 0
    %2770 = vmatprep.subr.bf16.mxu0 0
    %2771 = vmatpush1.bf16.xpose.msra.mxu0 0
    %2772 = vmatprep.mubr.bf16.mxu0 %v1471
    %2773 = vmatmul.mubr.bf16.gmra.mrb[0].mxu0 %v1470
    %v2774 = vpop.f32.mrb[0].mxu0
    %v2775 = vadd.f32 %v2734, %v2774
    %v2776 = vpop.f32.mrb[0].mxu0
    %v2777 = vpop.f32.mrb[0].mxu0
    %v2778 = vadd.f32 %v2737, %v2777
    %v2779 = vpop.f32.mrb[0].mxu0
    %2780 = vdwg.mxu0
    %2781 = vmatprep.subr.bf16.mxu0 %v833
    %2782 = vmatpush1.bf16.xpose.msra.mxu0 %v832
    %2783 = vmatprep.subr.bf16.mxu0 0
    %2784 = vmatpush1.bf16.xpose.msra.mxu0 0
    %2785 = vmatprep.subr.bf16.mxu0 0
    %2786 = vmatpush1.bf16.xpose.msra.mxu0 0
    %2787 = vmatprep.subr.bf16.mxu0 0
    %2788 = vmatpush1.bf16.xpose.msra.mxu0 0
    %2789 = vmatprep.subr.bf16.mxu0 0
    %2790 = vmatpush1.bf16.xpose.msra.mxu0 0
    %2791 = vmatprep.subr.bf16.mxu0 0
    %2792 = vmatpush1.bf16.xpose.msra.mxu0 0
    %2793 = vmatprep.subr.bf16.mxu0 0
    %2794 = vmatpush1.bf16.xpose.msra.mxu0 0
    %2795 = vmatprep.subr.bf16.mxu0 0
    %2796 = vmatpush1.bf16.xpose.msra.mxu0 0
    %2797 = vmatprep.subr.bf16.mxu0 0
    %2798 = vmatpush1.bf16.xpose.msra.mxu0 0
    %2799 = vmatprep.subr.bf16.mxu0 0
    %2800 = vmatpush1.bf16.xpose.msra.mxu0 0
    %2801 = vmatprep.subr.bf16.mxu0 0
    %2802 = vmatpush1.bf16.xpose.msra.mxu0 0
    %2803 = vmatprep.subr.bf16.mxu0 0
    %2804 = vmatpush1.bf16.xpose.msra.mxu0 0
    %2805 = vmatprep.subr.bf16.mxu0 0
    %2806 = vmatpush1.bf16.xpose.msra.mxu0 0
    %2807 = vmatprep.subr.bf16.mxu0 0
    %2808 = vmatpush1.bf16.xpose.msra.mxu0 0
    %2809 = vmatprep.subr.bf16.mxu0 0
    %2810 = vmatpush1.bf16.xpose.msra.mxu0 0
    %2811 = vmatprep.subr.bf16.mxu0 0
    %2812 = vmatpush1.bf16.xpose.msra.mxu0 0
    %2813 = vmatprep.mubr.bf16.mxu0 %v1473
    %2814 = vmatmul.mubr.bf16.gmra.mrb[0].mxu0 %v1472
    %v2815 = vpop.f32.mrb[0].mxu0
    %v2816 = vadd.f32 %v2775, %v2815
    %v2817 = vpop.f32.mrb[0].mxu0
    %v2818 = vpop.f32.mrb[0].mxu0
    %v2819 = vadd.f32 %v2778, %v2818
    %v2820 = vpop.f32.mrb[0].mxu0
    %2821 = vdwg.mxu0
    %2822 = vmatprep.subr.bf16.mxu0 %v835
    %2823 = vmatpush1.bf16.xpose.msra.mxu0 %v834
    %2824 = vmatprep.subr.bf16.mxu0 0
    %2825 = vmatpush1.bf16.xpose.msra.mxu0 0
    %2826 = vmatprep.subr.bf16.mxu0 0
    %2827 = vmatpush1.bf16.xpose.msra.mxu0 0
    %2828 = vmatprep.subr.bf16.mxu0 0
    %2829 = vmatpush1.bf16.xpose.msra.mxu0 0
    %2830 = vmatprep.subr.bf16.mxu0 0
    %2831 = vmatpush1.bf16.xpose.msra.mxu0 0
    %2832 = vmatprep.subr.bf16.mxu0 0
    %2833 = vmatpush1.bf16.xpose.msra.mxu0 0
    %2834 = vmatprep.subr.bf16.mxu0 0
    %2835 = vmatpush1.bf16.xpose.msra.mxu0 0
    %2836 = vmatprep.subr.bf16.mxu0 0
    %2837 = vmatpush1.bf16.xpose.msra.mxu0 0
    %2838 = vmatprep.subr.bf16.mxu0 0
    %2839 = vmatpush1.bf16.xpose.msra.mxu0 0
    %2840 = vmatprep.subr.bf16.mxu0 0
    %2841 = vmatpush1.bf16.xpose.msra.mxu0 0
    %2842 = vmatprep.subr.bf16.mxu0 0
    %2843 = vmatpush1.bf16.xpose.msra.mxu0 0
    %2844 = vmatprep.subr.bf16.mxu0 0
    %2845 = vmatpush1.bf16.xpose.msra.mxu0 0
    %2846 = vmatprep.subr.bf16.mxu0 0
    %2847 = vmatpush1.bf16.xpose.msra.mxu0 0
    %2848 = vmatprep.subr.bf16.mxu0 0
    %2849 = vmatpush1.bf16.xpose.msra.mxu0 0
    %2850 = vmatprep.subr.bf16.mxu0 0
    %2851 = vmatpush1.bf16.xpose.msra.mxu0 0
    %2852 = vmatprep.subr.bf16.mxu0 0
    %2853 = vmatpush1.bf16.xpose.msra.mxu0 0
    %2854 = vmatprep.mubr.bf16.mxu0 %v1475
    %2855 = vmatmul.mubr.bf16.gmra.mrb[0].mxu0 %v1474
    %v2856 = vpop.f32.mrb[0].mxu0
    %v2857 = vadd.f32 %v2816, %v2856
    %v2858 = vpop.f32.mrb[0].mxu0
    %v2859 = vpop.f32.mrb[0].mxu0
    %v2860 = vadd.f32 %v2819, %v2859
    %v2861 = vpop.f32.mrb[0].mxu0
    %2862 = vdwg.mxu0
    %2863 = vmatprep.subr.bf16.mxu0 %v837
    %2864 = vmatpush1.bf16.xpose.msra.mxu0 %v836
    %2865 = vmatprep.subr.bf16.mxu0 0
    %2866 = vmatpush1.bf16.xpose.msra.mxu0 0
    %2867 = vmatprep.subr.bf16.mxu0 0
    %2868 = vmatpush1.bf16.xpose.msra.mxu0 0
    %2869 = vmatprep.subr.bf16.mxu0 0
    %2870 = vmatpush1.bf16.xpose.msra.mxu0 0
    %2871 = vmatprep.subr.bf16.mxu0 0
    %2872 = vmatpush1.bf16.xpose.msra.mxu0 0
    %2873 = vmatprep.subr.bf16.mxu0 0
    %2874 = vmatpush1.bf16.xpose.msra.mxu0 0
    %2875 = vmatprep.subr.bf16.mxu0 0
    %2876 = vmatpush1.bf16.xpose.msra.mxu0 0
    %2877 = vmatprep.subr.bf16.mxu0 0
    %2878 = vmatpush1.bf16.xpose.msra.mxu0 0
    %2879 = vmatprep.subr.bf16.mxu0 0
    %2880 = vmatpush1.bf16.xpose.msra.mxu0 0
    %2881 = vmatprep.subr.bf16.mxu0 0
    %2882 = vmatpush1.bf16.xpose.msra.mxu0 0
    %2883 = vmatprep.subr.bf16.mxu0 0
    %2884 = vmatpush1.bf16.xpose.msra.mxu0 0
    %2885 = vmatprep.subr.bf16.mxu0 0
    %2886 = vmatpush1.bf16.xpose.msra.mxu0 0
    %2887 = vmatprep.subr.bf16.mxu0 0
    %2888 = vmatpush1.bf16.xpose.msra.mxu0 0
    %2889 = vmatprep.subr.bf16.mxu0 0
    %2890 = vmatpush1.bf16.xpose.msra.mxu0 0
    %2891 = vmatprep.subr.bf16.mxu0 0
    %2892 = vmatpush1.bf16.xpose.msra.mxu0 0
    %2893 = vmatprep.subr.bf16.mxu0 0
    %2894 = vmatpush1.bf16.xpose.msra.mxu0 0
    %2895 = vmatprep.mubr.bf16.mxu0 %v1477
    %2896 = vmatmul.mubr.bf16.gmra.mrb[0].mxu0 %v1476
    %v2897 = vpop.f32.mrb[0].mxu0
    %v2898 = vadd.f32 %v2857, %v2897
    %v2899 = vpop.f32.mrb[0].mxu0
    %v2900 = vpop.f32.mrb[0].mxu0
    %v2901 = vadd.f32 %v2860, %v2900
    %v2902 = vpop.f32.mrb[0].mxu0
    %2903 = vdwg.mxu0
    %2904 = vmatprep.subr.bf16.mxu0 %v839
    %2905 = vmatpush1.bf16.xpose.msra.mxu0 %v838
    %2906 = vmatprep.subr.bf16.mxu0 0
    %2907 = vmatpush1.bf16.xpose.msra.mxu0 0
    %2908 = vmatprep.subr.bf16.mxu0 0
    %2909 = vmatpush1.bf16.xpose.msra.mxu0 0
    %2910 = vmatprep.subr.bf16.mxu0 0
    %2911 = vmatpush1.bf16.xpose.msra.mxu0 0
    %2912 = vmatprep.subr.bf16.mxu0 0
    %2913 = vmatpush1.bf16.xpose.msra.mxu0 0
    %2914 = vmatprep.subr.bf16.mxu0 0
    %2915 = vmatpush1.bf16.xpose.msra.mxu0 0
    %2916 = vmatprep.subr.bf16.mxu0 0
    %2917 = vmatpush1.bf16.xpose.msra.mxu0 0
    %2918 = vmatprep.subr.bf16.mxu0 0
    %2919 = vmatpush1.bf16.xpose.msra.mxu0 0
    %2920 = vmatprep.subr.bf16.mxu0 0
    %2921 = vmatpush1.bf16.xpose.msra.mxu0 0
    %2922 = vmatprep.subr.bf16.mxu0 0
    %2923 = vmatpush1.bf16.xpose.msra.mxu0 0
    %2924 = vmatprep.subr.bf16.mxu0 0
    %2925 = vmatpush1.bf16.xpose.msra.mxu0 0
    %2926 = vmatprep.subr.bf16.mxu0 0
    %2927 = vmatpush1.bf16.xpose.msra.mxu0 0
    %2928 = vmatprep.subr.bf16.mxu0 0
    %2929 = vmatpush1.bf16.xpose.msra.mxu0 0
    %2930 = vmatprep.subr.bf16.mxu0 0
    %2931 = vmatpush1.bf16.xpose.msra.mxu0 0
    %2932 = vmatprep.subr.bf16.mxu0 0
    %2933 = vmatpush1.bf16.xpose.msra.mxu0 0
    %2934 = vmatprep.subr.bf16.mxu0 0
    %2935 = vmatpush1.bf16.xpose.msra.mxu0 0
    %2936 = vmatprep.mubr.bf16.mxu0 %v1479
    %2937 = vmatmul.mubr.bf16.gmra.mrb[0].mxu0 %v1478
    %v2938 = vpop.f32.mrb[0].mxu0
    %v2939 = vadd.f32 %v2898, %v2938
    %v2940 = vpop.f32.mrb[0].mxu0
    %v2941 = vpop.f32.mrb[0].mxu0
    %v2942 = vadd.f32 %v2901, %v2941
    %v2943 = vpop.f32.mrb[0].mxu0
    %2944 = vdwg.mxu0
    %2945 = vmatprep.subr.bf16.mxu0 %v841
    %2946 = vmatpush1.bf16.xpose.msra.mxu0 %v840
    %2947 = vmatprep.subr.bf16.mxu0 0
    %2948 = vmatpush1.bf16.xpose.msra.mxu0 0
    %2949 = vmatprep.subr.bf16.mxu0 0
    %2950 = vmatpush1.bf16.xpose.msra.mxu0 0
    %2951 = vmatprep.subr.bf16.mxu0 0
    %2952 = vmatpush1.bf16.xpose.msra.mxu0 0
    %2953 = vmatprep.subr.bf16.mxu0 0
    %2954 = vmatpush1.bf16.xpose.msra.mxu0 0
    %2955 = vmatprep.subr.bf16.mxu0 0
    %2956 = vmatpush1.bf16.xpose.msra.mxu0 0
    %2957 = vmatprep.subr.bf16.mxu0 0
    %2958 = vmatpush1.bf16.xpose.msra.mxu0 0
    %2959 = vmatprep.subr.bf16.mxu0 0
    %2960 = vmatpush1.bf16.xpose.msra.mxu0 0
    %2961 = vmatprep.subr.bf16.mxu0 0
    %2962 = vmatpush1.bf16.xpose.msra.mxu0 0
    %2963 = vmatprep.subr.bf16.mxu0 0
    %2964 = vmatpush1.bf16.xpose.msra.mxu0 0
    %2965 = vmatprep.subr.bf16.mxu0 0
    %2966 = vmatpush1.bf16.xpose.msra.mxu0 0
    %2967 = vmatprep.subr.bf16.mxu0 0
    %2968 = vmatpush1.bf16.xpose.msra.mxu0 0
    %2969 = vmatprep.subr.bf16.mxu0 0
    %2970 = vmatpush1.bf16.xpose.msra.mxu0 0
    %2971 = vmatprep.subr.bf16.mxu0 0
    %2972 = vmatpush1.bf16.xpose.msra.mxu0 0
    %2973 = vmatprep.subr.bf16.mxu0 0
    %2974 = vmatpush1.bf16.xpose.msra.mxu0 0
    %2975 = vmatprep.subr.bf16.mxu0 0
    %2976 = vmatpush1.bf16.xpose.msra.mxu0 0
    %2977 = vmatprep.mubr.bf16.mxu0 %v1481
    %2978 = vmatmul.mubr.bf16.gmra.mrb[0].mxu0 %v1480
    %v2979 = vpop.f32.mrb[0].mxu0
    %v2980 = vadd.f32 %v2939, %v2979
    %v2981 = vpop.f32.mrb[0].mxu0
    %v2982 = vpop.f32.mrb[0].mxu0
    %v2983 = vadd.f32 %v2942, %v2982
    %v2984 = vpop.f32.mrb[0].mxu0
    %2985 = vdwg.mxu0
    %2986 = vmatprep.subr.bf16.mxu0 %v843
    %2987 = vmatpush1.bf16.xpose.msra.mxu0 %v842
    %2988 = vmatprep.subr.bf16.mxu0 0
    %2989 = vmatpush1.bf16.xpose.msra.mxu0 0
    %2990 = vmatprep.subr.bf16.mxu0 0
    %2991 = vmatpush1.bf16.xpose.msra.mxu0 0
    %2992 = vmatprep.subr.bf16.mxu0 0
    %2993 = vmatpush1.bf16.xpose.msra.mxu0 0
    %2994 = vmatprep.subr.bf16.mxu0 0
    %2995 = vmatpush1.bf16.xpose.msra.mxu0 0
    %2996 = vmatprep.subr.bf16.mxu0 0
    %2997 = vmatpush1.bf16.xpose.msra.mxu0 0
    %2998 = vmatprep.subr.bf16.mxu0 0
    %2999 = vmatpush1.bf16.xpose.msra.mxu0 0
    %3000 = vmatprep.subr.bf16.mxu0 0
    %3001 = vmatpush1.bf16.xpose.msra.mxu0 0
    %3002 = vmatprep.subr.bf16.mxu0 0
    %3003 = vmatpush1.bf16.xpose.msra.mxu0 0
    %3004 = vmatprep.subr.bf16.mxu0 0
    %3005 = vmatpush1.bf16.xpose.msra.mxu0 0
    %3006 = vmatprep.subr.bf16.mxu0 0
    %3007 = vmatpush1.bf16.xpose.msra.mxu0 0
    %3008 = vmatprep.subr.bf16.mxu0 0
    %3009 = vmatpush1.bf16.xpose.msra.mxu0 0
    %3010 = vmatprep.subr.bf16.mxu0 0
    %3011 = vmatpush1.bf16.xpose.msra.mxu0 0
    %3012 = vmatprep.subr.bf16.mxu0 0
    %3013 = vmatpush1.bf16.xpose.msra.mxu0 0
    %3014 = vmatprep.subr.bf16.mxu0 0
    %3015 = vmatpush1.bf16.xpose.msra.mxu0 0
    %3016 = vmatprep.subr.bf16.mxu0 0
    %3017 = vmatpush1.bf16.xpose.msra.mxu0 0
    %3018 = vmatprep.mubr.bf16.mxu0 %v1483
    %3019 = vmatmul.mubr.bf16.gmra.mrb[0].mxu0 %v1482
    %v3020 = vpop.f32.mrb[0].mxu0
    %v3021 = vadd.f32 %v2980, %v3020
    %v3022 = vpop.f32.mrb[0].mxu0
    %v3023 = vpop.f32.mrb[0].mxu0
    %v3024 = vadd.f32 %v2983, %v3023
    %v3025 = vpop.f32.mrb[0].mxu0
    %3026 = vdwg.mxu0
    %3027 = vmatprep.subr.bf16.mxu0 %v845
    %3028 = vmatpush1.bf16.xpose.msra.mxu0 %v844
    %3029 = vmatprep.subr.bf16.mxu0 0
    %3030 = vmatpush1.bf16.xpose.msra.mxu0 0
    %3031 = vmatprep.subr.bf16.mxu0 0
    %3032 = vmatpush1.bf16.xpose.msra.mxu0 0
    %3033 = vmatprep.subr.bf16.mxu0 0
    %3034 = vmatpush1.bf16.xpose.msra.mxu0 0
    %3035 = vmatprep.subr.bf16.mxu0 0
    %3036 = vmatpush1.bf16.xpose.msra.mxu0 0
    %3037 = vmatprep.subr.bf16.mxu0 0
    %3038 = vmatpush1.bf16.xpose.msra.mxu0 0
    %3039 = vmatprep.subr.bf16.mxu0 0
    %3040 = vmatpush1.bf16.xpose.msra.mxu0 0
    %3041 = vmatprep.subr.bf16.mxu0 0
    %3042 = vmatpush1.bf16.xpose.msra.mxu0 0
    %3043 = vmatprep.subr.bf16.mxu0 0
    %3044 = vmatpush1.bf16.xpose.msra.mxu0 0
    %3045 = vmatprep.subr.bf16.mxu0 0
    %3046 = vmatpush1.bf16.xpose.msra.mxu0 0
    %3047 = vmatprep.subr.bf16.mxu0 0
    %3048 = vmatpush1.bf16.xpose.msra.mxu0 0
    %3049 = vmatprep.subr.bf16.mxu0 0
    %3050 = vmatpush1.bf16.xpose.msra.mxu0 0
    %3051 = vmatprep.subr.bf16.mxu0 0
    %3052 = vmatpush1.bf16.xpose.msra.mxu0 0
    %3053 = vmatprep.subr.bf16.mxu0 0
    %3054 = vmatpush1.bf16.xpose.msra.mxu0 0
    %3055 = vmatprep.subr.bf16.mxu0 0
    %3056 = vmatpush1.bf16.xpose.msra.mxu0 0
    %3057 = vmatprep.subr.bf16.mxu0 0
    %3058 = vmatpush1.bf16.xpose.msra.mxu0 0
    %3059 = vmatprep.mubr.bf16.mxu0 %v1485
    %3060 = vmatmul.mubr.bf16.gmra.mrb[0].mxu0 %v1484
    %v3061 = vpop.f32.mrb[0].mxu0
    %v3062 = vadd.f32 %v3021, %v3061
    %v3063 = vpop.f32.mrb[0].mxu0
    %v3064 = vpop.f32.mrb[0].mxu0
    %v3065 = vadd.f32 %v3024, %v3064
    %v3066 = vpop.f32.mrb[0].mxu0
    %3067 = vdwg.mxu0
    %3068 = vmatprep.subr.bf16.mxu0 %v847
    %3069 = vmatpush1.bf16.xpose.msra.mxu0 %v846
    %3070 = vmatprep.subr.bf16.mxu0 0
    %3071 = vmatpush1.bf16.xpose.msra.mxu0 0
    %3072 = vmatprep.subr.bf16.mxu0 0
    %3073 = vmatpush1.bf16.xpose.msra.mxu0 0
    %3074 = vmatprep.subr.bf16.mxu0 0
    %3075 = vmatpush1.bf16.xpose.msra.mxu0 0
    %3076 = vmatprep.subr.bf16.mxu0 0
    %3077 = vmatpush1.bf16.xpose.msra.mxu0 0
    %3078 = vmatprep.subr.bf16.mxu0 0
    %3079 = vmatpush1.bf16.xpose.msra.mxu0 0
    %3080 = vmatprep.subr.bf16.mxu0 0
    %3081 = vmatpush1.bf16.xpose.msra.mxu0 0
    %3082 = vmatprep.subr.bf16.mxu0 0
    %3083 = vmatpush1.bf16.xpose.msra.mxu0 0
    %3084 = vmatprep.subr.bf16.mxu0 0
    %3085 = vmatpush1.bf16.xpose.msra.mxu0 0
    %3086 = vmatprep.subr.bf16.mxu0 0
    %3087 = vmatpush1.bf16.xpose.msra.mxu0 0
    %3088 = vmatprep.subr.bf16.mxu0 0
    %3089 = vmatpush1.bf16.xpose.msra.mxu0 0
    %3090 = vmatprep.subr.bf16.mxu0 0
    %3091 = vmatpush1.bf16.xpose.msra.mxu0 0
    %3092 = vmatprep.subr.bf16.mxu0 0
    %3093 = vmatpush1.bf16.xpose.msra.mxu0 0
    %3094 = vmatprep.subr.bf16.mxu0 0
    %3095 = vmatpush1.bf16.xpose.msra.mxu0 0
    %3096 = vmatprep.subr.bf16.mxu0 0
    %3097 = vmatpush1.bf16.xpose.msra.mxu0 0
    %3098 = vmatprep.subr.bf16.mxu0 0
    %3099 = vmatpush1.bf16.xpose.msra.mxu0 0
    %3100 = vmatprep.mubr.bf16.mxu0 %v1487
    %3101 = vmatmul.mubr.bf16.gmra.mrb[0].mxu0 %v1486
    %v3102 = vpop.f32.mrb[0].mxu0
    %v3103 = vadd.f32 %v3062, %v3102
    %v3104 = vpop.f32.mrb[0].mxu0
    %v3105 = vpop.f32.mrb[0].mxu0
    %v3106 = vadd.f32 %v3065, %v3105
    %v3107 = vpop.f32.mrb[0].mxu0
    %3108 = vdwg.mxu0
    %3109 = vmatprep.subr.bf16.mxu0 %v849
    %3110 = vmatpush1.bf16.xpose.msra.mxu0 %v848
    %3111 = vmatprep.subr.bf16.mxu0 0
    %3112 = vmatpush1.bf16.xpose.msra.mxu0 0
    %3113 = vmatprep.subr.bf16.mxu0 0
    %3114 = vmatpush1.bf16.xpose.msra.mxu0 0
    %3115 = vmatprep.subr.bf16.mxu0 0
    %3116 = vmatpush1.bf16.xpose.msra.mxu0 0
    %3117 = vmatprep.subr.bf16.mxu0 0
    %3118 = vmatpush1.bf16.xpose.msra.mxu0 0
    %3119 = vmatprep.subr.bf16.mxu0 0
    %3120 = vmatpush1.bf16.xpose.msra.mxu0 0
    %3121 = vmatprep.subr.bf16.mxu0 0
    %3122 = vmatpush1.bf16.xpose.msra.mxu0 0
    %3123 = vmatprep.subr.bf16.mxu0 0
    %3124 = vmatpush1.bf16.xpose.msra.mxu0 0
    %3125 = vmatprep.subr.bf16.mxu0 0
    %3126 = vmatpush1.bf16.xpose.msra.mxu0 0
    %3127 = vmatprep.subr.bf16.mxu0 0
    %3128 = vmatpush1.bf16.xpose.msra.mxu0 0
    %3129 = vmatprep.subr.bf16.mxu0 0
    %3130 = vmatpush1.bf16.xpose.msra.mxu0 0
    %3131 = vmatprep.subr.bf16.mxu0 0
    %3132 = vmatpush1.bf16.xpose.msra.mxu0 0
    %3133 = vmatprep.subr.bf16.mxu0 0
    %3134 = vmatpush1.bf16.xpose.msra.mxu0 0
    %3135 = vmatprep.subr.bf16.mxu0 0
    %3136 = vmatpush1.bf16.xpose.msra.mxu0 0
    %3137 = vmatprep.subr.bf16.mxu0 0
    %3138 = vmatpush1.bf16.xpose.msra.mxu0 0
    %3139 = vmatprep.subr.bf16.mxu0 0
    %3140 = vmatpush1.bf16.xpose.msra.mxu0 0
    %3141 = vmatprep.mubr.bf16.mxu0 %v1489
    %3142 = vmatmul.mubr.bf16.gmra.mrb[0].mxu0 %v1488
    %v3143 = vpop.f32.mrb[0].mxu0
    %v3144 = vadd.f32 %v3103, %v3143
    %v3145 = vpop.f32.mrb[0].mxu0
    %v3146 = vpop.f32.mrb[0].mxu0
    %v3147 = vadd.f32 %v3106, %v3146
    %v3148 = vpop.f32.mrb[0].mxu0
    %3149 = vdwg.mxu0
    %3150 = vmatprep.subr.bf16.mxu0 %v851
    %3151 = vmatpush1.bf16.xpose.msra.mxu0 %v850
    %3152 = vmatprep.subr.bf16.mxu0 0
    %3153 = vmatpush1.bf16.xpose.msra.mxu0 0
    %3154 = vmatprep.subr.bf16.mxu0 0
    %3155 = vmatpush1.bf16.xpose.msra.mxu0 0
    %3156 = vmatprep.subr.bf16.mxu0 0
    %3157 = vmatpush1.bf16.xpose.msra.mxu0 0
    %3158 = vmatprep.subr.bf16.mxu0 0
    %3159 = vmatpush1.bf16.xpose.msra.mxu0 0
    %3160 = vmatprep.subr.bf16.mxu0 0
    %3161 = vmatpush1.bf16.xpose.msra.mxu0 0
    %3162 = vmatprep.subr.bf16.mxu0 0
    %3163 = vmatpush1.bf16.xpose.msra.mxu0 0
    %3164 = vmatprep.subr.bf16.mxu0 0
    %3165 = vmatpush1.bf16.xpose.msra.mxu0 0
    %3166 = vmatprep.subr.bf16.mxu0 0
    %3167 = vmatpush1.bf16.xpose.msra.mxu0 0
    %3168 = vmatprep.subr.bf16.mxu0 0
    %3169 = vmatpush1.bf16.xpose.msra.mxu0 0
    %3170 = vmatprep.subr.bf16.mxu0 0
    %3171 = vmatpush1.bf16.xpose.msra.mxu0 0
    %3172 = vmatprep.subr.bf16.mxu0 0
    %3173 = vmatpush1.bf16.xpose.msra.mxu0 0
    %3174 = vmatprep.subr.bf16.mxu0 0
    %3175 = vmatpush1.bf16.xpose.msra.mxu0 0
    %3176 = vmatprep.subr.bf16.mxu0 0
    %3177 = vmatpush1.bf16.xpose.msra.mxu0 0
    %3178 = vmatprep.subr.bf16.mxu0 0
    %3179 = vmatpush1.bf16.xpose.msra.mxu0 0
    %3180 = vmatprep.subr.bf16.mxu0 0
    %3181 = vmatpush1.bf16.xpose.msra.mxu0 0
    %3182 = vmatprep.mubr.bf16.mxu0 %v1491
    %3183 = vmatmul.mubr.bf16.gmra.mrb[0].mxu0 %v1490
    %v3184 = vpop.f32.mrb[0].mxu0
    %v3185 = vadd.f32 %v3144, %v3184
    %v3186 = vpop.f32.mrb[0].mxu0
    %v3187 = vpop.f32.mrb[0].mxu0
    %v3188 = vadd.f32 %v3147, %v3187
    %v3189 = vpop.f32.mrb[0].mxu0
    %3190 = vdwg.mxu0
    %3191 = vmatprep.subr.bf16.mxu0 %v853
    %3192 = vmatpush1.bf16.xpose.msra.mxu0 %v852
    %3193 = vmatprep.subr.bf16.mxu0 0
    %3194 = vmatpush1.bf16.xpose.msra.mxu0 0
    %3195 = vmatprep.subr.bf16.mxu0 0
    %3196 = vmatpush1.bf16.xpose.msra.mxu0 0
    %3197 = vmatprep.subr.bf16.mxu0 0
    %3198 = vmatpush1.bf16.xpose.msra.mxu0 0
    %3199 = vmatprep.subr.bf16.mxu0 0
    %3200 = vmatpush1.bf16.xpose.msra.mxu0 0
    %3201 = vmatprep.subr.bf16.mxu0 0
    %3202 = vmatpush1.bf16.xpose.msra.mxu0 0
    %3203 = vmatprep.subr.bf16.mxu0 0
    %3204 = vmatpush1.bf16.xpose.msra.mxu0 0
    %3205 = vmatprep.subr.bf16.mxu0 0
    %3206 = vmatpush1.bf16.xpose.msra.mxu0 0
    %3207 = vmatprep.subr.bf16.mxu0 0
    %3208 = vmatpush1.bf16.xpose.msra.mxu0 0
    %3209 = vmatprep.subr.bf16.mxu0 0
    %3210 = vmatpush1.bf16.xpose.msra.mxu0 0
    %3211 = vmatprep.subr.bf16.mxu0 0
    %3212 = vmatpush1.bf16.xpose.msra.mxu0 0
    %3213 = vmatprep.subr.bf16.mxu0 0
    %3214 = vmatpush1.bf16.xpose.msra.mxu0 0
    %3215 = vmatprep.subr.bf16.mxu0 0
    %3216 = vmatpush1.bf16.xpose.msra.mxu0 0
    %3217 = vmatprep.subr.bf16.mxu0 0
    %3218 = vmatpush1.bf16.xpose.msra.mxu0 0
    %3219 = vmatprep.subr.bf16.mxu0 0
    %3220 = vmatpush1.bf16.xpose.msra.mxu0 0
    %3221 = vmatprep.subr.bf16.mxu0 0
    %3222 = vmatpush1.bf16.xpose.msra.mxu0 0
    %3223 = vmatprep.mubr.bf16.mxu0 %v1493
    %3224 = vmatmul.mubr.bf16.gmra.mrb[0].mxu0 %v1492
    %v3225 = vpop.f32.mrb[0].mxu0
    %v3226 = vadd.f32 %v3185, %v3225
    %v3227 = vpop.f32.mrb[0].mxu0
    %v3228 = vpop.f32.mrb[0].mxu0
    %v3229 = vadd.f32 %v3188, %v3228
    %v3230 = vpop.f32.mrb[0].mxu0
    %3231 = vdwg.mxu0
    %3232 = vmatprep.subr.bf16.mxu0 %v855
    %3233 = vmatpush1.bf16.xpose.msra.mxu0 %v854
    %3234 = vmatprep.subr.bf16.mxu0 0
    %3235 = vmatpush1.bf16.xpose.msra.mxu0 0
    %3236 = vmatprep.subr.bf16.mxu0 0
    %3237 = vmatpush1.bf16.xpose.msra.mxu0 0
    %3238 = vmatprep.subr.bf16.mxu0 0
    %3239 = vmatpush1.bf16.xpose.msra.mxu0 0
    %3240 = vmatprep.subr.bf16.mxu0 0
    %3241 = vmatpush1.bf16.xpose.msra.mxu0 0
    %3242 = vmatprep.subr.bf16.mxu0 0
    %3243 = vmatpush1.bf16.xpose.msra.mxu0 0
    %3244 = vmatprep.subr.bf16.mxu0 0
    %3245 = vmatpush1.bf16.xpose.msra.mxu0 0
    %3246 = vmatprep.subr.bf16.mxu0 0
    %3247 = vmatpush1.bf16.xpose.msra.mxu0 0
    %3248 = vmatprep.subr.bf16.mxu0 0
    %3249 = vmatpush1.bf16.xpose.msra.mxu0 0
    %3250 = vmatprep.subr.bf16.mxu0 0
    %3251 = vmatpush1.bf16.xpose.msra.mxu0 0
    %3252 = vmatprep.subr.bf16.mxu0 0
    %3253 = vmatpush1.bf16.xpose.msra.mxu0 0
    %3254 = vmatprep.subr.bf16.mxu0 0
    %3255 = vmatpush1.bf16.xpose.msra.mxu0 0
    %3256 = vmatprep.subr.bf16.mxu0 0
    %3257 = vmatpush1.bf16.xpose.msra.mxu0 0
    %3258 = vmatprep.subr.bf16.mxu0 0
    %3259 = vmatpush1.bf16.xpose.msra.mxu0 0
    %3260 = vmatprep.subr.bf16.mxu0 0
    %3261 = vmatpush1.bf16.xpose.msra.mxu0 0
    %3262 = vmatprep.subr.bf16.mxu0 0
    %3263 = vmatpush1.bf16.xpose.msra.mxu0 0
    %3264 = vmatprep.mubr.bf16.mxu0 %v1495
    %3265 = vmatmul.mubr.bf16.gmra.mrb[0].mxu0 %v1494
    %v3266 = vpop.f32.mrb[0].mxu0
    %v3267 = vadd.f32 %v3226, %v3266
    %v3268 = vpop.f32.mrb[0].mxu0
    %v3269 = vpop.f32.mrb[0].mxu0
    %v3270 = vadd.f32 %v3229, %v3269
    %v3271 = vpop.f32.mrb[0].mxu0
    %3272 = vdwg.mxu0
    %3273 = vmatprep.subr.bf16.mxu0 %v857
    %3274 = vmatpush1.bf16.xpose.msra.mxu0 %v856
    %3275 = vmatprep.subr.bf16.mxu0 0
    %3276 = vmatpush1.bf16.xpose.msra.mxu0 0
    %3277 = vmatprep.subr.bf16.mxu0 0
    %3278 = vmatpush1.bf16.xpose.msra.mxu0 0
    %3279 = vmatprep.subr.bf16.mxu0 0
    %3280 = vmatpush1.bf16.xpose.msra.mxu0 0
    %3281 = vmatprep.subr.bf16.mxu0 0
    %3282 = vmatpush1.bf16.xpose.msra.mxu0 0
    %3283 = vmatprep.subr.bf16.mxu0 0
    %3284 = vmatpush1.bf16.xpose.msra.mxu0 0
    %3285 = vmatprep.subr.bf16.mxu0 0
    %3286 = vmatpush1.bf16.xpose.msra.mxu0 0
    %3287 = vmatprep.subr.bf16.mxu0 0
    %3288 = vmatpush1.bf16.xpose.msra.mxu0 0
    %3289 = vmatprep.subr.bf16.mxu0 0
    %3290 = vmatpush1.bf16.xpose.msra.mxu0 0
    %3291 = vmatprep.subr.bf16.mxu0 0
    %3292 = vmatpush1.bf16.xpose.msra.mxu0 0
    %3293 = vmatprep.subr.bf16.mxu0 0
    %3294 = vmatpush1.bf16.xpose.msra.mxu0 0
    %3295 = vmatprep.subr.bf16.mxu0 0
    %3296 = vmatpush1.bf16.xpose.msra.mxu0 0
    %3297 = vmatprep.subr.bf16.mxu0 0
    %3298 = vmatpush1.bf16.xpose.msra.mxu0 0
    %3299 = vmatprep.subr.bf16.mxu0 0
    %3300 = vmatpush1.bf16.xpose.msra.mxu0 0
    %3301 = vmatprep.subr.bf16.mxu0 0
    %3302 = vmatpush1.bf16.xpose.msra.mxu0 0
    %3303 = vmatprep.subr.bf16.mxu0 0
    %3304 = vmatpush1.bf16.xpose.msra.mxu0 0
    %3305 = vmatprep.mubr.bf16.mxu0 %v1497
    %3306 = vmatmul.mubr.bf16.gmra.mrb[0].mxu0 %v1496
    %v3307 = vpop.f32.mrb[0].mxu0
    %v3308 = vadd.f32 %v3267, %v3307
    %v3309 = vpop.f32.mrb[0].mxu0
    %v3310 = vpop.f32.mrb[0].mxu0
    %v3311 = vadd.f32 %v3270, %v3310
    %v3312 = vpop.f32.mrb[0].mxu0
    %3313 = vdwg.mxu0
    %3314 = vmatprep.subr.bf16.mxu0 %v859
    %3315 = vmatpush1.bf16.xpose.msra.mxu0 %v858
    %3316 = vmatprep.subr.bf16.mxu0 0
    %3317 = vmatpush1.bf16.xpose.msra.mxu0 0
    %3318 = vmatprep.subr.bf16.mxu0 0
    %3319 = vmatpush1.bf16.xpose.msra.mxu0 0
    %3320 = vmatprep.subr.bf16.mxu0 0
    %3321 = vmatpush1.bf16.xpose.msra.mxu0 0
    %3322 = vmatprep.subr.bf16.mxu0 0
    %3323 = vmatpush1.bf16.xpose.msra.mxu0 0
    %3324 = vmatprep.subr.bf16.mxu0 0
    %3325 = vmatpush1.bf16.xpose.msra.mxu0 0
    %3326 = vmatprep.subr.bf16.mxu0 0
    %3327 = vmatpush1.bf16.xpose.msra.mxu0 0
    %3328 = vmatprep.subr.bf16.mxu0 0
    %3329 = vmatpush1.bf16.xpose.msra.mxu0 0
    %3330 = vmatprep.subr.bf16.mxu0 0
    %3331 = vmatpush1.bf16.xpose.msra.mxu0 0
    %3332 = vmatprep.subr.bf16.mxu0 0
    %3333 = vmatpush1.bf16.xpose.msra.mxu0 0
    %3334 = vmatprep.subr.bf16.mxu0 0
    %3335 = vmatpush1.bf16.xpose.msra.mxu0 0
    %3336 = vmatprep.subr.bf16.mxu0 0
    %3337 = vmatpush1.bf16.xpose.msra.mxu0 0
    %3338 = vmatprep.subr.bf16.mxu0 0
    %3339 = vmatpush1.bf16.xpose.msra.mxu0 0
    %3340 = vmatprep.subr.bf16.mxu0 0
    %3341 = vmatpush1.bf16.xpose.msra.mxu0 0
    %3342 = vmatprep.subr.bf16.mxu0 0
    %3343 = vmatpush1.bf16.xpose.msra.mxu0 0
    %3344 = vmatprep.subr.bf16.mxu0 0
    %3345 = vmatpush1.bf16.xpose.msra.mxu0 0
    %3346 = vmatprep.mubr.bf16.mxu0 %v1499
    %3347 = vmatmul.mubr.bf16.gmra.mrb[0].mxu0 %v1498
    %v3348 = vpop.f32.mrb[0].mxu0
    %v3349 = vadd.f32 %v3308, %v3348
    %v3350 = vpop.f32.mrb[0].mxu0
    %v3351 = vpop.f32.mrb[0].mxu0
    %v3352 = vadd.f32 %v3311, %v3351
    %v3353 = vpop.f32.mrb[0].mxu0
    %3354 = vdwg.mxu0
    %3355 = vmatprep.subr.bf16.mxu0 %v861
    %3356 = vmatpush1.bf16.xpose.msra.mxu0 %v860
    %3357 = vmatprep.subr.bf16.mxu0 0
    %3358 = vmatpush1.bf16.xpose.msra.mxu0 0
    %3359 = vmatprep.subr.bf16.mxu0 0
    %3360 = vmatpush1.bf16.xpose.msra.mxu0 0
    %3361 = vmatprep.subr.bf16.mxu0 0
    %3362 = vmatpush1.bf16.xpose.msra.mxu0 0
    %3363 = vmatprep.subr.bf16.mxu0 0
    %3364 = vmatpush1.bf16.xpose.msra.mxu0 0
    %3365 = vmatprep.subr.bf16.mxu0 0
    %3366 = vmatpush1.bf16.xpose.msra.mxu0 0
    %3367 = vmatprep.subr.bf16.mxu0 0
    %3368 = vmatpush1.bf16.xpose.msra.mxu0 0
    %3369 = vmatprep.subr.bf16.mxu0 0
    %3370 = vmatpush1.bf16.xpose.msra.mxu0 0
    %3371 = vmatprep.subr.bf16.mxu0 0
    %3372 = vmatpush1.bf16.xpose.msra.mxu0 0
    %3373 = vmatprep.subr.bf16.mxu0 0
    %3374 = vmatpush1.bf16.xpose.msra.mxu0 0
    %3375 = vmatprep.subr.bf16.mxu0 0
    %3376 = vmatpush1.bf16.xpose.msra.mxu0 0
    %3377 = vmatprep.subr.bf16.mxu0 0
    %3378 = vmatpush1.bf16.xpose.msra.mxu0 0
    %3379 = vmatprep.subr.bf16.mxu0 0
    %3380 = vmatpush1.bf16.xpose.msra.mxu0 0
    %3381 = vmatprep.subr.bf16.mxu0 0
    %3382 = vmatpush1.bf16.xpose.msra.mxu0 0
    %3383 = vmatprep.subr.bf16.mxu0 0
    %3384 = vmatpush1.bf16.xpose.msra.mxu0 0
    %3385 = vmatprep.subr.bf16.mxu0 0
    %3386 = vmatpush1.bf16.xpose.msra.mxu0 0
    %3387 = vmatprep.mubr.bf16.mxu0 %v1501
    %3388 = vmatmul.mubr.bf16.gmra.mrb[0].mxu0 %v1500
    %v3389 = vpop.f32.mrb[0].mxu0
    %v3390 = vadd.f32 %v3349, %v3389
    %v3391 = vpop.f32.mrb[0].mxu0
    %v3392 = vpop.f32.mrb[0].mxu0
    %v3393 = vadd.f32 %v3352, %v3392
    %v3394 = vpop.f32.mrb[0].mxu0
    %3395 = vdwg.mxu0
    %3396 = vmatprep.subr.bf16.mxu0 %v863
    %3397 = vmatpush1.bf16.xpose.msra.mxu0 %v862
    %3398 = vmatprep.subr.bf16.mxu0 0
    %3399 = vmatpush1.bf16.xpose.msra.mxu0 0
    %3400 = vmatprep.subr.bf16.mxu0 0
    %3401 = vmatpush1.bf16.xpose.msra.mxu0 0
    %3402 = vmatprep.subr.bf16.mxu0 0
    %3403 = vmatpush1.bf16.xpose.msra.mxu0 0
    %3404 = vmatprep.subr.bf16.mxu0 0
    %3405 = vmatpush1.bf16.xpose.msra.mxu0 0
    %3406 = vmatprep.subr.bf16.mxu0 0
    %3407 = vmatpush1.bf16.xpose.msra.mxu0 0
    %3408 = vmatprep.subr.bf16.mxu0 0
    %3409 = vmatpush1.bf16.xpose.msra.mxu0 0
    %3410 = vmatprep.subr.bf16.mxu0 0
    %3411 = vmatpush1.bf16.xpose.msra.mxu0 0
    %3412 = vmatprep.subr.bf16.mxu0 0
    %3413 = vmatpush1.bf16.xpose.msra.mxu0 0
    %3414 = vmatprep.subr.bf16.mxu0 0
    %3415 = vmatpush1.bf16.xpose.msra.mxu0 0
    %3416 = vmatprep.subr.bf16.mxu0 0
    %3417 = vmatpush1.bf16.xpose.msra.mxu0 0
    %3418 = vmatprep.subr.bf16.mxu0 0
    %3419 = vmatpush1.bf16.xpose.msra.mxu0 0
    %3420 = vmatprep.subr.bf16.mxu0 0
    %3421 = vmatpush1.bf16.xpose.msra.mxu0 0
    %3422 = vmatprep.subr.bf16.mxu0 0
    %3423 = vmatpush1.bf16.xpose.msra.mxu0 0
    %3424 = vmatprep.subr.bf16.mxu0 0
    %3425 = vmatpush1.bf16.xpose.msra.mxu0 0
    %3426 = vmatprep.subr.bf16.mxu0 0
    %3427 = vmatpush1.bf16.xpose.msra.mxu0 0
    %3428 = vmatprep.mubr.bf16.mxu0 %v1503
    %3429 = vmatmul.mubr.bf16.gmra.mrb[0].mxu0 %v1502
    %v3430 = vpop.f32.mrb[0].mxu0
    %v3431 = vadd.f32 %v3390, %v3430
    %v3432 = vpop.f32.mrb[0].mxu0
    %v3433 = vpop.f32.mrb[0].mxu0
    %v3434 = vadd.f32 %v3393, %v3433
    %v3435 = vpop.f32.mrb[0].mxu0
    %3436 = vdwg.mxu0
    %3437 = vmatprep.subr.bf16.mxu0 %v865
    %3438 = vmatpush1.bf16.xpose.msra.mxu0 %v864
    %3439 = vmatprep.subr.bf16.mxu0 0
    %3440 = vmatpush1.bf16.xpose.msra.mxu0 0
    %3441 = vmatprep.subr.bf16.mxu0 0
    %3442 = vmatpush1.bf16.xpose.msra.mxu0 0
    %3443 = vmatprep.subr.bf16.mxu0 0
    %3444 = vmatpush1.bf16.xpose.msra.mxu0 0
    %3445 = vmatprep.subr.bf16.mxu0 0
    %3446 = vmatpush1.bf16.xpose.msra.mxu0 0
    %3447 = vmatprep.subr.bf16.mxu0 0
    %3448 = vmatpush1.bf16.xpose.msra.mxu0 0
    %3449 = vmatprep.subr.bf16.mxu0 0
    %3450 = vmatpush1.bf16.xpose.msra.mxu0 0
    %3451 = vmatprep.subr.bf16.mxu0 0
    %3452 = vmatpush1.bf16.xpose.msra.mxu0 0
    %3453 = vmatprep.subr.bf16.mxu0 0
    %3454 = vmatpush1.bf16.xpose.msra.mxu0 0
    %3455 = vmatprep.subr.bf16.mxu0 0
    %3456 = vmatpush1.bf16.xpose.msra.mxu0 0
    %3457 = vmatprep.subr.bf16.mxu0 0
    %3458 = vmatpush1.bf16.xpose.msra.mxu0 0
    %3459 = vmatprep.subr.bf16.mxu0 0
    %3460 = vmatpush1.bf16.xpose.msra.mxu0 0
    %3461 = vmatprep.subr.bf16.mxu0 0
    %3462 = vmatpush1.bf16.xpose.msra.mxu0 0
    %3463 = vmatprep.subr.bf16.mxu0 0
    %3464 = vmatpush1.bf16.xpose.msra.mxu0 0
    %3465 = vmatprep.subr.bf16.mxu0 0
    %3466 = vmatpush1.bf16.xpose.msra.mxu0 0
    %3467 = vmatprep.subr.bf16.mxu0 0
    %3468 = vmatpush1.bf16.xpose.msra.mxu0 0
    %3469 = vmatprep.mubr.bf16.mxu0 %v1505
    %3470 = vmatmul.mubr.bf16.gmra.mrb[0].mxu0 %v1504
    %v3471 = vpop.f32.mrb[0].mxu0
    %v3472 = vadd.f32 %v3431, %v3471
    %v3473 = vpop.f32.mrb[0].mxu0
    %v3474 = vpop.f32.mrb[0].mxu0
    %v3475 = vadd.f32 %v3434, %v3474
    %v3476 = vpop.f32.mrb[0].mxu0
    %3477 = vdwg.mxu0
    %3478 = vmatprep.subr.bf16.mxu0 %v867
    %3479 = vmatpush1.bf16.xpose.msra.mxu0 %v866
    %3480 = vmatprep.subr.bf16.mxu0 0
    %3481 = vmatpush1.bf16.xpose.msra.mxu0 0
    %3482 = vmatprep.subr.bf16.mxu0 0
    %3483 = vmatpush1.bf16.xpose.msra.mxu0 0
    %3484 = vmatprep.subr.bf16.mxu0 0
    %3485 = vmatpush1.bf16.xpose.msra.mxu0 0
    %3486 = vmatprep.subr.bf16.mxu0 0
    %3487 = vmatpush1.bf16.xpose.msra.mxu0 0
    %3488 = vmatprep.subr.bf16.mxu0 0
    %3489 = vmatpush1.bf16.xpose.msra.mxu0 0
    %3490 = vmatprep.subr.bf16.mxu0 0
    %3491 = vmatpush1.bf16.xpose.msra.mxu0 0
    %3492 = vmatprep.subr.bf16.mxu0 0
    %3493 = vmatpush1.bf16.xpose.msra.mxu0 0
    %3494 = vmatprep.subr.bf16.mxu0 0
    %3495 = vmatpush1.bf16.xpose.msra.mxu0 0
    %3496 = vmatprep.subr.bf16.mxu0 0
    %3497 = vmatpush1.bf16.xpose.msra.mxu0 0
    %3498 = vmatprep.subr.bf16.mxu0 0
    %3499 = vmatpush1.bf16.xpose.msra.mxu0 0
    %3500 = vmatprep.subr.bf16.mxu0 0
    %3501 = vmatpush1.bf16.xpose.msra.mxu0 0
    %3502 = vmatprep.subr.bf16.mxu0 0
    %3503 = vmatpush1.bf16.xpose.msra.mxu0 0
    %3504 = vmatprep.subr.bf16.mxu0 0
    %3505 = vmatpush1.bf16.xpose.msra.mxu0 0
    %3506 = vmatprep.subr.bf16.mxu0 0
    %3507 = vmatpush1.bf16.xpose.msra.mxu0 0
    %3508 = vmatprep.subr.bf16.mxu0 0
    %3509 = vmatpush1.bf16.xpose.msra.mxu0 0
    %3510 = vmatprep.mubr.bf16.mxu0 %v1507
    %3511 = vmatmul.mubr.bf16.gmra.mrb[0].mxu0 %v1506
    %v3512 = vpop.f32.mrb[0].mxu0
    %v3513 = vadd.f32 %v3472, %v3512
    %v3514 = vpop.f32.mrb[0].mxu0
    %v3515 = vpop.f32.mrb[0].mxu0
    %v3516 = vadd.f32 %v3475, %v3515
    %v3517 = vpop.f32.mrb[0].mxu0
    %3518 = vdwg.mxu0
    %3519 = vmatprep.subr.bf16.mxu0 %v869
    %3520 = vmatpush1.bf16.xpose.msra.mxu0 %v868
    %3521 = vmatprep.subr.bf16.mxu0 0
    %3522 = vmatpush1.bf16.xpose.msra.mxu0 0
    %3523 = vmatprep.subr.bf16.mxu0 0
    %3524 = vmatpush1.bf16.xpose.msra.mxu0 0
    %3525 = vmatprep.subr.bf16.mxu0 0
    %3526 = vmatpush1.bf16.xpose.msra.mxu0 0
    %3527 = vmatprep.subr.bf16.mxu0 0
    %3528 = vmatpush1.bf16.xpose.msra.mxu0 0
    %3529 = vmatprep.subr.bf16.mxu0 0
    %3530 = vmatpush1.bf16.xpose.msra.mxu0 0
    %3531 = vmatprep.subr.bf16.mxu0 0
    %3532 = vmatpush1.bf16.xpose.msra.mxu0 0
    %3533 = vmatprep.subr.bf16.mxu0 0
    %3534 = vmatpush1.bf16.xpose.msra.mxu0 0
    %3535 = vmatprep.subr.bf16.mxu0 0
    %3536 = vmatpush1.bf16.xpose.msra.mxu0 0
    %3537 = vmatprep.subr.bf16.mxu0 0
    %3538 = vmatpush1.bf16.xpose.msra.mxu0 0
    %3539 = vmatprep.subr.bf16.mxu0 0
    %3540 = vmatpush1.bf16.xpose.msra.mxu0 0
    %3541 = vmatprep.subr.bf16.mxu0 0
    %3542 = vmatpush1.bf16.xpose.msra.mxu0 0
    %3543 = vmatprep.subr.bf16.mxu0 0
    %3544 = vmatpush1.bf16.xpose.msra.mxu0 0
    %3545 = vmatprep.subr.bf16.mxu0 0
    %3546 = vmatpush1.bf16.xpose.msra.mxu0 0
    %3547 = vmatprep.subr.bf16.mxu0 0
    %3548 = vmatpush1.bf16.xpose.msra.mxu0 0
    %3549 = vmatprep.subr.bf16.mxu0 0
    %3550 = vmatpush1.bf16.xpose.msra.mxu0 0
    %3551 = vmatprep.mubr.bf16.mxu0 %v1509
    %3552 = vmatmul.mubr.bf16.gmra.mrb[0].mxu0 %v1508
    %v3553 = vpop.f32.mrb[0].mxu0
    %v3554 = vadd.f32 %v3513, %v3553
    %v3555 = vpop.f32.mrb[0].mxu0
    %v3556 = vpop.f32.mrb[0].mxu0
    %v3557 = vadd.f32 %v3516, %v3556
    %v3558 = vpop.f32.mrb[0].mxu0
    %3559 = vdwg.mxu0
    %3560 = vmatprep.subr.bf16.mxu0 %v871
    %3561 = vmatpush1.bf16.xpose.msra.mxu0 %v870
    %3562 = vmatprep.subr.bf16.mxu0 0
    %3563 = vmatpush1.bf16.xpose.msra.mxu0 0
    %3564 = vmatprep.subr.bf16.mxu0 0
    %3565 = vmatpush1.bf16.xpose.msra.mxu0 0
    %3566 = vmatprep.subr.bf16.mxu0 0
    %3567 = vmatpush1.bf16.xpose.msra.mxu0 0
    %3568 = vmatprep.subr.bf16.mxu0 0
    %3569 = vmatpush1.bf16.xpose.msra.mxu0 0
    %3570 = vmatprep.subr.bf16.mxu0 0
    %3571 = vmatpush1.bf16.xpose.msra.mxu0 0
    %3572 = vmatprep.subr.bf16.mxu0 0
    %3573 = vmatpush1.bf16.xpose.msra.mxu0 0
    %3574 = vmatprep.subr.bf16.mxu0 0
    %3575 = vmatpush1.bf16.xpose.msra.mxu0 0
    %3576 = vmatprep.subr.bf16.mxu0 0
    %3577 = vmatpush1.bf16.xpose.msra.mxu0 0
    %3578 = vmatprep.subr.bf16.mxu0 0
    %3579 = vmatpush1.bf16.xpose.msra.mxu0 0
    %3580 = vmatprep.subr.bf16.mxu0 0
    %3581 = vmatpush1.bf16.xpose.msra.mxu0 0
    %3582 = vmatprep.subr.bf16.mxu0 0
    %3583 = vmatpush1.bf16.xpose.msra.mxu0 0
    %3584 = vmatprep.subr.bf16.mxu0 0
    %3585 = vmatpush1.bf16.xpose.msra.mxu0 0
    %3586 = vmatprep.subr.bf16.mxu0 0
    %3587 = vmatpush1.bf16.xpose.msra.mxu0 0
    %3588 = vmatprep.subr.bf16.mxu0 0
    %3589 = vmatpush1.bf16.xpose.msra.mxu0 0
    %3590 = vmatprep.subr.bf16.mxu0 0
    %3591 = vmatpush1.bf16.xpose.msra.mxu0 0
    %3592 = vmatprep.mubr.bf16.mxu0 %v1511
    %3593 = vmatmul.mubr.bf16.gmra.mrb[0].mxu0 %v1510
    %v3594 = vpop.f32.mrb[0].mxu0
    %v3595 = vadd.f32 %v3554, %v3594
    %v3596 = vpop.f32.mrb[0].mxu0
    %v3597 = vpop.f32.mrb[0].mxu0
    %v3598 = vadd.f32 %v3557, %v3597
    %v3599 = vpop.f32.mrb[0].mxu0
    %3600 = vdwg.mxu0
    %3601 = vmatprep.subr.bf16.mxu0 %v873
    %3602 = vmatpush1.bf16.xpose.msra.mxu0 %v872
    %3603 = vmatprep.subr.bf16.mxu0 0
    %3604 = vmatpush1.bf16.xpose.msra.mxu0 0
    %3605 = vmatprep.subr.bf16.mxu0 0
    %3606 = vmatpush1.bf16.xpose.msra.mxu0 0
    %3607 = vmatprep.subr.bf16.mxu0 0
    %3608 = vmatpush1.bf16.xpose.msra.mxu0 0
    %3609 = vmatprep.subr.bf16.mxu0 0
    %3610 = vmatpush1.bf16.xpose.msra.mxu0 0
    %3611 = vmatprep.subr.bf16.mxu0 0
    %3612 = vmatpush1.bf16.xpose.msra.mxu0 0
    %3613 = vmatprep.subr.bf16.mxu0 0
    %3614 = vmatpush1.bf16.xpose.msra.mxu0 0
    %3615 = vmatprep.subr.bf16.mxu0 0
    %3616 = vmatpush1.bf16.xpose.msra.mxu0 0
    %3617 = vmatprep.subr.bf16.mxu0 0
    %3618 = vmatpush1.bf16.xpose.msra.mxu0 0
    %3619 = vmatprep.subr.bf16.mxu0 0
    %3620 = vmatpush1.bf16.xpose.msra.mxu0 0
    %3621 = vmatprep.subr.bf16.mxu0 0
    %3622 = vmatpush1.bf16.xpose.msra.mxu0 0
    %3623 = vmatprep.subr.bf16.mxu0 0
    %3624 = vmatpush1.bf16.xpose.msra.mxu0 0
    %3625 = vmatprep.subr.bf16.mxu0 0
    %3626 = vmatpush1.bf16.xpose.msra.mxu0 0
    %3627 = vmatprep.subr.bf16.mxu0 0
    %3628 = vmatpush1.bf16.xpose.msra.mxu0 0
    %3629 = vmatprep.subr.bf16.mxu0 0
    %3630 = vmatpush1.bf16.xpose.msra.mxu0 0
    %3631 = vmatprep.subr.bf16.mxu0 0
    %3632 = vmatpush1.bf16.xpose.msra.mxu0 0
    %3633 = vmatprep.mubr.bf16.mxu0 %v1513
    %3634 = vmatmul.mubr.bf16.gmra.mrb[0].mxu0 %v1512
    %v3635 = vpop.f32.mrb[0].mxu0
    %v3636 = vadd.f32 %v3595, %v3635
    %v3637 = vpop.f32.mrb[0].mxu0
    %v3638 = vpop.f32.mrb[0].mxu0
    %v3639 = vadd.f32 %v3598, %v3638
    %v3640 = vpop.f32.mrb[0].mxu0
    %3641 = vdwg.mxu0
    %3642 = vmatprep.subr.bf16.mxu0 %v875
    %3643 = vmatpush1.bf16.xpose.msra.mxu0 %v874
    %3644 = vmatprep.subr.bf16.mxu0 0
    %3645 = vmatpush1.bf16.xpose.msra.mxu0 0
    %3646 = vmatprep.subr.bf16.mxu0 0
    %3647 = vmatpush1.bf16.xpose.msra.mxu0 0
    %3648 = vmatprep.subr.bf16.mxu0 0
    %3649 = vmatpush1.bf16.xpose.msra.mxu0 0
    %3650 = vmatprep.subr.bf16.mxu0 0
    %3651 = vmatpush1.bf16.xpose.msra.mxu0 0
    %3652 = vmatprep.subr.bf16.mxu0 0
    %3653 = vmatpush1.bf16.xpose.msra.mxu0 0
    %3654 = vmatprep.subr.bf16.mxu0 0
    %3655 = vmatpush1.bf16.xpose.msra.mxu0 0
    %3656 = vmatprep.subr.bf16.mxu0 0
    %3657 = vmatpush1.bf16.xpose.msra.mxu0 0
    %3658 = vmatprep.subr.bf16.mxu0 0
    %3659 = vmatpush1.bf16.xpose.msra.mxu0 0
    %3660 = vmatprep.subr.bf16.mxu0 0
    %3661 = vmatpush1.bf16.xpose.msra.mxu0 0
    %3662 = vmatprep.subr.bf16.mxu0 0
    %3663 = vmatpush1.bf16.xpose.msra.mxu0 0
    %3664 = vmatprep.subr.bf16.mxu0 0
    %3665 = vmatpush1.bf16.xpose.msra.mxu0 0
    %3666 = vmatprep.subr.bf16.mxu0 0
    %3667 = vmatpush1.bf16.xpose.msra.mxu0 0
    %3668 = vmatprep.subr.bf16.mxu0 0
    %3669 = vmatpush1.bf16.xpose.msra.mxu0 0
    %3670 = vmatprep.subr.bf16.mxu0 0
    %3671 = vmatpush1.bf16.xpose.msra.mxu0 0
    %3672 = vmatprep.subr.bf16.mxu0 0
    %3673 = vmatpush1.bf16.xpose.msra.mxu0 0
    %3674 = vmatprep.mubr.bf16.mxu0 %v1515
    %3675 = vmatmul.mubr.bf16.gmra.mrb[0].mxu0 %v1514
    %v3676 = vpop.f32.mrb[0].mxu0
    %v3677 = vadd.f32 %v3636, %v3676
    %v3678 = vpop.f32.mrb[0].mxu0
    %v3679 = vpop.f32.mrb[0].mxu0
    %v3680 = vadd.f32 %v3639, %v3679
    %v3681 = vpop.f32.mrb[0].mxu0
    %3682 = vdwg.mxu0
    %3683 = vmatprep.subr.bf16.mxu0 %v877
    %3684 = vmatpush1.bf16.xpose.msra.mxu0 %v876
    %3685 = vmatprep.subr.bf16.mxu0 0
    %3686 = vmatpush1.bf16.xpose.msra.mxu0 0
    %3687 = vmatprep.subr.bf16.mxu0 0
    %3688 = vmatpush1.bf16.xpose.msra.mxu0 0
    %3689 = vmatprep.subr.bf16.mxu0 0
    %3690 = vmatpush1.bf16.xpose.msra.mxu0 0
    %3691 = vmatprep.subr.bf16.mxu0 0
    %3692 = vmatpush1.bf16.xpose.msra.mxu0 0
    %3693 = vmatprep.subr.bf16.mxu0 0
    %3694 = vmatpush1.bf16.xpose.msra.mxu0 0
    %3695 = vmatprep.subr.bf16.mxu0 0
    %3696 = vmatpush1.bf16.xpose.msra.mxu0 0
    %3697 = vmatprep.subr.bf16.mxu0 0
    %3698 = vmatpush1.bf16.xpose.msra.mxu0 0
    %3699 = vmatprep.subr.bf16.mxu0 0
    %3700 = vmatpush1.bf16.xpose.msra.mxu0 0
    %3701 = vmatprep.subr.bf16.mxu0 0
    %3702 = vmatpush1.bf16.xpose.msra.mxu0 0
    %3703 = vmatprep.subr.bf16.mxu0 0
    %3704 = vmatpush1.bf16.xpose.msra.mxu0 0
    %3705 = vmatprep.subr.bf16.mxu0 0
    %3706 = vmatpush1.bf16.xpose.msra.mxu0 0
    %3707 = vmatprep.subr.bf16.mxu0 0
    %3708 = vmatpush1.bf16.xpose.msra.mxu0 0
    %3709 = vmatprep.subr.bf16.mxu0 0
    %3710 = vmatpush1.bf16.xpose.msra.mxu0 0
    %3711 = vmatprep.subr.bf16.mxu0 0
    %3712 = vmatpush1.bf16.xpose.msra.mxu0 0
    %3713 = vmatprep.subr.bf16.mxu0 0
    %3714 = vmatpush1.bf16.xpose.msra.mxu0 0
    %3715 = vmatprep.mubr.bf16.mxu0 %v1517
    %3716 = vmatmul.mubr.bf16.gmra.mrb[0].mxu0 %v1516
    %v3717 = vpop.f32.mrb[0].mxu0
    %v3718 = vadd.f32 %v3677, %v3717
    %v3719 = vpop.f32.mrb[0].mxu0
    %v3720 = vpop.f32.mrb[0].mxu0
    %v3721 = vadd.f32 %v3680, %v3720
    %v3722 = vpop.f32.mrb[0].mxu0
    %3723 = vdwg.mxu0
    %3724 = vmatprep.subr.bf16.mxu0 %v879
    %3725 = vmatpush1.bf16.xpose.msra.mxu0 %v878
    %3726 = vmatprep.subr.bf16.mxu0 0
    %3727 = vmatpush1.bf16.xpose.msra.mxu0 0
    %3728 = vmatprep.subr.bf16.mxu0 0
    %3729 = vmatpush1.bf16.xpose.msra.mxu0 0
    %3730 = vmatprep.subr.bf16.mxu0 0
    %3731 = vmatpush1.bf16.xpose.msra.mxu0 0
    %3732 = vmatprep.subr.bf16.mxu0 0
    %3733 = vmatpush1.bf16.xpose.msra.mxu0 0
    %3734 = vmatprep.subr.bf16.mxu0 0
    %3735 = vmatpush1.bf16.xpose.msra.mxu0 0
    %3736 = vmatprep.subr.bf16.mxu0 0
    %3737 = vmatpush1.bf16.xpose.msra.mxu0 0
    %3738 = vmatprep.subr.bf16.mxu0 0
    %3739 = vmatpush1.bf16.xpose.msra.mxu0 0
    %3740 = vmatprep.subr.bf16.mxu0 0
    %3741 = vmatpush1.bf16.xpose.msra.mxu0 0
    %3742 = vmatprep.subr.bf16.mxu0 0
    %3743 = vmatpush1.bf16.xpose.msra.mxu0 0
    %3744 = vmatprep.subr.bf16.mxu0 0
    %3745 = vmatpush1.bf16.xpose.msra.mxu0 0
    %3746 = vmatprep.subr.bf16.mxu0 0
    %3747 = vmatpush1.bf16.xpose.msra.mxu0 0
    %3748 = vmatprep.subr.bf16.mxu0 0
    %3749 = vmatpush1.bf16.xpose.msra.mxu0 0
    %3750 = vmatprep.subr.bf16.mxu0 0
    %3751 = vmatpush1.bf16.xpose.msra.mxu0 0
    %3752 = vmatprep.subr.bf16.mxu0 0
    %3753 = vmatpush1.bf16.xpose.msra.mxu0 0
    %3754 = vmatprep.subr.bf16.mxu0 0
    %3755 = vmatpush1.bf16.xpose.msra.mxu0 0
    %3756 = vmatprep.mubr.bf16.mxu0 %v1519
    %3757 = vmatmul.mubr.bf16.gmra.mrb[0].mxu0 %v1518
    %v3758 = vpop.f32.mrb[0].mxu0
    %v3759 = vadd.f32 %v3718, %v3758
    %v3760 = vpop.f32.mrb[0].mxu0
    %v3761 = vpop.f32.mrb[0].mxu0
    %v3762 = vadd.f32 %v3721, %v3761
    %v3763 = vpop.f32.mrb[0].mxu0
    %3764 = vdwg.mxu0
    %3765 = vmatprep.subr.bf16.mxu0 %v881
    %3766 = vmatpush1.bf16.xpose.msra.mxu0 %v880
    %3767 = vmatprep.subr.bf16.mxu0 0
    %3768 = vmatpush1.bf16.xpose.msra.mxu0 0
    %3769 = vmatprep.subr.bf16.mxu0 0
    %3770 = vmatpush1.bf16.xpose.msra.mxu0 0
    %3771 = vmatprep.subr.bf16.mxu0 0
    %3772 = vmatpush1.bf16.xpose.msra.mxu0 0
    %3773 = vmatprep.subr.bf16.mxu0 0
    %3774 = vmatpush1.bf16.xpose.msra.mxu0 0
    %3775 = vmatprep.subr.bf16.mxu0 0
    %3776 = vmatpush1.bf16.xpose.msra.mxu0 0
    %3777 = vmatprep.subr.bf16.mxu0 0
    %3778 = vmatpush1.bf16.xpose.msra.mxu0 0
    %3779 = vmatprep.subr.bf16.mxu0 0
    %3780 = vmatpush1.bf16.xpose.msra.mxu0 0
    %3781 = vmatprep.subr.bf16.mxu0 0
    %3782 = vmatpush1.bf16.xpose.msra.mxu0 0
    %3783 = vmatprep.subr.bf16.mxu0 0
    %3784 = vmatpush1.bf16.xpose.msra.mxu0 0
    %3785 = vmatprep.subr.bf16.mxu0 0
    %3786 = vmatpush1.bf16.xpose.msra.mxu0 0
    %3787 = vmatprep.subr.bf16.mxu0 0
    %3788 = vmatpush1.bf16.xpose.msra.mxu0 0
    %3789 = vmatprep.subr.bf16.mxu0 0
    %3790 = vmatpush1.bf16.xpose.msra.mxu0 0
    %3791 = vmatprep.subr.bf16.mxu0 0
    %3792 = vmatpush1.bf16.xpose.msra.mxu0 0
    %3793 = vmatprep.subr.bf16.mxu0 0
    %3794 = vmatpush1.bf16.xpose.msra.mxu0 0
    %3795 = vmatprep.subr.bf16.mxu0 0
    %3796 = vmatpush1.bf16.xpose.msra.mxu0 0
    %3797 = vmatprep.mubr.bf16.mxu0 %v1521
    %3798 = vmatmul.mubr.bf16.gmra.mrb[0].mxu0 %v1520
    %v3799 = vpop.f32.mrb[0].mxu0
    %v3800 = vadd.f32 %v3759, %v3799
    %v3801 = vpop.f32.mrb[0].mxu0
    %v3802 = vpop.f32.mrb[0].mxu0
    %v3803 = vadd.f32 %v3762, %v3802
    %v3804 = vpop.f32.mrb[0].mxu0
    %3805 = vdwg.mxu0
    %3806 = vmatprep.subr.bf16.mxu0 %v883
    %3807 = vmatpush1.bf16.xpose.msra.mxu0 %v882
    %3808 = vmatprep.subr.bf16.mxu0 0
    %3809 = vmatpush1.bf16.xpose.msra.mxu0 0
    %3810 = vmatprep.subr.bf16.mxu0 0
    %3811 = vmatpush1.bf16.xpose.msra.mxu0 0
    %3812 = vmatprep.subr.bf16.mxu0 0
    %3813 = vmatpush1.bf16.xpose.msra.mxu0 0
    %3814 = vmatprep.subr.bf16.mxu0 0
    %3815 = vmatpush1.bf16.xpose.msra.mxu0 0
    %3816 = vmatprep.subr.bf16.mxu0 0
    %3817 = vmatpush1.bf16.xpose.msra.mxu0 0
    %3818 = vmatprep.subr.bf16.mxu0 0
    %3819 = vmatpush1.bf16.xpose.msra.mxu0 0
    %3820 = vmatprep.subr.bf16.mxu0 0
    %3821 = vmatpush1.bf16.xpose.msra.mxu0 0
    %3822 = vmatprep.subr.bf16.mxu0 0
    %3823 = vmatpush1.bf16.xpose.msra.mxu0 0
    %3824 = vmatprep.subr.bf16.mxu0 0
    %3825 = vmatpush1.bf16.xpose.msra.mxu0 0
    %3826 = vmatprep.subr.bf16.mxu0 0
    %3827 = vmatpush1.bf16.xpose.msra.mxu0 0
    %3828 = vmatprep.subr.bf16.mxu0 0
    %3829 = vmatpush1.bf16.xpose.msra.mxu0 0
    %3830 = vmatprep.subr.bf16.mxu0 0
    %3831 = vmatpush1.bf16.xpose.msra.mxu0 0
    %3832 = vmatprep.subr.bf16.mxu0 0
    %3833 = vmatpush1.bf16.xpose.msra.mxu0 0
    %3834 = vmatprep.subr.bf16.mxu0 0
    %3835 = vmatpush1.bf16.xpose.msra.mxu0 0
    %3836 = vmatprep.subr.bf16.mxu0 0
    %3837 = vmatpush1.bf16.xpose.msra.mxu0 0
    %3838 = vmatprep.mubr.bf16.mxu0 %v1523
    %3839 = vmatmul.mubr.bf16.gmra.mrb[0].mxu0 %v1522
    %v3840 = vpop.f32.mrb[0].mxu0
    %v3841 = vadd.f32 %v3800, %v3840
    %v3842 = vpop.f32.mrb[0].mxu0
    %v3843 = vpop.f32.mrb[0].mxu0
    %v3844 = vadd.f32 %v3803, %v3843
    %v3845 = vpop.f32.mrb[0].mxu0
    %3846 = vdwg.mxu0
    %3847 = vmatprep.subr.bf16.mxu0 %v885
    %3848 = vmatpush1.bf16.xpose.msra.mxu0 %v884
    %3849 = vmatprep.subr.bf16.mxu0 0
    %3850 = vmatpush1.bf16.xpose.msra.mxu0 0
    %3851 = vmatprep.subr.bf16.mxu0 0
    %3852 = vmatpush1.bf16.xpose.msra.mxu0 0
    %3853 = vmatprep.subr.bf16.mxu0 0
    %3854 = vmatpush1.bf16.xpose.msra.mxu0 0
    %3855 = vmatprep.subr.bf16.mxu0 0
    %3856 = vmatpush1.bf16.xpose.msra.mxu0 0
    %3857 = vmatprep.subr.bf16.mxu0 0
    %3858 = vmatpush1.bf16.xpose.msra.mxu0 0
    %3859 = vmatprep.subr.bf16.mxu0 0
    %3860 = vmatpush1.bf16.xpose.msra.mxu0 0
    %3861 = vmatprep.subr.bf16.mxu0 0
    %3862 = vmatpush1.bf16.xpose.msra.mxu0 0
    %3863 = vmatprep.subr.bf16.mxu0 0
    %3864 = vmatpush1.bf16.xpose.msra.mxu0 0
    %3865 = vmatprep.subr.bf16.mxu0 0
    %3866 = vmatpush1.bf16.xpose.msra.mxu0 0
    %3867 = vmatprep.subr.bf16.mxu0 0
    %3868 = vmatpush1.bf16.xpose.msra.mxu0 0
    %3869 = vmatprep.subr.bf16.mxu0 0
    %3870 = vmatpush1.bf16.xpose.msra.mxu0 0
    %3871 = vmatprep.subr.bf16.mxu0 0
    %3872 = vmatpush1.bf16.xpose.msra.mxu0 0
    %3873 = vmatprep.subr.bf16.mxu0 0
    %3874 = vmatpush1.bf16.xpose.msra.mxu0 0
    %3875 = vmatprep.subr.bf16.mxu0 0
    %3876 = vmatpush1.bf16.xpose.msra.mxu0 0
    %3877 = vmatprep.subr.bf16.mxu0 0
    %3878 = vmatpush1.bf16.xpose.msra.mxu0 0
    %3879 = vmatprep.mubr.bf16.mxu0 %v1525
    %3880 = vmatmul.mubr.bf16.gmra.mrb[0].mxu0 %v1524
    %v3881 = vpop.f32.mrb[0].mxu0
    %v3882 = vadd.f32 %v3841, %v3881
    %v3883 = vpop.f32.mrb[0].mxu0
    %v3884 = vpop.f32.mrb[0].mxu0
    %v3885 = vadd.f32 %v3844, %v3884
    %v3886 = vpop.f32.mrb[0].mxu0
    %3887 = vdwg.mxu0
    %3888 = vmatprep.subr.bf16.mxu0 %v887
    %3889 = vmatpush1.bf16.xpose.msra.mxu0 %v886
    %3890 = vmatprep.subr.bf16.mxu0 0
    %3891 = vmatpush1.bf16.xpose.msra.mxu0 0
    %3892 = vmatprep.subr.bf16.mxu0 0
    %3893 = vmatpush1.bf16.xpose.msra.mxu0 0
    %3894 = vmatprep.subr.bf16.mxu0 0
    %3895 = vmatpush1.bf16.xpose.msra.mxu0 0
    %3896 = vmatprep.subr.bf16.mxu0 0
    %3897 = vmatpush1.bf16.xpose.msra.mxu0 0
    %3898 = vmatprep.subr.bf16.mxu0 0
    %3899 = vmatpush1.bf16.xpose.msra.mxu0 0
    %3900 = vmatprep.subr.bf16.mxu0 0
    %3901 = vmatpush1.bf16.xpose.msra.mxu0 0
    %3902 = vmatprep.subr.bf16.mxu0 0
    %3903 = vmatpush1.bf16.xpose.msra.mxu0 0
    %3904 = vmatprep.subr.bf16.mxu0 0
    %3905 = vmatpush1.bf16.xpose.msra.mxu0 0
    %3906 = vmatprep.subr.bf16.mxu0 0
    %3907 = vmatpush1.bf16.xpose.msra.mxu0 0
    %3908 = vmatprep.subr.bf16.mxu0 0
    %3909 = vmatpush1.bf16.xpose.msra.mxu0 0
    %3910 = vmatprep.subr.bf16.mxu0 0
    %3911 = vmatpush1.bf16.xpose.msra.mxu0 0
    %3912 = vmatprep.subr.bf16.mxu0 0
    %3913 = vmatpush1.bf16.xpose.msra.mxu0 0
    %3914 = vmatprep.subr.bf16.mxu0 0
    %3915 = vmatpush1.bf16.xpose.msra.mxu0 0
    %3916 = vmatprep.subr.bf16.mxu0 0
    %3917 = vmatpush1.bf16.xpose.msra.mxu0 0
    %3918 = vmatprep.subr.bf16.mxu0 0
    %3919 = vmatpush1.bf16.xpose.msra.mxu0 0
    %3920 = vmatprep.mubr.bf16.mxu0 %v1527
    %3921 = vmatmul.mubr.bf16.gmra.mrb[0].mxu0 %v1526
    %v3922 = vpop.f32.mrb[0].mxu0
    %v3923 = vadd.f32 %v3882, %v3922
    %v3924 = vpop.f32.mrb[0].mxu0
    %v3925 = vpop.f32.mrb[0].mxu0
    %v3926 = vadd.f32 %v3885, %v3925
    %v3927 = vpop.f32.mrb[0].mxu0
    %3928 = vdwg.mxu0
    %3929 = vmatprep.subr.bf16.mxu0 %v889
    %3930 = vmatpush1.bf16.xpose.msra.mxu0 %v888
    %3931 = vmatprep.subr.bf16.mxu0 0
    %3932 = vmatpush1.bf16.xpose.msra.mxu0 0
    %3933 = vmatprep.subr.bf16.mxu0 0
    %3934 = vmatpush1.bf16.xpose.msra.mxu0 0
    %3935 = vmatprep.subr.bf16.mxu0 0
    %3936 = vmatpush1.bf16.xpose.msra.mxu0 0
    %3937 = vmatprep.subr.bf16.mxu0 0
    %3938 = vmatpush1.bf16.xpose.msra.mxu0 0
    %3939 = vmatprep.subr.bf16.mxu0 0
    %3940 = vmatpush1.bf16.xpose.msra.mxu0 0
    %3941 = vmatprep.subr.bf16.mxu0 0
    %3942 = vmatpush1.bf16.xpose.msra.mxu0 0
    %3943 = vmatprep.subr.bf16.mxu0 0
    %3944 = vmatpush1.bf16.xpose.msra.mxu0 0
    %3945 = vmatprep.subr.bf16.mxu0 0
    %3946 = vmatpush1.bf16.xpose.msra.mxu0 0
    %3947 = vmatprep.subr.bf16.mxu0 0
    %3948 = vmatpush1.bf16.xpose.msra.mxu0 0
    %3949 = vmatprep.subr.bf16.mxu0 0
    %3950 = vmatpush1.bf16.xpose.msra.mxu0 0
    %3951 = vmatprep.subr.bf16.mxu0 0
    %3952 = vmatpush1.bf16.xpose.msra.mxu0 0
    %3953 = vmatprep.subr.bf16.mxu0 0
    %3954 = vmatpush1.bf16.xpose.msra.mxu0 0
    %3955 = vmatprep.subr.bf16.mxu0 0
    %3956 = vmatpush1.bf16.xpose.msra.mxu0 0
    %3957 = vmatprep.subr.bf16.mxu0 0
    %3958 = vmatpush1.bf16.xpose.msra.mxu0 0
    %3959 = vmatprep.subr.bf16.mxu0 0
    %3960 = vmatpush1.bf16.xpose.msra.mxu0 0
    %3961 = vmatprep.mubr.bf16.mxu0 %v1529
    %3962 = vmatmul.mubr.bf16.gmra.mrb[0].mxu0 %v1528
    %v3963 = vpop.f32.mrb[0].mxu0
    %v3964 = vadd.f32 %v3923, %v3963
    %v3965 = vpop.f32.mrb[0].mxu0
    %v3966 = vpop.f32.mrb[0].mxu0
    %v3967 = vadd.f32 %v3926, %v3966
    %v3968 = vpop.f32.mrb[0].mxu0
    %3969 = vdwg.mxu0
    %3970 = vmatprep.subr.bf16.mxu0 %v891
    %3971 = vmatpush1.bf16.xpose.msra.mxu0 %v890
    %3972 = vmatprep.subr.bf16.mxu0 0
    %3973 = vmatpush1.bf16.xpose.msra.mxu0 0
    %3974 = vmatprep.subr.bf16.mxu0 0
    %3975 = vmatpush1.bf16.xpose.msra.mxu0 0
    %3976 = vmatprep.subr.bf16.mxu0 0
    %3977 = vmatpush1.bf16.xpose.msra.mxu0 0
    %3978 = vmatprep.subr.bf16.mxu0 0
    %3979 = vmatpush1.bf16.xpose.msra.mxu0 0
    %3980 = vmatprep.subr.bf16.mxu0 0
    %3981 = vmatpush1.bf16.xpose.msra.mxu0 0
    %3982 = vmatprep.subr.bf16.mxu0 0
    %3983 = vmatpush1.bf16.xpose.msra.mxu0 0
    %3984 = vmatprep.subr.bf16.mxu0 0
    %3985 = vmatpush1.bf16.xpose.msra.mxu0 0
    %3986 = vmatprep.subr.bf16.mxu0 0
    %3987 = vmatpush1.bf16.xpose.msra.mxu0 0
    %3988 = vmatprep.subr.bf16.mxu0 0
    %3989 = vmatpush1.bf16.xpose.msra.mxu0 0
    %3990 = vmatprep.subr.bf16.mxu0 0
    %3991 = vmatpush1.bf16.xpose.msra.mxu0 0
    %3992 = vmatprep.subr.bf16.mxu0 0
    %3993 = vmatpush1.bf16.xpose.msra.mxu0 0
    %3994 = vmatprep.subr.bf16.mxu0 0
    %3995 = vmatpush1.bf16.xpose.msra.mxu0 0
    %3996 = vmatprep.subr.bf16.mxu0 0
    %3997 = vmatpush1.bf16.xpose.msra.mxu0 0
    %3998 = vmatprep.subr.bf16.mxu0 0
    %3999 = vmatpush1.bf16.xpose.msra.mxu0 0
    %4000 = vmatprep.subr.bf16.mxu0 0
    %4001 = vmatpush1.bf16.xpose.msra.mxu0 0
    %4002 = vmatprep.mubr.bf16.mxu0 %v1531
    %4003 = vmatmul.mubr.bf16.gmra.mrb[0].mxu0 %v1530
    %v4004 = vpop.f32.mrb[0].mxu0
    %v4005 = vadd.f32 %v3964, %v4004
    %v4006 = vpop.f32.mrb[0].mxu0
    %v4007 = vpop.f32.mrb[0].mxu0
    %v4008 = vadd.f32 %v3967, %v4007
    %v4009 = vpop.f32.mrb[0].mxu0
    %4010 = vdwg.mxu0
    %4011 = vmatprep.subr.bf16.mxu0 %v893
    %4012 = vmatpush1.bf16.xpose.msra.mxu0 %v892
    %4013 = vmatprep.subr.bf16.mxu0 0
    %4014 = vmatpush1.bf16.xpose.msra.mxu0 0
    %4015 = vmatprep.subr.bf16.mxu0 0
    %4016 = vmatpush1.bf16.xpose.msra.mxu0 0
    %4017 = vmatprep.subr.bf16.mxu0 0
    %4018 = vmatpush1.bf16.xpose.msra.mxu0 0
    %4019 = vmatprep.subr.bf16.mxu0 0
    %4020 = vmatpush1.bf16.xpose.msra.mxu0 0
    %4021 = vmatprep.subr.bf16.mxu0 0
    %4022 = vmatpush1.bf16.xpose.msra.mxu0 0
    %4023 = vmatprep.subr.bf16.mxu0 0
    %4024 = vmatpush1.bf16.xpose.msra.mxu0 0
    %4025 = vmatprep.subr.bf16.mxu0 0
    %4026 = vmatpush1.bf16.xpose.msra.mxu0 0
    %4027 = vmatprep.subr.bf16.mxu0 0
    %4028 = vmatpush1.bf16.xpose.msra.mxu0 0
    %4029 = vmatprep.subr.bf16.mxu0 0
    %4030 = vmatpush1.bf16.xpose.msra.mxu0 0
    %4031 = vmatprep.subr.bf16.mxu0 0
    %4032 = vmatpush1.bf16.xpose.msra.mxu0 0
    %4033 = vmatprep.subr.bf16.mxu0 0
    %4034 = vmatpush1.bf16.xpose.msra.mxu0 0
    %4035 = vmatprep.subr.bf16.mxu0 0
    %4036 = vmatpush1.bf16.xpose.msra.mxu0 0
    %4037 = vmatprep.subr.bf16.mxu0 0
    %4038 = vmatpush1.bf16.xpose.msra.mxu0 0
    %4039 = vmatprep.subr.bf16.mxu0 0
    %4040 = vmatpush1.bf16.xpose.msra.mxu0 0
    %4041 = vmatprep.subr.bf16.mxu0 0
    %4042 = vmatpush1.bf16.xpose.msra.mxu0 0
    %4043 = vmatprep.mubr.bf16.mxu0 %v1533
    %4044 = vmatmul.mubr.bf16.gmra.mrb[0].mxu0 %v1532
    %v4045 = vpop.f32.mrb[0].mxu0
    %v4046 = vadd.f32 %v4005, %v4045
    %v4047 = vpop.f32.mrb[0].mxu0
    %v4048 = vpop.f32.mrb[0].mxu0
    %v4049 = vadd.f32 %v4008, %v4048
    %v4050 = vpop.f32.mrb[0].mxu0
    %4051 = vdwg.mxu0
    %4052 = vmatprep.subr.bf16.mxu0 %v895
    %4053 = vmatpush1.bf16.xpose.msra.mxu0 %v894
    %4054 = vmatprep.subr.bf16.mxu0 0
    %4055 = vmatpush1.bf16.xpose.msra.mxu0 0
    %4056 = vmatprep.subr.bf16.mxu0 0
    %4057 = vmatpush1.bf16.xpose.msra.mxu0 0
    %4058 = vmatprep.subr.bf16.mxu0 0
    %4059 = vmatpush1.bf16.xpose.msra.mxu0 0
    %4060 = vmatprep.subr.bf16.mxu0 0
    %4061 = vmatpush1.bf16.xpose.msra.mxu0 0
    %4062 = vmatprep.subr.bf16.mxu0 0
    %4063 = vmatpush1.bf16.xpose.msra.mxu0 0
    %4064 = vmatprep.subr.bf16.mxu0 0
    %4065 = vmatpush1.bf16.xpose.msra.mxu0 0
    %4066 = vmatprep.subr.bf16.mxu0 0
    %4067 = vmatpush1.bf16.xpose.msra.mxu0 0
    %4068 = vmatprep.subr.bf16.mxu0 0
    %4069 = vmatpush1.bf16.xpose.msra.mxu0 0
    %4070 = vmatprep.subr.bf16.mxu0 0
    %4071 = vmatpush1.bf16.xpose.msra.mxu0 0
    %4072 = vmatprep.subr.bf16.mxu0 0
    %4073 = vmatpush1.bf16.xpose.msra.mxu0 0
    %4074 = vmatprep.subr.bf16.mxu0 0
    %4075 = vmatpush1.bf16.xpose.msra.mxu0 0
    %4076 = vmatprep.subr.bf16.mxu0 0
    %4077 = vmatpush1.bf16.xpose.msra.mxu0 0
    %4078 = vmatprep.subr.bf16.mxu0 0
    %4079 = vmatpush1.bf16.xpose.msra.mxu0 0
    %4080 = vmatprep.subr.bf16.mxu0 0
    %4081 = vmatpush1.bf16.xpose.msra.mxu0 0
    %4082 = vmatprep.subr.bf16.mxu0 0
    %4083 = vmatpush1.bf16.xpose.msra.mxu0 0
    %4084 = vmatprep.mubr.bf16.mxu0 %v1535
    %4085 = vmatmul.mubr.bf16.gmra.mrb[0].mxu0 %v1534
    %v4086 = vpop.f32.mrb[0].mxu0
    %v4087 = vadd.f32 %v4046, %v4086
    %v4088 = vpop.f32.mrb[0].mxu0
    %v4089 = vpop.f32.mrb[0].mxu0
    %v4090 = vadd.f32 %v4049, %v4089
    %v4091 = vpop.f32.mrb[0].mxu0
    %4092 = vdwg.mxu0
    %4093 = vmatprep.subr.bf16.mxu0 %v897
    %4094 = vmatpush1.bf16.xpose.msra.mxu0 %v896
    %4095 = vmatprep.subr.bf16.mxu0 0
    %4096 = vmatpush1.bf16.xpose.msra.mxu0 0
    %4097 = vmatprep.subr.bf16.mxu0 0
    %4098 = vmatpush1.bf16.xpose.msra.mxu0 0
    %4099 = vmatprep.subr.bf16.mxu0 0
    %4100 = vmatpush1.bf16.xpose.msra.mxu0 0
    %4101 = vmatprep.subr.bf16.mxu0 0
    %4102 = vmatpush1.bf16.xpose.msra.mxu0 0
    %4103 = vmatprep.subr.bf16.mxu0 0
    %4104 = vmatpush1.bf16.xpose.msra.mxu0 0
    %4105 = vmatprep.subr.bf16.mxu0 0
    %4106 = vmatpush1.bf16.xpose.msra.mxu0 0
    %4107 = vmatprep.subr.bf16.mxu0 0
    %4108 = vmatpush1.bf16.xpose.msra.mxu0 0
    %4109 = vmatprep.subr.bf16.mxu0 0
    %4110 = vmatpush1.bf16.xpose.msra.mxu0 0
    %4111 = vmatprep.subr.bf16.mxu0 0
    %4112 = vmatpush1.bf16.xpose.msra.mxu0 0
    %4113 = vmatprep.subr.bf16.mxu0 0
    %4114 = vmatpush1.bf16.xpose.msra.mxu0 0
    %4115 = vmatprep.subr.bf16.mxu0 0
    %4116 = vmatpush1.bf16.xpose.msra.mxu0 0
    %4117 = vmatprep.subr.bf16.mxu0 0
    %4118 = vmatpush1.bf16.xpose.msra.mxu0 0
    %4119 = vmatprep.subr.bf16.mxu0 0
    %4120 = vmatpush1.bf16.xpose.msra.mxu0 0
    %4121 = vmatprep.subr.bf16.mxu0 0
    %4122 = vmatpush1.bf16.xpose.msra.mxu0 0
    %4123 = vmatprep.subr.bf16.mxu0 0
    %4124 = vmatpush1.bf16.xpose.msra.mxu0 0
    %4125 = vmatprep.mubr.bf16.mxu0 %v1537
    %4126 = vmatmul.mubr.bf16.gmra.mrb[0].mxu0 %v1536
    %v4127 = vpop.f32.mrb[0].mxu0
    %v4128 = vadd.f32 %v4087, %v4127
    %v4129 = vpop.f32.mrb[0].mxu0
    %v4130 = vpop.f32.mrb[0].mxu0
    %v4131 = vadd.f32 %v4090, %v4130
    %v4132 = vpop.f32.mrb[0].mxu0
    %4133 = vdwg.mxu0
    %4134 = vmatprep.subr.bf16.mxu0 %v899
    %4135 = vmatpush1.bf16.xpose.msra.mxu0 %v898
    %4136 = vmatprep.subr.bf16.mxu0 0
    %4137 = vmatpush1.bf16.xpose.msra.mxu0 0
    %4138 = vmatprep.subr.bf16.mxu0 0
    %4139 = vmatpush1.bf16.xpose.msra.mxu0 0
    %4140 = vmatprep.subr.bf16.mxu0 0
    %4141 = vmatpush1.bf16.xpose.msra.mxu0 0
    %4142 = vmatprep.subr.bf16.mxu0 0
    %4143 = vmatpush1.bf16.xpose.msra.mxu0 0
    %4144 = vmatprep.subr.bf16.mxu0 0
    %4145 = vmatpush1.bf16.xpose.msra.mxu0 0
    %4146 = vmatprep.subr.bf16.mxu0 0
    %4147 = vmatpush1.bf16.xpose.msra.mxu0 0
    %4148 = vmatprep.subr.bf16.mxu0 0
    %4149 = vmatpush1.bf16.xpose.msra.mxu0 0
    %4150 = vmatprep.subr.bf16.mxu0 0
    %4151 = vmatpush1.bf16.xpose.msra.mxu0 0
    %4152 = vmatprep.subr.bf16.mxu0 0
    %4153 = vmatpush1.bf16.xpose.msra.mxu0 0
    %4154 = vmatprep.subr.bf16.mxu0 0
    %4155 = vmatpush1.bf16.xpose.msra.mxu0 0
    %4156 = vmatprep.subr.bf16.mxu0 0
    %4157 = vmatpush1.bf16.xpose.msra.mxu0 0
    %4158 = vmatprep.subr.bf16.mxu0 0
    %4159 = vmatpush1.bf16.xpose.msra.mxu0 0
    %4160 = vmatprep.subr.bf16.mxu0 0
    %4161 = vmatpush1.bf16.xpose.msra.mxu0 0
    %4162 = vmatprep.subr.bf16.mxu0 0
    %4163 = vmatpush1.bf16.xpose.msra.mxu0 0
    %4164 = vmatprep.subr.bf16.mxu0 0
    %4165 = vmatpush1.bf16.xpose.msra.mxu0 0
    %4166 = vmatprep.mubr.bf16.mxu0 %v1539
    %4167 = vmatmul.mubr.bf16.gmra.mrb[0].mxu0 %v1538
    %v4168 = vpop.f32.mrb[0].mxu0
    %v4169 = vadd.f32 %v4128, %v4168
    %v4170 = vpop.f32.mrb[0].mxu0
    %v4171 = vpop.f32.mrb[0].mxu0
    %v4172 = vadd.f32 %v4131, %v4171
    %v4173 = vpop.f32.mrb[0].mxu0
    %4174 = vdwg.mxu0
    %4175 = vmatprep.subr.bf16.mxu0 %v901
    %4176 = vmatpush1.bf16.xpose.msra.mxu0 %v900
    %4177 = vmatprep.subr.bf16.mxu0 0
    %4178 = vmatpush1.bf16.xpose.msra.mxu0 0
    %4179 = vmatprep.subr.bf16.mxu0 0
    %4180 = vmatpush1.bf16.xpose.msra.mxu0 0
    %4181 = vmatprep.subr.bf16.mxu0 0
    %4182 = vmatpush1.bf16.xpose.msra.mxu0 0
    %4183 = vmatprep.subr.bf16.mxu0 0
    %4184 = vmatpush1.bf16.xpose.msra.mxu0 0
    %4185 = vmatprep.subr.bf16.mxu0 0
    %4186 = vmatpush1.bf16.xpose.msra.mxu0 0
    %4187 = vmatprep.subr.bf16.mxu0 0
    %4188 = vmatpush1.bf16.xpose.msra.mxu0 0
    %4189 = vmatprep.subr.bf16.mxu0 0
    %4190 = vmatpush1.bf16.xpose.msra.mxu0 0
    %4191 = vmatprep.subr.bf16.mxu0 0
    %4192 = vmatpush1.bf16.xpose.msra.mxu0 0
    %4193 = vmatprep.subr.bf16.mxu0 0
    %4194 = vmatpush1.bf16.xpose.msra.mxu0 0
    %4195 = vmatprep.subr.bf16.mxu0 0
    %4196 = vmatpush1.bf16.xpose.msra.mxu0 0
    %4197 = vmatprep.subr.bf16.mxu0 0
    %4198 = vmatpush1.bf16.xpose.msra.mxu0 0
    %4199 = vmatprep.subr.bf16.mxu0 0
    %4200 = vmatpush1.bf16.xpose.msra.mxu0 0
    %4201 = vmatprep.subr.bf16.mxu0 0
    %4202 = vmatpush1.bf16.xpose.msra.mxu0 0
    %4203 = vmatprep.subr.bf16.mxu0 0
    %4204 = vmatpush1.bf16.xpose.msra.mxu0 0
    %4205 = vmatprep.subr.bf16.mxu0 0
    %4206 = vmatpush1.bf16.xpose.msra.mxu0 0
    %4207 = vmatprep.mubr.bf16.mxu0 %v1541
    %4208 = vmatmul.mubr.bf16.gmra.mrb[0].mxu0 %v1540
    %v4209 = vpop.f32.mrb[0].mxu0
    %v4210 = vadd.f32 %v4169, %v4209
    %v4211 = vpop.f32.mrb[0].mxu0
    %v4212 = vpop.f32.mrb[0].mxu0
    %v4213 = vadd.f32 %v4172, %v4212
    %v4214 = vpop.f32.mrb[0].mxu0
    %4215 = vdwg.mxu0
    %4216 = vmatprep.subr.bf16.mxu0 %v903
    %4217 = vmatpush1.bf16.xpose.msra.mxu0 %v902
    %4218 = vmatprep.subr.bf16.mxu0 0
    %4219 = vmatpush1.bf16.xpose.msra.mxu0 0
    %4220 = vmatprep.subr.bf16.mxu0 0
    %4221 = vmatpush1.bf16.xpose.msra.mxu0 0
    %4222 = vmatprep.subr.bf16.mxu0 0
    %4223 = vmatpush1.bf16.xpose.msra.mxu0 0
    %4224 = vmatprep.subr.bf16.mxu0 0
    %4225 = vmatpush1.bf16.xpose.msra.mxu0 0
    %4226 = vmatprep.subr.bf16.mxu0 0
    %4227 = vmatpush1.bf16.xpose.msra.mxu0 0
    %4228 = vmatprep.subr.bf16.mxu0 0
    %4229 = vmatpush1.bf16.xpose.msra.mxu0 0
    %4230 = vmatprep.subr.bf16.mxu0 0
    %4231 = vmatpush1.bf16.xpose.msra.mxu0 0
    %4232 = vmatprep.subr.bf16.mxu0 0
    %4233 = vmatpush1.bf16.xpose.msra.mxu0 0
    %4234 = vmatprep.subr.bf16.mxu0 0
    %4235 = vmatpush1.bf16.xpose.msra.mxu0 0
    %4236 = vmatprep.subr.bf16.mxu0 0
    %4237 = vmatpush1.bf16.xpose.msra.mxu0 0
    %4238 = vmatprep.subr.bf16.mxu0 0
    %4239 = vmatpush1.bf16.xpose.msra.mxu0 0
    %4240 = vmatprep.subr.bf16.mxu0 0
    %4241 = vmatpush1.bf16.xpose.msra.mxu0 0
    %4242 = vmatprep.subr.bf16.mxu0 0
    %4243 = vmatpush1.bf16.xpose.msra.mxu0 0
    %4244 = vmatprep.subr.bf16.mxu0 0
    %4245 = vmatpush1.bf16.xpose.msra.mxu0 0
    %4246 = vmatprep.subr.bf16.mxu0 0
    %4247 = vmatpush1.bf16.xpose.msra.mxu0 0
    %4248 = vmatprep.mubr.bf16.mxu0 %v1543
    %4249 = vmatmul.mubr.bf16.gmra.mrb[0].mxu0 %v1542
    %v4250 = vpop.f32.mrb[0].mxu0
    %v4251 = vadd.f32 %v4210, %v4250
    %v4252 = vpop.f32.mrb[0].mxu0
    %v4253 = vpop.f32.mrb[0].mxu0
    %v4254 = vadd.f32 %v4213, %v4253
    %v4255 = vpop.f32.mrb[0].mxu0
    %4256 = vdwg.mxu0
    %4257 = vmatprep.subr.bf16.mxu0 %v905
    %4258 = vmatpush1.bf16.xpose.msra.mxu0 %v904
    %4259 = vmatprep.subr.bf16.mxu0 0
    %4260 = vmatpush1.bf16.xpose.msra.mxu0 0
    %4261 = vmatprep.subr.bf16.mxu0 0
    %4262 = vmatpush1.bf16.xpose.msra.mxu0 0
    %4263 = vmatprep.subr.bf16.mxu0 0
    %4264 = vmatpush1.bf16.xpose.msra.mxu0 0
    %4265 = vmatprep.subr.bf16.mxu0 0
    %4266 = vmatpush1.bf16.xpose.msra.mxu0 0
    %4267 = vmatprep.subr.bf16.mxu0 0
    %4268 = vmatpush1.bf16.xpose.msra.mxu0 0
    %4269 = vmatprep.subr.bf16.mxu0 0
    %4270 = vmatpush1.bf16.xpose.msra.mxu0 0
    %4271 = vmatprep.subr.bf16.mxu0 0
    %4272 = vmatpush1.bf16.xpose.msra.mxu0 0
    %4273 = vmatprep.subr.bf16.mxu0 0
    %4274 = vmatpush1.bf16.xpose.msra.mxu0 0
    %4275 = vmatprep.subr.bf16.mxu0 0
    %4276 = vmatpush1.bf16.xpose.msra.mxu0 0
    %4277 = vmatprep.subr.bf16.mxu0 0
    %4278 = vmatpush1.bf16.xpose.msra.mxu0 0
    %4279 = vmatprep.subr.bf16.mxu0 0
    %4280 = vmatpush1.bf16.xpose.msra.mxu0 0
    %4281 = vmatprep.subr.bf16.mxu0 0
    %4282 = vmatpush1.bf16.xpose.msra.mxu0 0
    %4283 = vmatprep.subr.bf16.mxu0 0
    %4284 = vmatpush1.bf16.xpose.msra.mxu0 0
    %4285 = vmatprep.subr.bf16.mxu0 0
    %4286 = vmatpush1.bf16.xpose.msra.mxu0 0
    %4287 = vmatprep.subr.bf16.mxu0 0
    %4288 = vmatpush1.bf16.xpose.msra.mxu0 0
    %4289 = vmatprep.mubr.bf16.mxu0 %v1545
    %4290 = vmatmul.mubr.bf16.gmra.mrb[0].mxu0 %v1544
    %v4291 = vpop.f32.mrb[0].mxu0
    %v4292 = vadd.f32 %v4251, %v4291
    %v4293 = vpop.f32.mrb[0].mxu0
    %v4294 = vpop.f32.mrb[0].mxu0
    %v4295 = vadd.f32 %v4254, %v4294
    %v4296 = vpop.f32.mrb[0].mxu0
    %4297 = vdwg.mxu0
    %4298 = vxpose.xlu0.b32.start [1/16] %v4292, 128
    %4299 = vxpose.xlu0.b32.cont [2/16] %v4295, 128
    %4300 = vxpose.xlu0.b32.cont [3/16] 0.0, 128
    %4301 = vxpose.xlu0.b32.cont [4/16] 0.0, 128
    %4302 = vxpose.xlu0.b32.cont [5/16] 0.0, 128
    %4303 = vxpose.xlu0.b32.cont [6/16] 0.0, 128
    %4304 = vxpose.xlu0.b32.cont [7/16] 0.0, 128
    %4305 = vxpose.xlu0.b32.cont [8/16] 0.0, 128
    %4306 = vxpose.xlu0.b32.cont [9/16] 0.0, 128
    %4307 = vxpose.xlu0.b32.cont [10/16] 0.0, 128
    %4308 = vxpose.xlu0.b32.cont [11/16] 0.0, 128
    %4309 = vxpose.xlu0.b32.cont [12/16] 0.0, 128
    %4310 = vxpose.xlu0.b32.cont [13/16] 0.0, 128
    %4311 = vxpose.xlu0.b32.cont [14/16] 0.0, 128
    %4312 = vxpose.xlu0.b32.cont [15/16] 0.0, 128
    %4313 = vxpose.xlu0.b32.end [16/16] 0.0, 128
    %v4314 = vpop.trf.xlu0
    %v4315 = vpop.trf.xlu0
    %v4316 = vpop.trf.xlu0
    %v4317 = vpop.trf.xlu0
    %v4318 = vpop.trf.xlu0
    %v4319 = vpop.trf.xlu0
    %v4320 = vpop.trf.xlu0
    %v4321 = vpop.trf.xlu0
    %v4322 = vpop.trf.xlu0
    %v4323 = vpop.trf.xlu0
    %v4324 = vpop.trf.xlu0
    %v4325 = vpop.trf.xlu0
    %v4326 = vpop.trf.xlu0
    %v4327 = vpop.trf.xlu0
    %v4328 = vpop.trf.xlu0
    %v4329 = vpop.trf.xlu0
    %v4330 = vld [vmem:[%s2] sm:$0x1]
    %v4332 = vlaneseq
    %v4333 = vshrl.u32 %v4332, 7
    %v4334 = vsub.s32 0, %v4333
    %v4335 = vrot.slane %v4330, %v4334
    %v4337 = vadd.f32 %v4314, %v4335
    %v4338 = vxor.u32 %v4337, 2147483648
    %v4339 = vmul.f32 %v4338, 1.442695
    %v4340 = vpow.pop %v4339
    %v4341 = vadd.f32 %v4340, 1.0
    %v4342 = vrcp.pop %v4341
    %v4343 = vmul.f32 1.0, %v4342
    %vm4344 = vcmask 66560
    %4345 = vst.msk [vmem:[#allocation7] sm:$0x3] %vm4344, %v4343
    // Predicated region
    $region22: #{tpu_custom_call.1} parent=1 // pred_check
      _
    $region23: #{tpu_custom_call.1} parent=1 // pred_check_branch
      %4347 = sbr.rel (0) target = $region25
    $region24: #{tpu_custom_call.1} parent=1 // pred_region
      %s4349 = ssub.s32 32, 32
      %4350 = vsyncadd [#allocation4], %s4349
      %s4352 = sshll.u32 [#allocation7], 4
      %s4353 = int_to_ptr.vmem [resolvable:$true] %s4352
      %4355 = dma.vmem_to_hbm [thread:$0]  %s4353, 32, %s3, [#allocation4]
    $region25: #{tpu_custom_call.1} parent=1 // pred_fallthru
      _
    // Predicated region
    $region26: #{tpu_custom_call.1} parent=1 // pred_check
      _
    $region27: #{tpu_custom_call.1} parent=1 // pred_check_branch
      %4357 = sbr.rel (0) target = $region29
    $region28: #{tpu_custom_call.1} parent=1 // pred_region
      %4358 = dma.done [#allocation4], 32
    $region29: #{tpu_custom_call.1} parent=1 // pred_fallthru
      _
    %4359 = vsyncpa [#allocation3], 1
    %4360 = vsyncpa [#allocation6], 1
    %4361 = vsyncpa [#allocation4], 1

</llo_original>
